<compile_context>
chip_gen: v5e
topology: v5e:2x2
jax: 0.10.0
libtpu: 0.0.40
codegen_flags: <defaults>
</compile_context>

<pallas_src>
import jax
import jax.numpy as jnp
import numpy as np
from jax import lax
from jax.experimental import pallas as pl
from jax.experimental.pallas import tpu as pltpu


def _dot_t(a, b):
    """a @ b.T via dot_general contraction over the last dims (MXU, f32 acc)."""
    return lax.dot_general(a, b, (((1,), (1,)), ((), ())),
                           preferred_element_type=jnp.float32)


def _fast_recip(x):
    """EUP approximate reciprocal + one Newton step (keeps ~f32 accuracy)."""
    r = pl.reciprocal(x, approx=True)
    return r * (jnp.float32(2.0) - x * r)


def hier_attn_kernel(
    q_ref, src_bank_ref, sent_bank_ref, word_bank_ref,
    src_len_ref, qa_len_ref, src_pos_ref, word_pos_ref, expand_ref,
    wq_cat_ref, bq_cat_ref,                    # fused query projections (3 banks)
    p_uc_ref, p_v_ref,                         # 'pass'    MLP attention params
    w_uc_ref, w_v_ref,                         # 'qa_word' MLP attention params
    s_uc_ref, s_v_ref,                         # 'qa_sent' MLP attention params
    out_ref,                                   # packed lane-dense output slab
):
    q = q_ref[...]                              # (TB, D)
    TB, D = q.shape
    P = src_bank_ref.shape[1]
    S = sent_bank_ref.shape[1]
    SW = word_bank_ref.shape[1]

    # --- fused query projection: one MXU matmul with N = 3*D -----------------
    wq_all = _dot_t(q, wq_cat_ref[...]) + bq_cat_ref[...]        # (TB, 3D)
    wq_p = wq_all[:, 0 * D:1 * D]
    wq_w = wq_all[:, 1 * D:2 * D]
    wq_s = wq_all[:, 2 * D:3 * D]

    def mlp_scores(bank_ref, wq, uc_w, v_row):
        """Bahdanau scores for one bank, fully vectorized: (TB, L)."""
        L = bank_ref.shape[1]
        # One big MXU matmul over all TB*L rows (reshape is a layout no-op
        # when L % 8 == 0; keep L a multiple of 8 in production or pad).
        h2 = bank_ref[...].reshape(TB * L, D)                    # (TB*L, D)
        uh = _dot_t(h2, uc_w).reshape(TB, L, D)                  # MXU, M = TB*L
        su = jnp.tanh(uh + wq[:, None, :])                       # (TB, L, D)  EUP
        # score_j = sum_d v[d] * su[j, d]  -> lane reduce (XLU slot, no MXU M=1)
        return jnp.sum(su * v_row[:, None, :], axis=-1)          # (TB, L)

    src_score = mlp_scores(src_bank_ref, wq_p, p_uc_ref[...], p_v_ref[...])    # (TB, P)
    word_score = mlp_scores(word_bank_ref, wq_w, w_uc_ref[...], w_v_ref[...])  # (TB, SW)
    sent_score = mlp_scores(sent_bank_ref, wq_s, s_uc_ref[...], s_v_ref[...])  # (TB, S)

    # Hierarchical score: word_score[b, s*W + w] * sent_score[b, s].
    # Sentence scores expanded to word granularity via a tiny constant 0/1
    # matmul (appropriate for the unaligned toy W).
    # TODO(synk): for production W % 128 == 0 replace with a pure VPU broadcast
    # reshape and drop the expand input.
    sent_expand = jnp.dot(sent_score, expand_ref[...],
                          preferred_element_type=jnp.float32)                  # (TB, SW)
    hier_score = word_score * sent_expand

    # Masks built in-kernel from int32 lengths + constant position rows.
    # TODO(synk): guard fully-masked rows (length 0) against -inf -> NaN if that
    # can happen in production; the reference path guarantees lengths >= 1.
    neg_inf = jnp.float32(-jnp.inf)
    src_valid = src_pos_ref[...] < src_len_ref[...]              # (TB, P)
    qa_valid = word_pos_ref[...] < qa_len_ref[...]               # (TB, SW)
    src_masked = jnp.where(src_valid, src_score, neg_inf)
    hier_masked = jnp.where(qa_valid, hier_score, neg_inf)

    # Group softmaxes + exact joint softmax via online (shared-denominator)
    # combination — no concatenation of the masked score vectors.
    m_src = jnp.max(src_masked, axis=-1, keepdims=True)          # (TB, 1)
    m_hier = jnp.max(hier_masked, axis=-1, keepdims=True)
    e_src = jnp.exp(src_masked - m_src)
    e_hier = jnp.exp(hier_masked - m_hier)
    s_src = jnp.sum(e_src, axis=-1, keepdims=True)
    s_hier = jnp.sum(e_hier, axis=-1, keepdims=True)

    src_vec = e_src * _fast_recip(s_src)                         # (TB, P)
    hier_vec = e_hier * _fast_recip(s_hier)                      # (TB, SW)

    m_joint = jnp.maximum(m_src, m_hier)
    a_src = jnp.exp(m_src - m_joint)
    a_hier = jnp.exp(m_hier - m_joint)
    inv_joint = _fast_recip(a_src * s_src + a_hier * s_hier)
    align_p = e_src * (a_src * inv_joint)                        # (TB, P)
    align_w = e_hier * (a_hier * inv_joint)                      # (TB, SW)

    # Context: c[b] = align_p[b] @ src_H[b] + align_w[b] @ word_H[b]
    # Batched VPU multiply + sublane reduce (no per-batch M=1 MXU matmuls,
    # no concatenated (P+S*W, D) memory buffer).
    c = (jnp.sum(align_p[:, :, None] * src_bank_ref[...], axis=1)
         + jnp.sum(align_w[:, :, None] * word_bank_ref[...], axis=1))  # (TB, D)

    # Single lane-dense packed store (last dim padded to a multiple of 128).
    pad = out_ref.shape[1] - (D + 2 * (P + SW))
    pieces = [c, align_p, align_w, src_vec, hier_vec]
    if pad:
        pieces.append(jnp.zeros((TB, pad), jnp.float32))
    out_ref[...] = jnp.concatenate(pieces, axis=-1)


def hierarchical_attention(source, src_bank, src_lengths, qa_sent_bank,
                           qa_sent_lengths, qa_word_bank, qa_word_lengths,
                           params):
    """source: [B, D] (one_step path). qa_sent_lengths is unused (as in reference)."""
    del qa_sent_lengths
    W, B, S, D = qa_word_bank.shape
    P = src_bank.shape[0]
    SW = S * W
    L = P + SW
    assert qa_sent_bank.shape == (S, B, D)
    assert source.shape == (B, D)

    OUT_W = D + 2 * L                              # c | align(P+SW) | src_vec(P) | hier_vec(SW)
    OUT_PAD = ((OUT_W + 127) // 128) * 128         # lane-dense packed output width

    # --- batch tile selection against a conservative VMEM budget -------------
    # Keep the grid >= 2 steps when possible so both v7x TensorCores get work
    # (the extra ~0.35 us/step on single-TC v5e/v6e is negligible here), and
    # pick the largest sublane-aligned tile whose double-buffered banks fit.
    bank_row_bytes = (P + S + SW) * D * 4
    if B % 8 == 0 and B >= 16:
        budget = 40 << 20                          # headroom for v7x's 64 MiB VMEM
        cands = [t for t in range(8, B // 2 + 1, 8) if B % t == 0]
        fitting = [t for t in cands if 2 * t * bank_row_bytes <= budget]
        TB = (fitting or cands[:1])[-1]
    else:
        TB = B
    grid = (B // TB,)

    # Glue: match the PyTorch transposes / flattening (seq-major -> batch-major).
    # TODO(synk): at production sizes keep the banks seq-major and index them
    # directly in the BlockSpecs to avoid this extra HBM round trip.
    src_b = jnp.transpose(src_bank, (1, 0, 2))                          # (B, P, D)
    sent_b = jnp.transpose(qa_sent_bank, (1, 0, 2))                     # (B, S, D)
    word_b = jnp.transpose(qa_word_bank, (1, 2, 0, 3)).reshape(B, SW, D)

    # Lengths / constant position rows / sentence->word expand matrix.
    src_len2 = src_lengths.astype(jnp.int32).reshape(B, 1)              # (B, 1)
    qa_len_exp = jnp.repeat(qa_word_lengths.astype(jnp.int32), W, axis=1)  # (B, SW)
    src_pos = jnp.arange(P, dtype=jnp.int32).reshape(1, P)              # (1, P)
    word_pos = jnp.tile(jnp.arange(W, dtype=jnp.int32), S).reshape(1, SW)
    expand = (jnp.arange(SW)[None, :] // W
              == jnp.arange(S)[:, None]).astype(jnp.float32)            # (S, SW)

    # Fused query-projection weights: one MXU matmul with N = 3D in the kernel.
    wq_cat = jnp.concatenate([params["pass_Wq"], params["word_Wq"],
                              params["sent_Wq"]], axis=0)               # (3D, D)
    bq_cat = jnp.concatenate([params["pass_bq"], params["word_bq"],
                              params["sent_bq"]], axis=1)               # (1, 3D)

    weights = [
        wq_cat, bq_cat,
        params["pass_Uc"], params["pass_v"],
        params["word_Uc"], params["word_v"],
        params["sent_Uc"], params["sent_v"],
    ]

    def const2d(shape):
        # Constant block (index does not change across the grid -> fetched once).
        # TODO(synk): production — pipeline_mode=pl.Buffered(1) + bf16 to halve
        # the constant VMEM footprint on v7x.
        return pl.BlockSpec(shape, lambda b: (0, 0))

    in_specs = [
        pl.BlockSpec((TB, D), lambda b: (b, 0)),              # source
        pl.BlockSpec((TB, P, D), lambda b: (b, 0, 0)),        # src_bank
        pl.BlockSpec((TB, S, D), lambda b: (b, 0, 0)),        # qa_sent_bank
        pl.BlockSpec((TB, SW, D), lambda b: (b, 0, 0)),       # qa_word_bank (flat)
        pl.BlockSpec((TB, 1), lambda b: (b, 0)),              # src_lengths
        pl.BlockSpec((TB, SW), lambda b: (b, 0)),             # qa word lengths (expanded)
        const2d((1, P)),                                      # src positions
        const2d((1, SW)),                                     # word positions
        const2d((S, SW)),                                     # sent->word expand
    ] + [const2d(w.shape) for w in weights]

    out_shape = jax.ShapeDtypeStruct((B, OUT_PAD), jnp.float32)
    out_spec = pl.BlockSpec((TB, OUT_PAD), lambda b: (b, 0))

    # VMEM limit derived from actual usage (double-buffered), with headroom;
    # capped at 64 MiB so the same number is valid on v7x as well.
    const_bytes = sum(int(np.prod(w.shape)) for w in weights) * 4 \
        + (S * SW + P + SW) * 4
    step_bytes = TB * (bank_row_bytes + D * 4 + (SW + 2) * 4 + OUT_PAD * 4)
    vmem_limit = int(min(max(4 * (2 * step_bytes + 2 * const_bytes), 32 << 20),
                         64 << 20))

    slab = pl.pallas_call(
        hier_attn_kernel,
        out_shape=out_shape,
        grid_spec=pltpu.PrefetchScalarGridSpec(
            num_scalar_prefetch=0,
            grid=grid,
            in_specs=in_specs,
            out_specs=out_spec,
        ),
        compiler_params=pltpu.CompilerParams(
            dimension_semantics=("parallel",),
            vmem_limit_bytes=vmem_limit,
        ),
    )(source, src_b, sent_b, word_b, src_len2, qa_len_exp,
      src_pos, word_pos, expand, *weights)

    # Unpack the lane-dense slab.
    c = slab[:, :D]
    align_vec = slab[:, D:D + L]
    src_vec = slab[:, D + L:D + L + P]
    hier_vec = slab[:, D + L + P:D + L + P + SW]
    passage_align = align_vec[:, :P]
    qa_align = align_vec[:, P:]
    return c, align_vec, src_vec, hier_vec, passage_align, qa_align


def init_params(key, D):
    """Deterministic init matching nn.Linear shapes (weight [out, in], bias [out])."""
    keys = jax.random.split(key, 12)
    bound = 1.0 / float(D) ** 0.5
    u = lambda kk, shape: jax.random.uniform(kk, shape, jnp.float32, -bound, bound)
    params = {}
    i = 0
    for n in ("pass", "word", "sent"):
        params[f"{n}_Wq"] = u(keys[i], (D, D)); i += 1   # *_linear_query.weight
        params[f"{n}_bq"] = u(keys[i], (1, D)); i += 1   # *_linear_query.bias
        params[f"{n}_Uc"] = u(keys[i], (D, D)); i += 1   # *_linear_context.weight
        params[f"{n}_v"]  = u(keys[i], (1, D)); i += 1   # *_v.weight
    return params


def ref_forward(source, src_bank, src_lengths, qa_sent_bank, qa_word_bank,
                qa_word_lengths, params):
    """Pure-JAX reference mirroring the PyTorch forward (one_step, no coverage)."""
    W, B, S, D = qa_word_bank.shape
    P = src_bank.shape[0]
    src_b = jnp.transpose(src_bank, (1, 0, 2))
    sent_b = jnp.transpose(qa_sent_bank, (1, 0, 2))
    word_b = jnp.transpose(qa_word_bank, (1, 2, 0, 3)).reshape(B, S * W, D)
    q = source[:, None, :]                                            # (B, 1, D)

    def score(h_s, Wq, bq, Uc, v):
        wq = jnp.einsum('btd,od->bto', q, Wq) + bq                    # (B,1,D)
        uh = jnp.einsum('bld,od->blo', h_s, Uc)                       # (B,L,D)
        s = jnp.tanh(wq[:, :, None, :] + uh[:, None, :, :])           # (B,1,L,D)
        return jnp.einsum('btld,d->btl', s, v[0])                     # (B,1,L)

    p = params
    src_score = score(src_b, p["pass_Wq"], p["pass_bq"], p["pass_Uc"], p["pass_v"])
    word_score = score(word_b, p["word_Wq"], p["word_bq"], p["word_Uc"], p["word_v"])
    sent_score = score(sent_b, p["sent_Wq"], p["sent_bq"], p["sent_Uc"], p["sent_v"])

    hier = (word_score.reshape(B, 1, S, W) * sent_score[..., None]).reshape(B, 1, S * W)

    src_mask = (jnp.arange(P)[None, :] < src_lengths[:, None])[:, None, :]
    qa_mask = (jnp.arange(W)[None, :] < qa_word_lengths.reshape(B * S, 1)
               ).reshape(B, S * W)[:, None, :]

    neg = -jnp.inf
    src_masked = jnp.where(src_mask, src_score, neg)
    hier_masked = jnp.where(qa_mask, hier, neg)
    align_masked = jnp.concatenate([src_masked, hier_masked], axis=-1)

    src_vec = jax.nn.softmax(src_masked, axis=-1)
    hier_vec = jax.nn.softmax(hier_masked, axis=-1)
    align_vec = jax.nn.softmax(align_masked, axis=-1)

    memory = jnp.concatenate([src_b, word_b], axis=1)
    c = jnp.einsum('btl,bld->btd', align_vec, memory)
    return (c[:, 0], align_vec[:, 0], src_vec[:, 0], hier_vec[:, 0],
            align_vec[:, 0, :P], align_vec[:, 0, P:])


if __name__ == "__main__":
    # batch, dim, src_len, qa_sents, qa_words/sent (multiples of 8 keep all
    # in-kernel reshapes layout no-ops and blocks sublane-aligned).
    B, D, P, S, W = 16, 32, 8, 8, 8
    key = jax.random.PRNGKey(0)
    k = jax.random.split(key, 7)

    source = jax.random.normal(k[0], (B, D), jnp.float32)              # query [B, D]
    src_bank = jax.random.normal(k[1], (P, B, D), jnp.float32)         # [P, B, D]
    qa_sent_bank = jax.random.normal(k[2], (S, B, D), jnp.float32)     # [S, B, D]
    qa_word_bank = jax.random.normal(k[3], (W, B, S, D), jnp.float32)  # [W, B, S, D]
    src_lengths = jax.random.randint(k[4], (B,), 1, P + 1).astype(jnp.int32)
    qa_word_lengths = jax.random.randint(k[5], (B, S), 1, W + 1).astype(jnp.int32)
    qa_sent_lengths = jnp.full((B,), S, jnp.int32)                     # unused (as in ref)

    params = init_params(k[6], D)

    outs = hierarchical_attention(source, src_bank, src_lengths, qa_sent_bank,
                                  qa_sent_lengths, qa_word_bank, qa_word_lengths,
                                  params)
    outs = jax.block_until_ready(outs)

    refs = ref_forward(source, src_bank, src_lengths, qa_sent_bank, qa_word_bank,
                       qa_word_lengths, params)
    for o, r in zip(outs, refs):
        np.testing.assert_allclose(np.asarray(o), np.asarray(r), rtol=1e-5, atol=1e-5)

    print("KERNEL_OK")
</pallas_src>

<mosaic_0001>
module attributes {stable_mosaic.version = 11 : i64} {
  func.func @hier_attn_kernel(%arg0: i32, %arg1: memref<8x32xf32, #tpu.memory_space<vmem>>, %arg2: memref<8x8x32xf32, #tpu.memory_space<vmem>>, %arg3: memref<8x8x32xf32, #tpu.memory_space<vmem>>, %arg4: memref<8x64x32xf32, #tpu.memory_space<vmem>>, %arg5: memref<8x1xi32, #tpu.memory_space<vmem>>, %arg6: memref<8x64xi32, #tpu.memory_space<vmem>>, %arg7: memref<1x8xi32, #tpu.memory_space<vmem>>, %arg8: memref<1x64xi32, #tpu.memory_space<vmem>>, %arg9: memref<8x64xf32, #tpu.memory_space<vmem>>, %arg10: memref<96x32xf32, #tpu.memory_space<vmem>>, %arg11: memref<1x96xf32, #tpu.memory_space<vmem>>, %arg12: memref<32x32xf32, #tpu.memory_space<vmem>>, %arg13: memref<1x32xf32, #tpu.memory_space<vmem>>, %arg14: memref<32x32xf32, #tpu.memory_space<vmem>>, %arg15: memref<1x32xf32, #tpu.memory_space<vmem>>, %arg16: memref<32x32xf32, #tpu.memory_space<vmem>>, %arg17: memref<1x32xf32, #tpu.memory_space<vmem>>, %arg18: memref<8x256xf32, #tpu.memory_space<vmem>>) attributes {dimension_semantics = [#tpu.dimension_semantics<parallel>], iteration_bounds = array<i64: 2>, scalar_prefetch = 0 : i64, scratch_operands = 0 : i64, tpu.core_type = #tpu.core_type<tc>, window_params = [{transform_indices = @transform_0, window_bounds = array<i64: 8, 32>}, {transform_indices = @transform_1, window_bounds = array<i64: 8, 8, 32>}, {transform_indices = @transform_2, window_bounds = array<i64: 8, 8, 32>}, {transform_indices = @transform_3, window_bounds = array<i64: 8, 64, 32>}, {transform_indices = @transform_4, window_bounds = array<i64: 8, 1>}, {transform_indices = @transform_5, window_bounds = array<i64: 8, 64>}, {pipeline_mode = #tpu.pipeline_mode<synchronous>, transform_indices = @transform_6, window_bounds = array<i64: 1, 8>}, {pipeline_mode = #tpu.pipeline_mode<synchronous>, transform_indices = @transform_7, window_bounds = array<i64: 1, 64>}, {pipeline_mode = #tpu.pipeline_mode<synchronous>, transform_indices = @transform_8, window_bounds = array<i64: 8, 64>}, {pipeline_mode = #tpu.pipeline_mode<synchronous>, transform_indices = @transform_9, window_bounds = array<i64: 96, 32>}, {pipeline_mode = #tpu.pipeline_mode<synchronous>, transform_indices = @transform_10, window_bounds = array<i64: 1, 96>}, {pipeline_mode = #tpu.pipeline_mode<synchronous>, transform_indices = @transform_11, window_bounds = array<i64: 32, 32>}, {pipeline_mode = #tpu.pipeline_mode<synchronous>, transform_indices = @transform_12, window_bounds = array<i64: 1, 32>}, {pipeline_mode = #tpu.pipeline_mode<synchronous>, transform_indices = @transform_13, window_bounds = array<i64: 32, 32>}, {pipeline_mode = #tpu.pipeline_mode<synchronous>, transform_indices = @transform_14, window_bounds = array<i64: 1, 32>}, {pipeline_mode = #tpu.pipeline_mode<synchronous>, transform_indices = @transform_15, window_bounds = array<i64: 32, 32>}, {pipeline_mode = #tpu.pipeline_mode<synchronous>, transform_indices = @transform_16, window_bounds = array<i64: 1, 32>}, {transform_indices = @transform_17, window_bounds = array<i64: 8, 256>}]} {
    %c0 = arith.constant 0 : index
    %c0_0 = arith.constant 0 : index
    %0 = vector.load %arg1[%c0, %c0_0] : memref<8x32xf32, #tpu.memory_space<vmem>>, vector<8x32xf32>
    %c0_1 = arith.constant 0 : index
    %c0_2 = arith.constant 0 : index
    %1 = vector.load %arg10[%c0_1, %c0_2] : memref<96x32xf32, #tpu.memory_space<vmem>>, vector<96x32xf32>
    %cst = arith.constant dense<0.000000e+00> : vector<8x96xf32>
    %2 = tpu.matmul %0, %1, %cst {dimension_numbers = #tpu.dot_dimension_numbers<[1], [1], [0], [0], [0, 0, 1, 0], [], []>} : vector<8x32xf32>, vector<96x32xf32>, vector<8x96xf32> -> vector<8x96xf32>
    %c0_3 = arith.constant 0 : index
    %c0_4 = arith.constant 0 : index
    %3 = vector.load %arg11[%c0_3, %c0_4] : memref<1x96xf32, #tpu.memory_space<vmem>>, vector<1x96xf32>
    %4 = vector.broadcast %3 : vector<1x96xf32> to vector<8x96xf32>
    %5 = arith.addf %2, %4 : vector<8x96xf32>
    %6 = vector.extract_strided_slice %5 {offsets = [0, 0], sizes = [8, 32], strides = [1, 1]} : vector<8x96xf32> to vector<8x32xf32>
    %7 = vector.extract_strided_slice %5 {offsets = [0, 32], sizes = [8, 32], strides = [1, 1]} : vector<8x96xf32> to vector<8x32xf32>
    %8 = vector.extract_strided_slice %5 {offsets = [0, 64], sizes = [8, 32], strides = [1, 1]} : vector<8x96xf32> to vector<8x32xf32>
    %c0_5 = arith.constant 0 : index
    %c0_6 = arith.constant 0 : index
    %9 = vector.load %arg12[%c0_5, %c0_6] : memref<32x32xf32, #tpu.memory_space<vmem>>, vector<32x32xf32>
    %c0_7 = arith.constant 0 : index
    %c0_8 = arith.constant 0 : index
    %10 = vector.load %arg13[%c0_7, %c0_8] : memref<1x32xf32, #tpu.memory_space<vmem>>, vector<1x32xf32>
    %c0_9 = arith.constant 0 : index
    %c0_10 = arith.constant 0 : index
    %c0_11 = arith.constant 0 : index
    %11 = vector.load %arg2[%c0_9, %c0_10, %c0_11] : memref<8x8x32xf32, #tpu.memory_space<vmem>>, vector<8x8x32xf32>
    %12 = vector.shape_cast %11 : vector<8x8x32xf32> to vector<64x32xf32>
    %cst_12 = arith.constant dense<0.000000e+00> : vector<64x32xf32>
    %13 = tpu.matmul %12, %9, %cst_12 {dimension_numbers = #tpu.dot_dimension_numbers<[1], [1], [0], [0], [0, 0, 1, 0], [], []>} : vector<64x32xf32>, vector<32x32xf32>, vector<64x32xf32> -> vector<64x32xf32>
    %14 = vector.shape_cast %13 : vector<64x32xf32> to vector<8x8x32xf32>
    %15 = vector.shape_cast %6 : vector<8x32xf32> to vector<8x1x32xf32>
    %16 = vector.broadcast %15 : vector<8x1x32xf32> to vector<8x8x32xf32>
    %17 = arith.addf %14, %16 : vector<8x8x32xf32>
    %18 = math.tanh %17 : vector<8x8x32xf32>
    %19 = vector.shape_cast %10 : vector<1x32xf32> to vector<1x1x32xf32>
    %20 = vector.broadcast %19 : vector<1x1x32xf32> to vector<8x8x32xf32>
    %21 = arith.mulf %18, %20 : vector<8x8x32xf32>
    %cst_13 = arith.constant dense<0.000000e+00> : vector<8x8xf32>
    %22 = vector.multi_reduction <add>, %21, %cst_13 [2] : vector<8x8x32xf32> to vector<8x8xf32>
    %c0_14 = arith.constant 0 : index
    %c0_15 = arith.constant 0 : index
    %23 = vector.load %arg14[%c0_14, %c0_15] : memref<32x32xf32, #tpu.memory_space<vmem>>, vector<32x32xf32>
    %c0_16 = arith.constant 0 : index
    %c0_17 = arith.constant 0 : index
    %24 = vector.load %arg15[%c0_16, %c0_17] : memref<1x32xf32, #tpu.memory_space<vmem>>, vector<1x32xf32>
    %c0_18 = arith.constant 0 : index
    %c0_19 = arith.constant 0 : index
    %c0_20 = arith.constant 0 : index
    %25 = vector.load %arg4[%c0_18, %c0_19, %c0_20] : memref<8x64x32xf32, #tpu.memory_space<vmem>>, vector<8x64x32xf32>
    %26 = vector.shape_cast %25 : vector<8x64x32xf32> to vector<512x32xf32>
    %cst_21 = arith.constant dense<0.000000e+00> : vector<512x32xf32>
    %27 = tpu.matmul %26, %23, %cst_21 {dimension_numbers = #tpu.dot_dimension_numbers<[1], [1], [0], [0], [0, 0, 1, 0], [], []>} : vector<512x32xf32>, vector<32x32xf32>, vector<512x32xf32> -> vector<512x32xf32>
    %28 = vector.shape_cast %27 : vector<512x32xf32> to vector<8x64x32xf32>
    %29 = vector.shape_cast %7 : vector<8x32xf32> to vector<8x1x32xf32>
    %30 = vector.broadcast %29 : vector<8x1x32xf32> to vector<8x64x32xf32>
    %31 = arith.addf %28, %30 : vector<8x64x32xf32>
    %32 = math.tanh %31 : vector<8x64x32xf32>
    %33 = vector.shape_cast %24 : vector<1x32xf32> to vector<1x1x32xf32>
    %34 = vector.broadcast %33 : vector<1x1x32xf32> to vector<8x64x32xf32>
    %35 = arith.mulf %32, %34 : vector<8x64x32xf32>
    %cst_22 = arith.constant dense<0.000000e+00> : vector<8x64xf32>
    %36 = vector.multi_reduction <add>, %35, %cst_22 [2] : vector<8x64x32xf32> to vector<8x64xf32>
    %c0_23 = arith.constant 0 : index
    %c0_24 = arith.constant 0 : index
    %37 = vector.load %arg16[%c0_23, %c0_24] : memref<32x32xf32, #tpu.memory_space<vmem>>, vector<32x32xf32>
    %c0_25 = arith.constant 0 : index
    %c0_26 = arith.constant 0 : index
    %38 = vector.load %arg17[%c0_25, %c0_26] : memref<1x32xf32, #tpu.memory_space<vmem>>, vector<1x32xf32>
    %c0_27 = arith.constant 0 : index
    %c0_28 = arith.constant 0 : index
    %c0_29 = arith.constant 0 : index
    %39 = vector.load %arg3[%c0_27, %c0_28, %c0_29] : memref<8x8x32xf32, #tpu.memory_space<vmem>>, vector<8x8x32xf32>
    %40 = vector.shape_cast %39 : vector<8x8x32xf32> to vector<64x32xf32>
    %cst_30 = arith.constant dense<0.000000e+00> : vector<64x32xf32>
    %41 = tpu.matmul %40, %37, %cst_30 {dimension_numbers = #tpu.dot_dimension_numbers<[1], [1], [0], [0], [0, 0, 1, 0], [], []>} : vector<64x32xf32>, vector<32x32xf32>, vector<64x32xf32> -> vector<64x32xf32>
    %42 = vector.shape_cast %41 : vector<64x32xf32> to vector<8x8x32xf32>
    %43 = vector.shape_cast %8 : vector<8x32xf32> to vector<8x1x32xf32>
    %44 = vector.broadcast %43 : vector<8x1x32xf32> to vector<8x8x32xf32>
    %45 = arith.addf %42, %44 : vector<8x8x32xf32>
    %46 = math.tanh %45 : vector<8x8x32xf32>
    %47 = vector.shape_cast %38 : vector<1x32xf32> to vector<1x1x32xf32>
    %48 = vector.broadcast %47 : vector<1x1x32xf32> to vector<8x8x32xf32>
    %49 = arith.mulf %46, %48 : vector<8x8x32xf32>
    %cst_31 = arith.constant dense<0.000000e+00> : vector<8x8xf32>
    %50 = vector.multi_reduction <add>, %49, %cst_31 [2] : vector<8x8x32xf32> to vector<8x8xf32>
    %c0_32 = arith.constant 0 : index
    %c0_33 = arith.constant 0 : index
    %51 = vector.load %arg9[%c0_32, %c0_33] : memref<8x64xf32, #tpu.memory_space<vmem>>, vector<8x64xf32>
    %cst_34 = arith.constant dense<0.000000e+00> : vector<8x64xf32>
    %52 = tpu.matmul %50, %51, %cst_34 {dimension_numbers = #tpu.dot_dimension_numbers<[1], [0], [0], [1], [0, 0, 1, 1], [], []>} : vector<8x8xf32>, vector<8x64xf32>, vector<8x64xf32> -> vector<8x64xf32>
    %53 = arith.mulf %36, %52 : vector<8x64xf32>
    %c0_35 = arith.constant 0 : index
    %c0_36 = arith.constant 0 : index
    %54 = vector.load %arg7[%c0_35, %c0_36] : memref<1x8xi32, #tpu.memory_space<vmem>>, vector<1x8xi32>
    %c0_37 = arith.constant 0 : index
    %c0_38 = arith.constant 0 : index
    %55 = vector.load %arg5[%c0_37, %c0_38] : memref<8x1xi32, #tpu.memory_space<vmem>>, vector<8x1xi32>
    %56 = vector.broadcast %54 : vector<1x8xi32> to vector<8x8xi32>
    %57 = vector.broadcast %55 : vector<8x1xi32> to vector<8x8xi32>
    %58 = arith.cmpi slt, %56, %57 : vector<8x8xi32>
    %c0_39 = arith.constant 0 : index
    %c0_40 = arith.constant 0 : index
    %59 = vector.load %arg8[%c0_39, %c0_40] : memref<1x64xi32, #tpu.memory_space<vmem>>, vector<1x64xi32>
    %c0_41 = arith.constant 0 : index
    %c0_42 = arith.constant 0 : index
    %60 = vector.load %arg6[%c0_41, %c0_42] : memref<8x64xi32, #tpu.memory_space<vmem>>, vector<8x64xi32>
    %61 = vector.broadcast %59 : vector<1x64xi32> to vector<8x64xi32>
    %62 = arith.cmpi slt, %61, %60 : vector<8x64xi32>
    %cst_43 = arith.constant 0xFF800000 : f32
    %63 = vector.broadcast %cst_43 : f32 to vector<8x8xf32>
    %64 = arith.select %58, %22, %63 : vector<8x8xi1>, vector<8x8xf32>
    %cst_44 = arith.constant 0xFF800000 : f32
    %65 = vector.broadcast %cst_44 : f32 to vector<8x64xf32>
    %66 = arith.select %62, %53, %65 : vector<8x64xi1>, vector<8x64xf32>
    %cst_45 = arith.constant dense<0xFF800000> : vector<8xf32>
    %67 = vector.multi_reduction <maximumf>, %64, %cst_45 [1] : vector<8x8xf32> to vector<8xf32>
    %68 = vector.shape_cast %67 : vector<8xf32> to vector<8x1xf32>
    %cst_46 = arith.constant dense<0xFF800000> : vector<8xf32>
    %69 = vector.multi_reduction <maximumf>, %66, %cst_46 [1] : vector<8x64xf32> to vector<8xf32>
    %70 = vector.shape_cast %69 : vector<8xf32> to vector<8x1xf32>
    %71 = vector.broadcast %68 : vector<8x1xf32> to vector<8x8xf32>
    %72 = arith.subf %64, %71 : vector<8x8xf32>
    %73 = math.exp %72 : vector<8x8xf32>
    %74 = vector.broadcast %70 : vector<8x1xf32> to vector<8x64xf32>
    %75 = arith.subf %66, %74 : vector<8x64xf32>
    %76 = math.exp %75 : vector<8x64xf32>
    %cst_47 = arith.constant dense<0.000000e+00> : vector<8xf32>
    %77 = vector.multi_reduction <add>, %73, %cst_47 [1] : vector<8x8xf32> to vector<8xf32>
    %78 = vector.shape_cast %77 : vector<8xf32> to vector<8x1xf32>
    %cst_48 = arith.constant dense<0.000000e+00> : vector<8xf32>
    %79 = vector.multi_reduction <add>, %76, %cst_48 [1] : vector<8x64xf32> to vector<8xf32>
    %80 = vector.shape_cast %79 : vector<8xf32> to vector<8x1xf32>
    %81 = tpu.reciprocal %78 {approx = true} : vector<8x1xf32> -> vector<8x1xf32>
    %82 = arith.mulf %78, %81 : vector<8x1xf32>
    %cst_49 = arith.constant 2.000000e+00 : f32
    %83 = vector.broadcast %cst_49 : f32 to vector<8x1xf32>
    %84 = arith.subf %83, %82 : vector<8x1xf32>
    %85 = arith.mulf %81, %84 : vector<8x1xf32>
    %86 = vector.broadcast %85 : vector<8x1xf32> to vector<8x8xf32>
    %87 = arith.mulf %73, %86 : vector<8x8xf32>
    %88 = tpu.reciprocal %80 {approx = true} : vector<8x1xf32> -> vector<8x1xf32>
    %89 = arith.mulf %80, %88 : vector<8x1xf32>
    %cst_50 = arith.constant 2.000000e+00 : f32
    %90 = vector.broadcast %cst_50 : f32 to vector<8x1xf32>
    %91 = arith.subf %90, %89 : vector<8x1xf32>
    %92 = arith.mulf %88, %91 : vector<8x1xf32>
    %93 = vector.broadcast %92 : vector<8x1xf32> to vector<8x64xf32>
    %94 = arith.mulf %76, %93 : vector<8x64xf32>
    %95 = arith.maximumf %68, %70 : vector<8x1xf32>
    %96 = arith.subf %68, %95 : vector<8x1xf32>
    %97 = math.exp %96 : vector<8x1xf32>
    %98 = arith.subf %70, %95 : vector<8x1xf32>
    %99 = math.exp %98 : vector<8x1xf32>
    %100 = arith.mulf %97, %78 : vector<8x1xf32>
    %101 = arith.mulf %99, %80 : vector<8x1xf32>
    %102 = arith.addf %100, %101 : vector<8x1xf32>
    %103 = tpu.reciprocal %102 {approx = true} : vector<8x1xf32> -> vector<8x1xf32>
    %104 = arith.mulf %102, %103 : vector<8x1xf32>
    %cst_51 = arith.constant 2.000000e+00 : f32
    %105 = vector.broadcast %cst_51 : f32 to vector<8x1xf32>
    %106 = arith.subf %105, %104 : vector<8x1xf32>
    %107 = arith.mulf %103, %106 : vector<8x1xf32>
    %108 = arith.mulf %97, %107 : vector<8x1xf32>
    %109 = vector.broadcast %108 : vector<8x1xf32> to vector<8x8xf32>
    %110 = arith.mulf %73, %109 : vector<8x8xf32>
    %111 = arith.mulf %99, %107 : vector<8x1xf32>
    %112 = vector.broadcast %111 : vector<8x1xf32> to vector<8x64xf32>
    %113 = arith.mulf %76, %112 : vector<8x64xf32>
    %114 = vector.shape_cast %110 : vector<8x8xf32> to vector<8x8x1xf32>
    %c0_52 = arith.constant 0 : index
    %c0_53 = arith.constant 0 : index
    %c0_54 = arith.constant 0 : index
    %115 = vector.load %arg2[%c0_52, %c0_53, %c0_54] : memref<8x8x32xf32, #tpu.memory_space<vmem>>, vector<8x8x32xf32>
    %116 = vector.broadcast %114 : vector<8x8x1xf32> to vector<8x8x32xf32>
    %117 = arith.mulf %116, %115 : vector<8x8x32xf32>
    %cst_55 = arith.constant dense<0.000000e+00> : vector<8x32xf32>
    %118 = vector.multi_reduction <add>, %117, %cst_55 [1] : vector<8x8x32xf32> to vector<8x32xf32>
    %119 = vector.shape_cast %113 : vector<8x64xf32> to vector<8x64x1xf32>
    %c0_56 = arith.constant 0 : index
    %c0_57 = arith.constant 0 : index
    %c0_58 = arith.constant 0 : index
    %120 = vector.load %arg4[%c0_56, %c0_57, %c0_58] : memref<8x64x32xf32, #tpu.memory_space<vmem>>, vector<8x64x32xf32>
    %121 = vector.broadcast %119 : vector<8x64x1xf32> to vector<8x64x32xf32>
    %122 = arith.mulf %121, %120 : vector<8x64x32xf32>
    %cst_59 = arith.constant dense<0.000000e+00> : vector<8x32xf32>
    %123 = vector.multi_reduction <add>, %122, %cst_59 [1] : vector<8x64x32xf32> to vector<8x32xf32>
    %124 = arith.addf %118, %123 : vector<8x32xf32>
    %cst_60 = arith.constant 0.000000e+00 : f32
    %125 = vector.broadcast %cst_60 : f32 to vector<8x80xf32>
    %126 = tpu.concatenate %124, %110, %113, %87, %94, %125 in 1 : vector<8x32xf32>, vector<8x8xf32>, vector<8x64xf32>, vector<8x8xf32>, vector<8x64xf32>, vector<8x80xf32> -> vector<8x256xf32>
    %c0_61 = arith.constant 0 : index
    %c0_62 = arith.constant 0 : index
    %127 = vector.load %arg18[%c0_61, %c0_62] : memref<8x256xf32, #tpu.memory_space<vmem>>, vector<8x256xf32>
    tpu.vector_store %arg18[%c0_61, %c0_62], %126 {strides = array<i32>} : memref<8x256xf32, #tpu.memory_space<vmem>>, vector<8x256xf32>,
    return
  }
  func.func @transform_0(%arg0: i32) -> (i32, i32) {
    %c0_i32 = arith.constant 0 : i32
    %c0_i32_0 = arith.constant 0 : i32
    return %arg0, %c0_i32 : i32, i32
  }
  func.func @transform_1(%arg0: i32) -> (i32, i32, i32) {
    %c0_i32 = arith.constant 0 : i32
    %c0_i32_0 = arith.constant 0 : i32
    %c0_i32_1 = arith.constant 0 : i32
    return %arg0, %c0_i32, %c0_i32_0 : i32, i32, i32
  }
  func.func @transform_2(%arg0: i32) -> (i32, i32, i32) {
    %c0_i32 = arith.constant 0 : i32
    %c0_i32_0 = arith.constant 0 : i32
    %c0_i32_1 = arith.constant 0 : i32
    return %arg0, %c0_i32, %c0_i32_0 : i32, i32, i32
  }
  func.func @transform_3(%arg0: i32) -> (i32, i32, i32) {
    %c0_i32 = arith.constant 0 : i32
    %c0_i32_0 = arith.constant 0 : i32
    %c0_i32_1 = arith.constant 0 : i32
    return %arg0, %c0_i32, %c0_i32_0 : i32, i32, i32
  }
  func.func @transform_4(%arg0: i32) -> (i32, i32) {
    %c0_i32 = arith.constant 0 : i32
    %c0_i32_0 = arith.constant 0 : i32
    return %arg0, %c0_i32 : i32, i32
  }
  func.func @transform_5(%arg0: i32) -> (i32, i32) {
    %c0_i32 = arith.constant 0 : i32
    %c0_i32_0 = arith.constant 0 : i32
    return %arg0, %c0_i32 : i32, i32
  }
  func.func @transform_6(%arg0: i32) -> (i32, i32) {
    %c0_i32 = arith.constant 0 : i32
    %c0_i32_0 = arith.constant 0 : i32
    %c0_i32_1 = arith.constant 0 : i32
    return %c0_i32, %c0_i32_0 : i32, i32
  }
  func.func @transform_7(%arg0: i32) -> (i32, i32) {
    %c0_i32 = arith.constant 0 : i32
    %c0_i32_0 = arith.constant 0 : i32
    %c0_i32_1 = arith.constant 0 : i32
    return %c0_i32, %c0_i32_0 : i32, i32
  }
  func.func @transform_8(%arg0: i32) -> (i32, i32) {
    %c0_i32 = arith.constant 0 : i32
    %c0_i32_0 = arith.constant 0 : i32
    %c0_i32_1 = arith.constant 0 : i32
    return %c0_i32, %c0_i32_0 : i32, i32
  }
  func.func @transform_9(%arg0: i32) -> (i32, i32) {
    %c0_i32 = arith.constant 0 : i32
    %c0_i32_0 = arith.constant 0 : i32
    %c0_i32_1 = arith.constant 0 : i32
    return %c0_i32, %c0_i32_0 : i32, i32
  }
  func.func @transform_10(%arg0: i32) -> (i32, i32) {
    %c0_i32 = arith.constant 0 : i32
    %c0_i32_0 = arith.constant 0 : i32
    %c0_i32_1 = arith.constant 0 : i32
    return %c0_i32, %c0_i32_0 : i32, i32
  }
  func.func @transform_11(%arg0: i32) -> (i32, i32) {
    %c0_i32 = arith.constant 0 : i32
    %c0_i32_0 = arith.constant 0 : i32
    %c0_i32_1 = arith.constant 0 : i32
    return %c0_i32, %c0_i32_0 : i32, i32
  }
  func.func @transform_12(%arg0: i32) -> (i32, i32) {
    %c0_i32 = arith.constant 0 : i32
    %c0_i32_0 = arith.constant 0 : i32
    %c0_i32_1 = arith.constant 0 : i32
    return %c0_i32, %c0_i32_0 : i32, i32
  }
  func.func @transform_13(%arg0: i32) -> (i32, i32) {
    %c0_i32 = arith.constant 0 : i32
    %c0_i32_0 = arith.constant 0 : i32
    %c0_i32_1 = arith.constant 0 : i32
    return %c0_i32, %c0_i32_0 : i32, i32
  }
  func.func @transform_14(%arg0: i32) -> (i32, i32) {
    %c0_i32 = arith.constant 0 : i32
    %c0_i32_0 = arith.constant 0 : i32
    %c0_i32_1 = arith.constant 0 : i32
    return %c0_i32, %c0_i32_0 : i32, i32
  }
  func.func @transform_15(%arg0: i32) -> (i32, i32) {
    %c0_i32 = arith.constant 0 : i32
    %c0_i32_0 = arith.constant 0 : i32
    %c0_i32_1 = arith.constant 0 : i32
    return %c0_i32, %c0_i32_0 : i32, i32
  }
  func.func @transform_16(%arg0: i32) -> (i32, i32) {
    %c0_i32 = arith.constant 0 : i32
    %c0_i32_0 = arith.constant 0 : i32
    %c0_i32_1 = arith.constant 0 : i32
    return %c0_i32, %c0_i32_0 : i32, i32
  }
  func.func @transform_17(%arg0: i32) -> (i32, i32) {
    %c0_i32 = arith.constant 0 : i32
    %c0_i32_0 = arith.constant 0 : i32
    return %arg0, %c0_i32 : i32, i32
  }
}

</mosaic_0001>

<llo_original>
// kernel: tpu_custom_call.1
$region0: #{tpu_custom_call.1}
  #allocation0 [shape = 'u32[]', space=smem, size = 0x4, offset = 0x4, fixed_abs, tag = 'smem constant byte address 0x4 - core index']
  #allocation1 [shape = 'u32[72,128]{1,0:T(1,128)}', space=vmem, size = 0x9000, scoped, tag = 'internal scratch']
  %s0 = inlined_call_operand.vmem [shape: f32[16,32], index: 0, kind: input, shape index: {}]
  %s1 = inlined_call_operand.vmem [shape: f32[16,8,32], index: 1, kind: input, shape index: {}]
  %s2 = inlined_call_operand.vmem [shape: f32[16,8,32], index: 2, kind: input, shape index: {}]
  %s3 = inlined_call_operand.vmem [shape: f32[16,64,32], index: 3, kind: input, shape index: {}]
  %s4 = inlined_call_operand.vmem [shape: s32[16,1], index: 4, kind: input, shape index: {}]
  %s5 = inlined_call_operand.vmem [shape: s32[16,64], index: 5, kind: input, shape index: {}]
  %s6 = inlined_call_operand.vmem [shape: s32[1,8], index: 6, kind: input, shape index: {}]
  %s7 = inlined_call_operand.vmem [shape: s32[1,64], index: 7, kind: input, shape index: {}]
  %s8 = inlined_call_operand.vmem [shape: f32[8,64], index: 8, kind: input, shape index: {}]
  %s9 = inlined_call_operand.vmem [shape: f32[96,32], index: 9, kind: input, shape index: {}]
  %s10 = inlined_call_operand.vmem [shape: f32[1,96], index: 10, kind: input, shape index: {}]
  %s11 = inlined_call_operand.vmem [shape: f32[32,32], index: 11, kind: input, shape index: {}]
  %s12 = inlined_call_operand.vmem [shape: f32[1,32], index: 12, kind: input, shape index: {}]
  %s13 = inlined_call_operand.vmem [shape: f32[32,32], index: 13, kind: input, shape index: {}]
  %s14 = inlined_call_operand.vmem [shape: f32[1,32], index: 14, kind: input, shape index: {}]
  %s15 = inlined_call_operand.vmem [shape: f32[32,32], index: 15, kind: input, shape index: {}]
  %s16 = inlined_call_operand.vmem [shape: f32[1,32], index: 16, kind: input, shape index: {}]
  %s17 = inlined_call_operand.hbm [shape: f32[16,256], index: 17, kind: output, shape index: {}]
  %s18 = sld [smem:[#allocation0]]
  $region101: #{tpu_custom_call.1} parent=0
    _
  %s20 = ssub.s32 1, %s18
  %s21 = scalar_select 0, %s20, %s18
  $region1: #{tpu_custom_call.1} parent=0
    #allocation2 [shape = 'u8[16384]{0}', space=vmem, size = 0x4000, scoped, tag = 'output window, operand 0']
    #allocation3 [shape = 's32[2]{0}', space=sflag, size = 0x8, scoped, tag = 'scoped memory for tpu_custom_call.1']
    %22 = vsyncpa [#allocation3], 0
    %s23 = scalar_lea.sflag [#allocation3], 1
    %24 = vsyncpa %s23, 0
    loop: start=0, step=1, limit=4
    $region2: #{tpu_custom_call.1} parent=1 // loop_pre_header
      _
    $region3: #{tpu_custom_call.1} parent=1 // loop_header
      %s26 = sphi 0, %s30
      %p27 = scmp.ge.s32.totalorder %s26, 4
      %s36 = sphi 0, %s38
      %s39 = sphi 0, %s36
      %s40 = sphi 0, %s39
      %s56 = sphi 0, %s40
      %s62 = sphi 0, %s64
      %s65 = sphi 0, %s62
      %s66 = sphi 0, %s65
      %s82 = sphi 0, %s66
      %s88 = sphi 0, %s90
      %s91 = sphi 0, %s88
      %s92 = sphi 0, %s91
      %s108 = sphi 0, %s92
      %s114 = sphi 0, %s116
      %s117 = sphi 0, %s114
      %s118 = sphi 0, %s117
      %s134 = sphi 0, %s118
      %s140 = sphi 0, %s142
      %s143 = sphi 0, %s140
      %s144 = sphi 0, %s143
      %s160 = sphi 0, %s144
      %s166 = sphi 0, %s168
      %s169 = sphi 0, %s166
      %s170 = sphi 0, %s169
      %s186 = sphi 0, %s170
      %s190 = sphi 0, %s190
      %s192 = sphi 0, %s190
      %s193 = sphi 0, %s192
      %s207 = sphi 0, %s193
      %s211 = sphi 0, %s211
      %s213 = sphi 0, %s211
      %s214 = sphi 0, %s213
      %s228 = sphi 0, %s214
      %s232 = sphi 0, %s232
      %s234 = sphi 0, %s232
      %s235 = sphi 0, %s234
      %s249 = sphi 0, %s235
      %s253 = sphi 0, %s253
      %s255 = sphi 0, %s253
      %s256 = sphi 0, %s255
      %s270 = sphi 0, %s256
      %s274 = sphi 0, %s274
      %s276 = sphi 0, %s274
      %s277 = sphi 0, %s276
      %s291 = sphi 0, %s277
      %s295 = sphi 0, %s295
      %s297 = sphi 0, %s295
      %s298 = sphi 0, %s297
      %s312 = sphi 0, %s298
      %s316 = sphi 0, %s316
      %s318 = sphi 0, %s316
      %s319 = sphi 0, %s318
      %s333 = sphi 0, %s319
      %s337 = sphi 0, %s337
      %s339 = sphi 0, %s337
      %s340 = sphi 0, %s339
      %s354 = sphi 0, %s340
      %s358 = sphi 0, %s358
      %s360 = sphi 0, %s358
      %s361 = sphi 0, %s360
      %s375 = sphi 0, %s361
      %s379 = sphi 0, %s379
      %s381 = sphi 0, %s379
      %s382 = sphi 0, %s381
      %s396 = sphi 0, %s382
      %s400 = sphi 0, %s400
      %s402 = sphi 0, %s400
      %s403 = sphi 0, %s402
      %s417 = sphi 0, %s403
      %s423 = sphi 0, %s425
      %s426 = sphi 0, %s423
      %s427 = sphi 0, %s426
      %s443 = sphi 0, %s427
    $region4: #{tpu_custom_call.1} parent=1 // loop_header_branch
      %29 = sbr.rel (%p27) target = $region8
    $region5: #{tpu_custom_call.1} parent=1 // loop_body
      %s31 = ssub.s32 %s26, 1
      %s32 = ssub.s32 %s26, 2
      %s33 = sadd.s32 %s26, 1
      %s34 = ssub.s32 %s26, %s33
      %p35 = scmp.eq.s32.totalorder %s34, 0
      %s37 = sadd.s32 %s36, 1
      %s38 = scalar_select %p35, %s36, %s37
      %p41 = pneg %p35
      %p42 = scmp.eq.s32.totalorder %s26, 1
      %p43 = por %p41, %p42
      %p44 = scmp.ne.s32.totalorder %s36, %s39
      %p45 = scmp.eq.s32.totalorder %s26, 0
      %p46 = por %p44, %p45
      %p47 = scmp.ne.s32.totalorder %s36, %s39
      %p48 = scmp.eq.s32.totalorder %s31, 1
      %p49 = por %p47, %p48
      %p50 = scmp.ne.s32.totalorder %s39, %s40
      %p51 = scmp.eq.s32.totalorder %s31, 0
      %p52 = por %p50, %p51
      %p53 = scmp.ne.s32.totalorder %s39, %s40
      %p54 = scmp.eq.s32.totalorder %s32, 1
      %p55 = por %p53, %p54
      %p57 = scmp.ne.s32.totalorder %s40, %s56
      %p58 = scmp.eq.s32.totalorder %s32, 0
      %p59 = por %p57, %p58
      %s60 = ssub.s32 %s26, %s33
      %p61 = scmp.eq.s32.totalorder %s60, 0
      %s63 = sadd.s32 %s62, 1
      %s64 = scalar_select %p61, %s62, %s63
      %p67 = pneg %p61
      %p68 = scmp.eq.s32.totalorder %s26, 1
      %p69 = por %p67, %p68
      %p70 = scmp.ne.s32.totalorder %s62, %s65
      %p71 = scmp.eq.s32.totalorder %s26, 0
      %p72 = por %p70, %p71
      %p73 = scmp.ne.s32.totalorder %s62, %s65
      %p74 = scmp.eq.s32.totalorder %s31, 1
      %p75 = por %p73, %p74
      %p76 = scmp.ne.s32.totalorder %s65, %s66
      %p77 = scmp.eq.s32.totalorder %s31, 0
      %p78 = por %p76, %p77
      %p79 = scmp.ne.s32.totalorder %s65, %s66
      %p80 = scmp.eq.s32.totalorder %s32, 1
      %p81 = por %p79, %p80
      %p83 = scmp.ne.s32.totalorder %s66, %s82
      %p84 = scmp.eq.s32.totalorder %s32, 0
      %p85 = por %p83, %p84
      %s86 = ssub.s32 %s26, %s33
      %p87 = scmp.eq.s32.totalorder %s86, 0
      %s89 = sadd.s32 %s88, 1
      %s90 = scalar_select %p87, %s88, %s89
      %p93 = pneg %p87
      %p94 = scmp.eq.s32.totalorder %s26, 1
      %p95 = por %p93, %p94
      %p96 = scmp.ne.s32.totalorder %s88, %s91
      %p97 = scmp.eq.s32.totalorder %s26, 0
      %p98 = por %p96, %p97
      %p99 = scmp.ne.s32.totalorder %s88, %s91
      %p100 = scmp.eq.s32.totalorder %s31, 1
      %p101 = por %p99, %p100
      %p102 = scmp.ne.s32.totalorder %s91, %s92
      %p103 = scmp.eq.s32.totalorder %s31, 0
      %p104 = por %p102, %p103
      %p105 = scmp.ne.s32.totalorder %s91, %s92
      %p106 = scmp.eq.s32.totalorder %s32, 1
      %p107 = por %p105, %p106
      %p109 = scmp.ne.s32.totalorder %s92, %s108
      %p110 = scmp.eq.s32.totalorder %s32, 0
      %p111 = por %p109, %p110
      %s112 = ssub.s32 %s26, %s33
      %p113 = scmp.eq.s32.totalorder %s112, 0
      %s115 = sadd.s32 %s114, 1
      %s116 = scalar_select %p113, %s114, %s115
      %p119 = pneg %p113
      %p120 = scmp.eq.s32.totalorder %s26, 1
      %p121 = por %p119, %p120
      %p122 = scmp.ne.s32.totalorder %s114, %s117
      %p123 = scmp.eq.s32.totalorder %s26, 0
      %p124 = por %p122, %p123
      %p125 = scmp.ne.s32.totalorder %s114, %s117
      %p126 = scmp.eq.s32.totalorder %s31, 1
      %p127 = por %p125, %p126
      %p128 = scmp.ne.s32.totalorder %s117, %s118
      %p129 = scmp.eq.s32.totalorder %s31, 0
      %p130 = por %p128, %p129
      %p131 = scmp.ne.s32.totalorder %s117, %s118
      %p132 = scmp.eq.s32.totalorder %s32, 1
      %p133 = por %p131, %p132
      %p135 = scmp.ne.s32.totalorder %s118, %s134
      %p136 = scmp.eq.s32.totalorder %s32, 0
      %p137 = por %p135, %p136
      %s138 = ssub.s32 %s26, %s33
      %p139 = scmp.eq.s32.totalorder %s138, 0
      %s141 = sadd.s32 %s140, 1
      %s142 = scalar_select %p139, %s140, %s141
      %p145 = pneg %p139
      %p146 = scmp.eq.s32.totalorder %s26, 1
      %p147 = por %p145, %p146
      %p148 = scmp.ne.s32.totalorder %s140, %s143
      %p149 = scmp.eq.s32.totalorder %s26, 0
      %p150 = por %p148, %p149
      %p151 = scmp.ne.s32.totalorder %s140, %s143
      %p152 = scmp.eq.s32.totalorder %s31, 1
      %p153 = por %p151, %p152
      %p154 = scmp.ne.s32.totalorder %s143, %s144
      %p155 = scmp.eq.s32.totalorder %s31, 0
      %p156 = por %p154, %p155
      %p157 = scmp.ne.s32.totalorder %s143, %s144
      %p158 = scmp.eq.s32.totalorder %s32, 1
      %p159 = por %p157, %p158
      %p161 = scmp.ne.s32.totalorder %s144, %s160
      %p162 = scmp.eq.s32.totalorder %s32, 0
      %p163 = por %p161, %p162
      %s164 = ssub.s32 %s26, %s33
      %p165 = scmp.eq.s32.totalorder %s164, 0
      %s167 = sadd.s32 %s166, 1
      %s168 = scalar_select %p165, %s166, %s167
      %p171 = pneg %p165
      %p172 = scmp.eq.s32.totalorder %s26, 1
      %p173 = por %p171, %p172
      %p174 = scmp.ne.s32.totalorder %s166, %s169
      %p175 = scmp.eq.s32.totalorder %s26, 0
      %p176 = por %p174, %p175
      %p177 = scmp.ne.s32.totalorder %s166, %s169
      %p178 = scmp.eq.s32.totalorder %s31, 1
      %p179 = por %p177, %p178
      %p180 = scmp.ne.s32.totalorder %s169, %s170
      %p181 = scmp.eq.s32.totalorder %s31, 0
      %p182 = por %p180, %p181
      %p183 = scmp.ne.s32.totalorder %s169, %s170
      %p184 = scmp.eq.s32.totalorder %s32, 1
      %p185 = por %p183, %p184
      %p187 = scmp.ne.s32.totalorder %s170, %s186
      %p188 = scmp.eq.s32.totalorder %s32, 0
      %p189 = por %p187, %p188
      %s191 = sadd.s32 %s190, 1
      %p194 = scmp.eq.s32.totalorder %s26, 1
      %p195 = scmp.ne.s32.totalorder %s190, %s192
      %p196 = scmp.eq.s32.totalorder %s26, 0
      %p197 = por %p195, %p196
      %p198 = scmp.ne.s32.totalorder %s190, %s192
      %p199 = scmp.eq.s32.totalorder %s31, 1
      %p200 = por %p198, %p199
      %p201 = scmp.ne.s32.totalorder %s192, %s193
      %p202 = scmp.eq.s32.totalorder %s31, 0
      %p203 = por %p201, %p202
      %p204 = scmp.ne.s32.totalorder %s192, %s193
      %p205 = scmp.eq.s32.totalorder %s32, 1
      %p206 = por %p204, %p205
      %p208 = scmp.ne.s32.totalorder %s193, %s207
      %p209 = scmp.eq.s32.totalorder %s32, 0
      %p210 = por %p208, %p209
      %s212 = sadd.s32 %s211, 1
      %p215 = scmp.eq.s32.totalorder %s26, 1
      %p216 = scmp.ne.s32.totalorder %s211, %s213
      %p217 = scmp.eq.s32.totalorder %s26, 0
      %p218 = por %p216, %p217
      %p219 = scmp.ne.s32.totalorder %s211, %s213
      %p220 = scmp.eq.s32.totalorder %s31, 1
      %p221 = por %p219, %p220
      %p222 = scmp.ne.s32.totalorder %s213, %s214
      %p223 = scmp.eq.s32.totalorder %s31, 0
      %p224 = por %p222, %p223
      %p225 = scmp.ne.s32.totalorder %s213, %s214
      %p226 = scmp.eq.s32.totalorder %s32, 1
      %p227 = por %p225, %p226
      %p229 = scmp.ne.s32.totalorder %s214, %s228
      %p230 = scmp.eq.s32.totalorder %s32, 0
      %p231 = por %p229, %p230
      %s233 = sadd.s32 %s232, 1
      %p236 = scmp.eq.s32.totalorder %s26, 1
      %p237 = scmp.ne.s32.totalorder %s232, %s234
      %p238 = scmp.eq.s32.totalorder %s26, 0
      %p239 = por %p237, %p238
      %p240 = scmp.ne.s32.totalorder %s232, %s234
      %p241 = scmp.eq.s32.totalorder %s31, 1
      %p242 = por %p240, %p241
      %p243 = scmp.ne.s32.totalorder %s234, %s235
      %p244 = scmp.eq.s32.totalorder %s31, 0
      %p245 = por %p243, %p244
      %p246 = scmp.ne.s32.totalorder %s234, %s235
      %p247 = scmp.eq.s32.totalorder %s32, 1
      %p248 = por %p246, %p247
      %p250 = scmp.ne.s32.totalorder %s235, %s249
      %p251 = scmp.eq.s32.totalorder %s32, 0
      %p252 = por %p250, %p251
      %s254 = sadd.s32 %s253, 1
      %p257 = scmp.eq.s32.totalorder %s26, 1
      %p258 = scmp.ne.s32.totalorder %s253, %s255
      %p259 = scmp.eq.s32.totalorder %s26, 0
      %p260 = por %p258, %p259
      %p261 = scmp.ne.s32.totalorder %s253, %s255
      %p262 = scmp.eq.s32.totalorder %s31, 1
      %p263 = por %p261, %p262
      %p264 = scmp.ne.s32.totalorder %s255, %s256
      %p265 = scmp.eq.s32.totalorder %s31, 0
      %p266 = por %p264, %p265
      %p267 = scmp.ne.s32.totalorder %s255, %s256
      %p268 = scmp.eq.s32.totalorder %s32, 1
      %p269 = por %p267, %p268
      %p271 = scmp.ne.s32.totalorder %s256, %s270
      %p272 = scmp.eq.s32.totalorder %s32, 0
      %p273 = por %p271, %p272
      %s275 = sadd.s32 %s274, 1
      %p278 = scmp.eq.s32.totalorder %s26, 1
      %p279 = scmp.ne.s32.totalorder %s274, %s276
      %p280 = scmp.eq.s32.totalorder %s26, 0
      %p281 = por %p279, %p280
      %p282 = scmp.ne.s32.totalorder %s274, %s276
      %p283 = scmp.eq.s32.totalorder %s31, 1
      %p284 = por %p282, %p283
      %p285 = scmp.ne.s32.totalorder %s276, %s277
      %p286 = scmp.eq.s32.totalorder %s31, 0
      %p287 = por %p285, %p286
      %p288 = scmp.ne.s32.totalorder %s276, %s277
      %p289 = scmp.eq.s32.totalorder %s32, 1
      %p290 = por %p288, %p289
      %p292 = scmp.ne.s32.totalorder %s277, %s291
      %p293 = scmp.eq.s32.totalorder %s32, 0
      %p294 = por %p292, %p293
      %s296 = sadd.s32 %s295, 1
      %p299 = scmp.eq.s32.totalorder %s26, 1
      %p300 = scmp.ne.s32.totalorder %s295, %s297
      %p301 = scmp.eq.s32.totalorder %s26, 0
      %p302 = por %p300, %p301
      %p303 = scmp.ne.s32.totalorder %s295, %s297
      %p304 = scmp.eq.s32.totalorder %s31, 1
      %p305 = por %p303, %p304
      %p306 = scmp.ne.s32.totalorder %s297, %s298
      %p307 = scmp.eq.s32.totalorder %s31, 0
      %p308 = por %p306, %p307
      %p309 = scmp.ne.s32.totalorder %s297, %s298
      %p310 = scmp.eq.s32.totalorder %s32, 1
      %p311 = por %p309, %p310
      %p313 = scmp.ne.s32.totalorder %s298, %s312
      %p314 = scmp.eq.s32.totalorder %s32, 0
      %p315 = por %p313, %p314
      %s317 = sadd.s32 %s316, 1
      %p320 = scmp.eq.s32.totalorder %s26, 1
      %p321 = scmp.ne.s32.totalorder %s316, %s318
      %p322 = scmp.eq.s32.totalorder %s26, 0
      %p323 = por %p321, %p322
      %p324 = scmp.ne.s32.totalorder %s316, %s318
      %p325 = scmp.eq.s32.totalorder %s31, 1
      %p326 = por %p324, %p325
      %p327 = scmp.ne.s32.totalorder %s318, %s319
      %p328 = scmp.eq.s32.totalorder %s31, 0
      %p329 = por %p327, %p328
      %p330 = scmp.ne.s32.totalorder %s318, %s319
      %p331 = scmp.eq.s32.totalorder %s32, 1
      %p332 = por %p330, %p331
      %p334 = scmp.ne.s32.totalorder %s319, %s333
      %p335 = scmp.eq.s32.totalorder %s32, 0
      %p336 = por %p334, %p335
      %s338 = sadd.s32 %s337, 1
      %p341 = scmp.eq.s32.totalorder %s26, 1
      %p342 = scmp.ne.s32.totalorder %s337, %s339
      %p343 = scmp.eq.s32.totalorder %s26, 0
      %p344 = por %p342, %p343
      %p345 = scmp.ne.s32.totalorder %s337, %s339
      %p346 = scmp.eq.s32.totalorder %s31, 1
      %p347 = por %p345, %p346
      %p348 = scmp.ne.s32.totalorder %s339, %s340
      %p349 = scmp.eq.s32.totalorder %s31, 0
      %p350 = por %p348, %p349
      %p351 = scmp.ne.s32.totalorder %s339, %s340
      %p352 = scmp.eq.s32.totalorder %s32, 1
      %p353 = por %p351, %p352
      %p355 = scmp.ne.s32.totalorder %s340, %s354
      %p356 = scmp.eq.s32.totalorder %s32, 0
      %p357 = por %p355, %p356
      %s359 = sadd.s32 %s358, 1
      %p362 = scmp.eq.s32.totalorder %s26, 1
      %p363 = scmp.ne.s32.totalorder %s358, %s360
      %p364 = scmp.eq.s32.totalorder %s26, 0
      %p365 = por %p363, %p364
      %p366 = scmp.ne.s32.totalorder %s358, %s360
      %p367 = scmp.eq.s32.totalorder %s31, 1
      %p368 = por %p366, %p367
      %p369 = scmp.ne.s32.totalorder %s360, %s361
      %p370 = scmp.eq.s32.totalorder %s31, 0
      %p371 = por %p369, %p370
      %p372 = scmp.ne.s32.totalorder %s360, %s361
      %p373 = scmp.eq.s32.totalorder %s32, 1
      %p374 = por %p372, %p373
      %p376 = scmp.ne.s32.totalorder %s361, %s375
      %p377 = scmp.eq.s32.totalorder %s32, 0
      %p378 = por %p376, %p377
      %s380 = sadd.s32 %s379, 1
      %p383 = scmp.eq.s32.totalorder %s26, 1
      %p384 = scmp.ne.s32.totalorder %s379, %s381
      %p385 = scmp.eq.s32.totalorder %s26, 0
      %p386 = por %p384, %p385
      %p387 = scmp.ne.s32.totalorder %s379, %s381
      %p388 = scmp.eq.s32.totalorder %s31, 1
      %p389 = por %p387, %p388
      %p390 = scmp.ne.s32.totalorder %s381, %s382
      %p391 = scmp.eq.s32.totalorder %s31, 0
      %p392 = por %p390, %p391
      %p393 = scmp.ne.s32.totalorder %s381, %s382
      %p394 = scmp.eq.s32.totalorder %s32, 1
      %p395 = por %p393, %p394
      %p397 = scmp.ne.s32.totalorder %s382, %s396
      %p398 = scmp.eq.s32.totalorder %s32, 0
      %p399 = por %p397, %p398
      %s401 = sadd.s32 %s400, 1
      %p404 = scmp.eq.s32.totalorder %s26, 1
      %p405 = scmp.ne.s32.totalorder %s400, %s402
      %p406 = scmp.eq.s32.totalorder %s26, 0
      %p407 = por %p405, %p406
      %p408 = scmp.ne.s32.totalorder %s400, %s402
      %p409 = scmp.eq.s32.totalorder %s31, 1
      %p410 = por %p408, %p409
      %p411 = scmp.ne.s32.totalorder %s402, %s403
      %p412 = scmp.eq.s32.totalorder %s31, 0
      %p413 = por %p411, %p412
      %p414 = scmp.ne.s32.totalorder %s402, %s403
      %p415 = scmp.eq.s32.totalorder %s32, 1
      %p416 = por %p414, %p415
      %p418 = scmp.ne.s32.totalorder %s403, %s417
      %p419 = scmp.eq.s32.totalorder %s32, 0
      %p420 = por %p418, %p419
      %s421 = ssub.s32 %s26, %s33
      %p422 = scmp.eq.s32.totalorder %s421, 0
      %s424 = sadd.s32 %s423, 1
      %s425 = scalar_select %p422, %s423, %s424
      %p428 = pneg %p422
      %p429 = scmp.eq.s32.totalorder %s26, 1
      %p430 = por %p428, %p429
      %p431 = scmp.ne.s32.totalorder %s423, %s426
      %p432 = scmp.eq.s32.totalorder %s26, 0
      %p433 = por %p431, %p432
      %p434 = scmp.ne.s32.totalorder %s423, %s426
      %p435 = scmp.eq.s32.totalorder %s31, 1
      %p436 = por %p434, %p435
      %p437 = scmp.ne.s32.totalorder %s426, %s427
      %p438 = scmp.eq.s32.totalorder %s31, 0
      %p439 = por %p437, %p438
      %p440 = scmp.ne.s32.totalorder %s426, %s427
      %p441 = scmp.eq.s32.totalorder %s32, 1
      %p442 = por %p440, %p441
      %p444 = scmp.ne.s32.totalorder %s427, %s443
      %p445 = scmp.eq.s32.totalorder %s32, 0
      %p446 = por %p444, %p445
      %p447 = scmp.le.s32.totalorder 1, %s26
      %p448 = scmp.lt.s32.totalorder %s26, 3
      %p449 = pnand %p447, %p448
      %p450 = pneg %p449
      // Predicated region
      $region9: #{tpu_custom_call.1} parent=5 // pred_check
        _
      $region10: #{tpu_custom_call.1} parent=5 // pred_check_branch
        %452 = sbr.rel (%p449) target = $region12
      $region11: #{tpu_custom_call.1} parent=5 // pred_region
        %s453 = ssub.s32 %s26, 1
        // Predicated region
        $region13: #{tpu_custom_call.1} parent=11 // pred_check
          %p454 = pneg %p203
        $region14: #{tpu_custom_call.1} parent=11 // pred_check_branch
          %456 = sbr.rel (%p454) target = $region16
        $region15: #{tpu_custom_call.1} parent=11 // pred_region
          _
        $region16: #{tpu_custom_call.1} parent=11 // pred_fallthru
          _
        // Predicated region
        $region17: #{tpu_custom_call.1} parent=11 // pred_check
          %p457 = pneg %p224
        $region18: #{tpu_custom_call.1} parent=11 // pred_check_branch
          %459 = sbr.rel (%p457) target = $region20
        $region19: #{tpu_custom_call.1} parent=11 // pred_region
          _
        $region20: #{tpu_custom_call.1} parent=11 // pred_fallthru
          _
        // Predicated region
        $region21: #{tpu_custom_call.1} parent=11 // pred_check
          %p460 = pneg %p245
        $region22: #{tpu_custom_call.1} parent=11 // pred_check_branch
          %462 = sbr.rel (%p460) target = $region24
        $region23: #{tpu_custom_call.1} parent=11 // pred_region
          _
        $region24: #{tpu_custom_call.1} parent=11 // pred_fallthru
          _
        // Predicated region
        $region25: #{tpu_custom_call.1} parent=11 // pred_check
          %p463 = pneg %p266
        $region26: #{tpu_custom_call.1} parent=11 // pred_check_branch
          %465 = sbr.rel (%p463) target = $region28
        $region27: #{tpu_custom_call.1} parent=11 // pred_region
          _
        $region28: #{tpu_custom_call.1} parent=11 // pred_fallthru
          _
        // Predicated region
        $region29: #{tpu_custom_call.1} parent=11 // pred_check
          %p466 = pneg %p287
        $region30: #{tpu_custom_call.1} parent=11 // pred_check_branch
          %468 = sbr.rel (%p466) target = $region32
        $region31: #{tpu_custom_call.1} parent=11 // pred_region
          _
        $region32: #{tpu_custom_call.1} parent=11 // pred_fallthru
          _
        // Predicated region
        $region33: #{tpu_custom_call.1} parent=11 // pred_check
          %p469 = pneg %p308
        $region34: #{tpu_custom_call.1} parent=11 // pred_check_branch
          %471 = sbr.rel (%p469) target = $region36
        $region35: #{tpu_custom_call.1} parent=11 // pred_region
          _
        $region36: #{tpu_custom_call.1} parent=11 // pred_fallthru
          _
        // Predicated region
        $region37: #{tpu_custom_call.1} parent=11 // pred_check
          %p472 = pneg %p329
        $region38: #{tpu_custom_call.1} parent=11 // pred_check_branch
          %474 = sbr.rel (%p472) target = $region40
        $region39: #{tpu_custom_call.1} parent=11 // pred_region
          _
        $region40: #{tpu_custom_call.1} parent=11 // pred_fallthru
          _
        // Predicated region
        $region41: #{tpu_custom_call.1} parent=11 // pred_check
          %p475 = pneg %p350
        $region42: #{tpu_custom_call.1} parent=11 // pred_check_branch
          %477 = sbr.rel (%p475) target = $region44
        $region43: #{tpu_custom_call.1} parent=11 // pred_region
          _
        $region44: #{tpu_custom_call.1} parent=11 // pred_fallthru
          _
        // Predicated region
        $region45: #{tpu_custom_call.1} parent=11 // pred_check
          %p478 = pneg %p371
        $region46: #{tpu_custom_call.1} parent=11 // pred_check_branch
          %480 = sbr.rel (%p478) target = $region48
        $region47: #{tpu_custom_call.1} parent=11 // pred_region
          _
        $region48: #{tpu_custom_call.1} parent=11 // pred_fallthru
          _
        // Predicated region
        $region49: #{tpu_custom_call.1} parent=11 // pred_check
          %p481 = pneg %p392
        $region50: #{tpu_custom_call.1} parent=11 // pred_check_branch
          %483 = sbr.rel (%p481) target = $region52
        $region51: #{tpu_custom_call.1} parent=11 // pred_region
          _
        $region52: #{tpu_custom_call.1} parent=11 // pred_fallthru
          _
        // Predicated region
        $region53: #{tpu_custom_call.1} parent=11 // pred_check
          %p484 = pneg %p413
        $region54: #{tpu_custom_call.1} parent=11 // pred_check_branch
          %486 = sbr.rel (%p484) target = $region56
        $region55: #{tpu_custom_call.1} parent=11 // pred_region
          _
        $region56: #{tpu_custom_call.1} parent=11 // pred_fallthru
          _
      $region12: #{tpu_custom_call.1} parent=5 // pred_fallthru
        _
      %p487 = scmp.lt.s32.totalorder %s26, 2
      // Predicated region
      $region57: #{tpu_custom_call.1} parent=5 // pred_check
        %p488 = pneg %p487
      $region58: #{tpu_custom_call.1} parent=5 // pred_check_branch
        %490 = sbr.rel (%p488) target = $region60
      $region59: #{tpu_custom_call.1} parent=5 // pred_region
        // Predicated region
        $region61: #{tpu_custom_call.1} parent=59 // pred_check
          %p491 = pneg %p46
        $region62: #{tpu_custom_call.1} parent=59 // pred_check_branch
          %493 = sbr.rel (%p491) target = $region64
        $region63: #{tpu_custom_call.1} parent=59 // pred_region
          %p494 = scmp.lt.s32.totalorder %s26, 1
          %s495 = scalar_select %p494, %s26, 1
          %s496 = smul.addr %s495, 8
          %s497 = scalar_lea.vmem %s0, %s496
        $region64: #{tpu_custom_call.1} parent=59 // pred_fallthru
          _
        // Predicated region
        $region65: #{tpu_custom_call.1} parent=59 // pred_check
          %p498 = pneg %p72
        $region66: #{tpu_custom_call.1} parent=59 // pred_check_branch
          %500 = sbr.rel (%p498) target = $region68
        $region67: #{tpu_custom_call.1} parent=59 // pred_region
          %s501 = smul.u32 8, %s26
          %p502 = scmp.lt.s32.totalorder %s501, 15
          %s503 = scalar_select %p502, %s501, 15
          %s504 = smul.addr %s503, 8
          %s505 = scalar_lea.vmem %s1, %s504
          %s506 = smul.u32 8, %s26
        $region68: #{tpu_custom_call.1} parent=59 // pred_fallthru
          _
        // Predicated region
        $region69: #{tpu_custom_call.1} parent=59 // pred_check
          %p507 = pneg %p98
        $region70: #{tpu_custom_call.1} parent=59 // pred_check_branch
          %509 = sbr.rel (%p507) target = $region72
        $region71: #{tpu_custom_call.1} parent=59 // pred_region
          %s510 = smul.u32 8, %s26
          %p511 = scmp.lt.s32.totalorder %s510, 15
          %s512 = scalar_select %p511, %s510, 15
          %s513 = smul.addr %s512, 8
          %s514 = scalar_lea.vmem %s2, %s513
          %s515 = smul.u32 8, %s26
        $region72: #{tpu_custom_call.1} parent=59 // pred_fallthru
          _
        // Predicated region
        $region73: #{tpu_custom_call.1} parent=59 // pred_check
          %p516 = pneg %p124
        $region74: #{tpu_custom_call.1} parent=59 // pred_check_branch
          %518 = sbr.rel (%p516) target = $region76
        $region75: #{tpu_custom_call.1} parent=59 // pred_region
          %s519 = smul.u32 8, %s26
          %p520 = scmp.lt.s32.totalorder %s519, 15
          %s521 = scalar_select %p520, %s519, 15
          %s522 = smul.addr %s521, 8
          %s523 = smul.addr %s522, 8
          %s524 = scalar_lea.vmem %s3, %s523
          %s525 = smul.u32 8, %s26
        $region76: #{tpu_custom_call.1} parent=59 // pred_fallthru
          _
        // Predicated region
        $region77: #{tpu_custom_call.1} parent=59 // pred_check
          %p526 = pneg %p150
        $region78: #{tpu_custom_call.1} parent=59 // pred_check_branch
          %528 = sbr.rel (%p526) target = $region80
        $region79: #{tpu_custom_call.1} parent=59 // pred_region
          %p529 = scmp.lt.s32.totalorder %s26, 1
          %s530 = scalar_select %p529, %s26, 1
          %s531 = smul.addr %s530, 8
          %s532 = scalar_lea.vmem %s4, %s531
        $region80: #{tpu_custom_call.1} parent=59 // pred_fallthru
          _
        // Predicated region
        $region81: #{tpu_custom_call.1} parent=59 // pred_check
          %p533 = pneg %p176
        $region82: #{tpu_custom_call.1} parent=59 // pred_check_branch
          %535 = sbr.rel (%p533) target = $region84
        $region83: #{tpu_custom_call.1} parent=59 // pred_region
          %p536 = scmp.lt.s32.totalorder %s26, 1
          %s537 = scalar_select %p536, %s26, 1
          %s538 = smul.addr %s537, 8
          %s539 = scalar_lea.vmem %s5, %s538
        $region84: #{tpu_custom_call.1} parent=59 // pred_fallthru
          _
      $region60: #{tpu_custom_call.1} parent=5 // pred_fallthru
        _
      %p540 = scmp.le.s32.totalorder 1, %s26
      %p541 = scmp.lt.s32.totalorder %s26, 3
      %p542 = pnand %p540, %p541
      %p543 = pneg %p542
      // Predicated region
      $region85: #{tpu_custom_call.1} parent=5 // pred_check
        _
      $region86: #{tpu_custom_call.1} parent=5 // pred_check_branch
        %545 = sbr.rel (%p542) target = $region88
      $region87: #{tpu_custom_call.1} parent=5 // pred_region
        %s546 = ssub.s32 %s26, 1
        %p547 = scmp.lt.s32.totalorder %s31, 1
        %s548 = scalar_select %p547, %s31, 1
        %s549 = smul.addr %s548, 8
        %s550 = scalar_lea.vmem %s0, %s549
        %p551 = pneg %p52
        %p552 = pneg %p49
        %s553 = smul.u32 8, %s31
        %p554 = scmp.lt.s32.totalorder %s553, 15
        %s555 = scalar_select %p554, %s553, 15
        %s556 = smul.addr %s555, 8
        %s557 = scalar_lea.vmem %s1, %s556
        %p558 = pneg %p78
        %p559 = pneg %p75
        %s560 = smul.u32 8, %s31
        %p561 = scmp.lt.s32.totalorder %s560, 15
        %s562 = scalar_select %p561, %s560, 15
        %s563 = smul.addr %s562, 8
        %s564 = scalar_lea.vmem %s2, %s563
        %p565 = pneg %p104
        %p566 = pneg %p101
        %s567 = smul.u32 8, %s31
        %p568 = scmp.lt.s32.totalorder %s567, 15
        %s569 = scalar_select %p568, %s567, 15
        %s570 = smul.addr %s569, 8
        %s571 = smul.addr %s570, 8
        %s572 = scalar_lea.vmem %s3, %s571
        %p573 = pneg %p130
        %p574 = pneg %p127
        %p575 = scmp.lt.s32.totalorder %s31, 1
        %s576 = scalar_select %p575, %s31, 1
        %s577 = smul.addr %s576, 8
        %s578 = scalar_lea.vmem %s4, %s577
        %p579 = pneg %p156
        %p580 = pneg %p153
        %p581 = scmp.lt.s32.totalorder %s31, 1
        %s582 = scalar_select %p581, %s31, 1
        %s583 = smul.addr %s582, 8
        %s584 = scalar_lea.vmem %s5, %s583
        %p585 = pneg %p182
        %p586 = pneg %p179
        %p587 = pneg %p203
        %p588 = pneg %p200
        %p589 = pneg %p224
        %p590 = pneg %p221
        %p591 = pneg %p245
        %p592 = pneg %p242
        %p593 = pneg %p266
        %p594 = pneg %p263
        %p595 = pneg %p287
        %p596 = pneg %p284
        %p597 = pneg %p308
        %p598 = pneg %p305
        %p599 = pneg %p329
        %p600 = pneg %p326
        %p601 = pneg %p350
        %p602 = pneg %p347
        %p603 = pneg %p371
        %p604 = pneg %p368
        %p605 = pneg %p392
        %p606 = pneg %p389
        %p607 = pneg %p413
        %p608 = pneg %p410
        %p609 = pneg %p439
        %p610 = pneg %p436
        %s611 = sand.u32 %s426, 1
        %s612 = scalar_lea.sflag [#allocation3], %s611
        %s613 = sand.u32 %s426, 1
        %s614 = smul.addr %s613, 16
        %s615 = scalar_lea.vmem [#allocation2], %s614
        %p616 = scmp.lt.s32.totalorder %s31, 1
        %s617 = scalar_select %p616, %s31, 1
        %s618 = smul.addr %s617, 8
        %s619 = scalar_lea.vmem %s0, %s618
        %s620 = smul.u32 8, %s31
        %p621 = scmp.lt.s32.totalorder %s620, 15
        %s622 = scalar_select %p621, %s620, 15
        %s623 = smul.addr %s622, 8
        %s624 = scalar_lea.vmem %s1, %s623
        %s625 = smul.u32 8, %s31
        %s626 = smul.u32 8, %s31
        %p627 = scmp.lt.s32.totalorder %s626, 15
        %s628 = scalar_select %p627, %s626, 15
        %s629 = smul.addr %s628, 8
        %s630 = scalar_lea.vmem %s2, %s629
        %s631 = smul.u32 8, %s31
        %s632 = smul.u32 8, %s31
        %p633 = scmp.lt.s32.totalorder %s632, 15
        %s634 = scalar_select %p633, %s632, 15
        %s635 = smul.addr %s634, 8
        %s636 = smul.addr %s635, 8
        %s637 = scalar_lea.vmem %s3, %s636
        %s638 = smul.u32 8, %s31
        %p639 = scmp.lt.s32.totalorder %s31, 1
        %s640 = scalar_select %p639, %s31, 1
        %s641 = smul.addr %s640, 8
        %s642 = scalar_lea.vmem %s4, %s641
        %p643 = scmp.lt.s32.totalorder %s31, 1
        %s644 = scalar_select %p643, %s31, 1
        %s645 = smul.addr %s644, 8
        %s646 = scalar_lea.vmem %s5, %s645
        %v647 = vld [vmem:[%s619] sm:$0xff]
        %v648 = vld [vmem:[%s9] sm:$0xff]
        %v649 = vld [vmem:[%s9 + $0x8] sm:$0xff]
        %v650 = vld [vmem:[%s9 + $0x10] sm:$0xff]
        %v651 = vld [vmem:[%s9 + $0x18] sm:$0xff]
        %v652 = vld [vmem:[%s9 + $0x20] sm:$0xff]
        %v653 = vld [vmem:[%s9 + $0x28] sm:$0xff]
        %v654 = vld [vmem:[%s9 + $0x30] sm:$0xff]
        %v655 = vld [vmem:[%s9 + $0x38] sm:$0xff]
        %v656 = vld [vmem:[%s9 + $0x40] sm:$0xff]
        %v657 = vld [vmem:[%s9 + $0x48] sm:$0xff]
        %v658 = vld [vmem:[%s9 + $0x50] sm:$0xff]
        %v659 = vld [vmem:[%s9 + $0x58] sm:$0xff]
        %v660 = vld [vmem:[%s10] sm:$0x1]
        %v662 = vperm.slane %v660, 0
        %vm664 = vcmask 261120
        %v666 = vsel %vm664, %v647, 0
        %v669 = vsel %vm664, %v648, 0
        %v672 = vsel %vm664, %v649, 0
        %v675 = vsel %vm664, %v650, 0
        %v678 = vsel %vm664, %v651, 0
        %v681 = vsel %vm664, %v652, 0
        %v684 = vsel %vm664, %v653, 0
        %v687 = vsel %vm664, %v654, 0
        %v690 = vsel %vm664, %v655, 0
        %v693 = vsel %vm664, %v656, 0
        %v696 = vsel %vm664, %v657, 0
        %v699 = vsel %vm664, %v658, 0
        %v702 = vsel %vm664, %v659, 0
        %704 = vmatpush.xpose.msra.mxu0 0.0
        %705 = vmatpush.xpose.msra.mxu0 0.0
        %706 = vmatpush.xpose.msra.mxu0 0.0
        %707 = vmatpush.xpose.msra.mxu0 0.0
        %708 = vmatpush.xpose.msra.mxu0 %v702
        %709 = vmatpush.xpose.msra.mxu0 %v699
        %710 = vmatpush.xpose.msra.mxu0 %v696
        %711 = vmatpush.xpose.msra.mxu0 %v693
        %712 = vmatpush.xpose.msra.mxu0 %v690
        %713 = vmatpush.xpose.msra.mxu0 %v687
        %714 = vmatpush.xpose.msra.mxu0 %v684
        %715 = vmatpush.xpose.msra.mxu0 %v681
        %716 = vmatpush.xpose.msra.mxu0 %v678
        %717 = vmatpush.xpose.msra.mxu0 %v675
        %718 = vmatpush.xpose.msra.mxu0 %v672
        %719 = vmatpush.xpose.msra.mxu0 %v669
        %720 = vmatmul.f32.gmra.mxu0 %v666
        %v721 = vpop.f32.mrf.mxu0
        %v722 = vadd.f32 %v662, %v721
        %723 = vdwg.mxu0
        %v724 = vld [vmem:[%s11] sm:$0xff]
        %v725 = vld [vmem:[%s11 + $0x8] sm:$0xff]
        %v726 = vld [vmem:[%s11 + $0x10] sm:$0xff]
        %v727 = vld [vmem:[%s11 + $0x18] sm:$0xff]
        %v728 = vld [vmem:[%s12] sm:$0x1]
        %v729 = vld [vmem:[%s624] sm:$0xff]
        %v730 = vld [vmem:[%s624 + $0x8] sm:$0xff]
        %v731 = vld [vmem:[%s624 + $0x10] sm:$0xff]
        %v732 = vld [vmem:[%s624 + $0x18] sm:$0xff]
        %v733 = vld [vmem:[%s624 + $0x20] sm:$0xff]
        %v734 = vld [vmem:[%s624 + $0x28] sm:$0xff]
        %v735 = vld [vmem:[%s624 + $0x30] sm:$0xff]
        %v736 = vld [vmem:[%s624 + $0x38] sm:$0xff]
        %v738 = vsel %vm664, %v729, 0
        %v741 = vsel %vm664, %v730, 0
        %v744 = vsel %vm664, %v731, 0
        %v747 = vsel %vm664, %v732, 0
        %v750 = vsel %vm664, %v733, 0
        %v753 = vsel %vm664, %v734, 0
        %v756 = vsel %vm664, %v735, 0
        %v759 = vsel %vm664, %v736, 0
        %v762 = vsel %vm664, %v724, 0
        %v765 = vsel %vm664, %v725, 0
        %v768 = vsel %vm664, %v726, 0
        %v771 = vsel %vm664, %v727, 0
        %773 = vmatpush.xpose.msra.mxu0 0.0
        %774 = vmatpush.xpose.msra.mxu0 0.0
        %775 = vmatpush.xpose.msra.mxu0 0.0
        %776 = vmatpush.xpose.msra.mxu0 0.0
        %777 = vmatpush.xpose.msra.mxu0 0.0
        %778 = vmatpush.xpose.msra.mxu0 0.0
        %779 = vmatpush.xpose.msra.mxu0 0.0
        %780 = vmatpush.xpose.msra.mxu0 0.0
        %781 = vmatpush.xpose.msra.mxu0 0.0
        %782 = vmatpush.xpose.msra.mxu0 0.0
        %783 = vmatpush.xpose.msra.mxu0 0.0
        %784 = vmatpush.xpose.msra.mxu0 0.0
        %785 = vmatpush.xpose.msra.mxu0 %v771
        %786 = vmatpush.xpose.msra.mxu0 %v768
        %787 = vmatpush.xpose.msra.mxu0 %v765
        %788 = vmatpush.xpose.msra.mxu0 %v762
        %789 = vmatmul.f32.gmra.mxu0 %v738
        %v790 = vpop.f32.mrf.mxu0
        %v791 = vadd.f32 0.0, %v790
        %792 = vmatmul.f32.gmra.mxu0 %v741
        %v793 = vpop.f32.mrf.mxu0
        %v794 = vadd.f32 0.0, %v793
        %795 = vmatmul.f32.gmra.mxu0 %v744
        %v796 = vpop.f32.mrf.mxu0
        %v797 = vadd.f32 0.0, %v796
        %798 = vmatmul.f32.gmra.mxu0 %v747
        %v799 = vpop.f32.mrf.mxu0
        %v800 = vadd.f32 0.0, %v799
        %801 = vmatmul.f32.gmra.mxu0 %v750
        %v802 = vpop.f32.mrf.mxu0
        %v803 = vadd.f32 0.0, %v802
        %804 = vmatmul.f32.gmra.mxu0 %v753
        %v805 = vpop.f32.mrf.mxu0
        %v806 = vadd.f32 0.0, %v805
        %807 = vmatmul.f32.gmra.mxu0 %v756
        %v808 = vpop.f32.mrf.mxu0
        %v809 = vadd.f32 0.0, %v808
        %810 = vmatmul.f32.gmra.mxu0 %v759
        %v811 = vpop.f32.mrf.mxu0
        %v812 = vadd.f32 0.0, %v811
        %813 = vdwg.mxu0
        %v815 = vrot.slane %v722, 1
        %v816 = vrot.slane %v722, 2
        %v817 = vrot.slane %v722, 3
        %v818 = vrot.slane %v722, 4
        %v819 = vrot.slane %v722, 5
        %v820 = vrot.slane %v722, 6
        %v821 = vrot.slane %v722, 7
        %v822 = vperm.slane %v722, 0
        %v823 = vperm.slane %v815, 0
        %v824 = vperm.slane %v816, 0
        %v825 = vperm.slane %v817, 0
        %v826 = vperm.slane %v818, 0
        %v827 = vperm.slane %v819, 0
        %v828 = vperm.slane %v820, 0
        %v829 = vperm.slane %v821, 0
        %v838 = vadd.f32 %v791, %v822
        %v839 = vadd.f32 %v794, %v823
        %v840 = vadd.f32 %v797, %v824
        %v841 = vadd.f32 %v800, %v825
        %v842 = vadd.f32 %v803, %v826
        %v843 = vadd.f32 %v806, %v827
        %v844 = vadd.f32 %v809, %v828
        %v845 = vadd.f32 %v812, %v829
        %v846 = vtanh.pop %v838
        %v847 = vtanh.pop %v839
        %v848 = vtanh.pop %v840
        %v849 = vtanh.pop %v841
        %v850 = vtanh.pop %v842
        %v851 = vtanh.pop %v843
        %v852 = vtanh.pop %v844
        %v853 = vtanh.pop %v845
        %v855 = vperm.slane %v728, 0
        %v857 = vmul.f32 %v846, %v855
        %v858 = vmul.f32 %v847, %v855
        %v859 = vmul.f32 %v848, %v855
        %v860 = vmul.f32 %v849, %v855
        %v861 = vmul.f32 %v850, %v855
        %v862 = vmul.f32 %v851, %v855
        %v863 = vmul.f32 %v852, %v855
        %v864 = vmul.f32 %v853, %v855
        %v865 = vsel %vm664, %v857, 0.0
        %866 = vadd.xlane.f32.xlu0 %v865
        %v867 = vpop.xlane.xlu0 %866
        %v868 = vsel %vm664, %v858, 0.0
        %869 = vadd.xlane.f32.xlu0 %v868
        %v870 = vpop.xlane.xlu0 %869
        %v871 = vsel %vm664, %v859, 0.0
        %872 = vadd.xlane.f32.xlu0 %v871
        %v873 = vpop.xlane.xlu0 %872
        %v874 = vsel %vm664, %v860, 0.0
        %875 = vadd.xlane.f32.xlu0 %v874
        %v876 = vpop.xlane.xlu0 %875
        %v877 = vsel %vm664, %v861, 0.0
        %878 = vadd.xlane.f32.xlu0 %v877
        %v879 = vpop.xlane.xlu0 %878
        %v880 = vsel %vm664, %v862, 0.0
        %881 = vadd.xlane.f32.xlu0 %v880
        %v882 = vpop.xlane.xlu0 %881
        %v883 = vsel %vm664, %v863, 0.0
        %884 = vadd.xlane.f32.xlu0 %v883
        %v885 = vpop.xlane.xlu0 %884
        %v886 = vsel %vm664, %v864, 0.0
        %887 = vadd.xlane.f32.xlu0 %v886
        %v888 = vpop.xlane.xlu0 %887
        %v889 = vld [vmem:[%s13] sm:$0xff]
        %v890 = vld [vmem:[%s13 + $0x8] sm:$0xff]
        %v891 = vld [vmem:[%s13 + $0x10] sm:$0xff]
        %v892 = vld [vmem:[%s13 + $0x18] sm:$0xff]
        %v893 = vld [vmem:[%s14] sm:$0x1]
        %v894 = vld [vmem:[%s637] sm:$0xff]
        %v895 = vld [vmem:[%s637 + $0x8] sm:$0xff]
        %v896 = vld [vmem:[%s637 + $0x10] sm:$0xff]
        %v897 = vld [vmem:[%s637 + $0x18] sm:$0xff]
        %v898 = vld [vmem:[%s637 + $0x20] sm:$0xff]
        %v899 = vld [vmem:[%s637 + $0x28] sm:$0xff]
        %v900 = vld [vmem:[%s637 + $0x30] sm:$0xff]
        %v901 = vld [vmem:[%s637 + $0x38] sm:$0xff]
        %v902 = vld [vmem:[%s637 + $0x40] sm:$0xff]
        %v903 = vld [vmem:[%s637 + $0x48] sm:$0xff]
        %v904 = vld [vmem:[%s637 + $0x50] sm:$0xff]
        %v905 = vld [vmem:[%s637 + $0x58] sm:$0xff]
        %v906 = vld [vmem:[%s637 + $0x60] sm:$0xff]
        %v907 = vld [vmem:[%s637 + $0x68] sm:$0xff]
        %v908 = vld [vmem:[%s637 + $0x70] sm:$0xff]
        %v909 = vld [vmem:[%s637 + $0x78] sm:$0xff]
        %v910 = vld [vmem:[%s637 + $0x80] sm:$0xff]
        %v911 = vld [vmem:[%s637 + $0x88] sm:$0xff]
        %v912 = vld [vmem:[%s637 + $0x90] sm:$0xff]
        %v913 = vld [vmem:[%s637 + $0x98] sm:$0xff]
        %v914 = vld [vmem:[%s637 + $0xa0] sm:$0xff]
        %v915 = vld [vmem:[%s637 + $0xa8] sm:$0xff]
        %v916 = vld [vmem:[%s637 + $0xb0] sm:$0xff]
        %v917 = vld [vmem:[%s637 + $0xb8] sm:$0xff]
        %v918 = vld [vmem:[%s637 + $0xc0] sm:$0xff]
        %v919 = vld [vmem:[%s637 + $0xc8] sm:$0xff]
        %v920 = vld [vmem:[%s637 + $0xd0] sm:$0xff]
        %v921 = vld [vmem:[%s637 + $0xd8] sm:$0xff]
        %v922 = vld [vmem:[%s637 + $0xe0] sm:$0xff]
        %v923 = vld [vmem:[%s637 + $0xe8] sm:$0xff]
        %v924 = vld [vmem:[%s637 + $0xf0] sm:$0xff]
        %v925 = vld [vmem:[%s637 + $0xf8] sm:$0xff]
        %v926 = vld [vmem:[%s637 + $0x100] sm:$0xff]
        %v927 = vld [vmem:[%s637 + $0x108] sm:$0xff]
        %v928 = vld [vmem:[%s637 + $0x110] sm:$0xff]
        %v929 = vld [vmem:[%s637 + $0x118] sm:$0xff]
        %v930 = vld [vmem:[%s637 + $0x120] sm:$0xff]
        %v931 = vld [vmem:[%s637 + $0x128] sm:$0xff]
        %v932 = vld [vmem:[%s637 + $0x130] sm:$0xff]
        %v933 = vld [vmem:[%s637 + $0x138] sm:$0xff]
        %v934 = vld [vmem:[%s637 + $0x140] sm:$0xff]
        %v935 = vld [vmem:[%s637 + $0x148] sm:$0xff]
        %v936 = vld [vmem:[%s637 + $0x150] sm:$0xff]
        %v937 = vld [vmem:[%s637 + $0x158] sm:$0xff]
        %v938 = vld [vmem:[%s637 + $0x160] sm:$0xff]
        %v939 = vld [vmem:[%s637 + $0x168] sm:$0xff]
        %v940 = vld [vmem:[%s637 + $0x170] sm:$0xff]
        %v941 = vld [vmem:[%s637 + $0x178] sm:$0xff]
        %v942 = vld [vmem:[%s637 + $0x180] sm:$0xff]
        %v943 = vld [vmem:[%s637 + $0x188] sm:$0xff]
        %v944 = vld [vmem:[%s637 + $0x190] sm:$0xff]
        %v945 = vld [vmem:[%s637 + $0x198] sm:$0xff]
        %v946 = vld [vmem:[%s637 + $0x1a0] sm:$0xff]
        %v947 = vld [vmem:[%s637 + $0x1a8] sm:$0xff]
        %v948 = vld [vmem:[%s637 + $0x1b0] sm:$0xff]
        %v949 = vld [vmem:[%s637 + $0x1b8] sm:$0xff]
        %v950 = vld [vmem:[%s637 + $0x1c0] sm:$0xff]
        %v951 = vld [vmem:[%s637 + $0x1c8] sm:$0xff]
        %v952 = vld [vmem:[%s637 + $0x1d0] sm:$0xff]
        %v953 = vld [vmem:[%s637 + $0x1d8] sm:$0xff]
        %v954 = vld [vmem:[%s637 + $0x1e0] sm:$0xff]
        %v955 = vld [vmem:[%s637 + $0x1e8] sm:$0xff]
        %v956 = vld [vmem:[%s637 + $0x1f0] sm:$0xff]
        %v957 = vld [vmem:[%s637 + $0x1f8] sm:$0xff]
        %v959 = vsel %vm664, %v894, 0
        %v962 = vsel %vm664, %v895, 0
        %v965 = vsel %vm664, %v896, 0
        %v968 = vsel %vm664, %v897, 0
        %v971 = vsel %vm664, %v898, 0
        %v974 = vsel %vm664, %v899, 0
        %v977 = vsel %vm664, %v900, 0
        %v980 = vsel %vm664, %v901, 0
        %v983 = vsel %vm664, %v902, 0
        %v986 = vsel %vm664, %v903, 0
        %v989 = vsel %vm664, %v904, 0
        %v992 = vsel %vm664, %v905, 0
        %v995 = vsel %vm664, %v906, 0
        %v998 = vsel %vm664, %v907, 0
        %v1001 = vsel %vm664, %v908, 0
        %v1004 = vsel %vm664, %v909, 0
        %v1007 = vsel %vm664, %v910, 0
        %v1010 = vsel %vm664, %v911, 0
        %v1013 = vsel %vm664, %v912, 0
        %v1016 = vsel %vm664, %v913, 0
        %v1019 = vsel %vm664, %v914, 0
        %v1022 = vsel %vm664, %v915, 0
        %v1025 = vsel %vm664, %v916, 0
        %v1028 = vsel %vm664, %v917, 0
        %v1031 = vsel %vm664, %v918, 0
        %v1034 = vsel %vm664, %v919, 0
        %v1037 = vsel %vm664, %v920, 0
        %v1040 = vsel %vm664, %v921, 0
        %v1043 = vsel %vm664, %v922, 0
        %v1046 = vsel %vm664, %v923, 0
        %v1049 = vsel %vm664, %v924, 0
        %v1052 = vsel %vm664, %v925, 0
        %v1055 = vsel %vm664, %v926, 0
        %v1058 = vsel %vm664, %v927, 0
        %v1061 = vsel %vm664, %v928, 0
        %v1064 = vsel %vm664, %v929, 0
        %v1067 = vsel %vm664, %v930, 0
        %v1070 = vsel %vm664, %v931, 0
        %v1073 = vsel %vm664, %v932, 0
        %v1076 = vsel %vm664, %v933, 0
        %v1079 = vsel %vm664, %v934, 0
        %v1082 = vsel %vm664, %v935, 0
        %v1085 = vsel %vm664, %v936, 0
        %v1088 = vsel %vm664, %v937, 0
        %v1091 = vsel %vm664, %v938, 0
        %v1094 = vsel %vm664, %v939, 0
        %v1097 = vsel %vm664, %v940, 0
        %v1100 = vsel %vm664, %v941, 0
        %v1103 = vsel %vm664, %v942, 0
        %v1106 = vsel %vm664, %v943, 0
        %v1109 = vsel %vm664, %v944, 0
        %v1112 = vsel %vm664, %v945, 0
        %v1115 = vsel %vm664, %v946, 0
        %v1118 = vsel %vm664, %v947, 0
        %v1121 = vsel %vm664, %v948, 0
        %v1124 = vsel %vm664, %v949, 0
        %v1127 = vsel %vm664, %v950, 0
        %v1130 = vsel %vm664, %v951, 0
        %v1133 = vsel %vm664, %v952, 0
        %v1136 = vsel %vm664, %v953, 0
        %v1139 = vsel %vm664, %v954, 0
        %v1142 = vsel %vm664, %v955, 0
        %v1145 = vsel %vm664, %v956, 0
        %v1148 = vsel %vm664, %v957, 0
        %v1151 = vsel %vm664, %v889, 0
        %v1154 = vsel %vm664, %v890, 0
        %v1157 = vsel %vm664, %v891, 0
        %v1160 = vsel %vm664, %v892, 0
        %1162 = vmatpush.xpose.msra.mxu0 0.0
        %1163 = vmatpush.xpose.msra.mxu0 0.0
        %1164 = vmatpush.xpose.msra.mxu0 0.0
        %1165 = vmatpush.xpose.msra.mxu0 0.0
        %1166 = vmatpush.xpose.msra.mxu0 0.0
        %1167 = vmatpush.xpose.msra.mxu0 0.0
        %1168 = vmatpush.xpose.msra.mxu0 0.0
        %1169 = vmatpush.xpose.msra.mxu0 0.0
        %1170 = vmatpush.xpose.msra.mxu0 0.0
        %1171 = vmatpush.xpose.msra.mxu0 0.0
        %1172 = vmatpush.xpose.msra.mxu0 0.0
        %1173 = vmatpush.xpose.msra.mxu0 0.0
        %1174 = vmatpush.xpose.msra.mxu0 %v1160
        %1175 = vmatpush.xpose.msra.mxu0 %v1157
        %1176 = vmatpush.xpose.msra.mxu0 %v1154
        %1177 = vmatpush.xpose.msra.mxu0 %v1151
        %1178 = vmatmul.f32.gmra.mxu0 %v959
        %v1179 = vpop.f32.mrf.mxu0
        %v1180 = vadd.f32 0.0, %v1179
        %1181 = vmatmul.f32.gmra.mxu0 %v962
        %v1182 = vpop.f32.mrf.mxu0
        %v1183 = vadd.f32 0.0, %v1182
        %1184 = vmatmul.f32.gmra.mxu0 %v965
        %v1185 = vpop.f32.mrf.mxu0
        %v1186 = vadd.f32 0.0, %v1185
        %1187 = vmatmul.f32.gmra.mxu0 %v968
        %v1188 = vpop.f32.mrf.mxu0
        %v1189 = vadd.f32 0.0, %v1188
        %1190 = vmatmul.f32.gmra.mxu0 %v971
        %v1191 = vpop.f32.mrf.mxu0
        %v1192 = vadd.f32 0.0, %v1191
        %1193 = vmatmul.f32.gmra.mxu0 %v974
        %v1194 = vpop.f32.mrf.mxu0
        %v1195 = vadd.f32 0.0, %v1194
        %1196 = vmatmul.f32.gmra.mxu0 %v977
        %v1197 = vpop.f32.mrf.mxu0
        %v1198 = vadd.f32 0.0, %v1197
        %1199 = vmatmul.f32.gmra.mxu0 %v980
        %v1200 = vpop.f32.mrf.mxu0
        %v1201 = vadd.f32 0.0, %v1200
        %1202 = vmatmul.f32.gmra.mxu0 %v983
        %v1203 = vpop.f32.mrf.mxu0
        %v1204 = vadd.f32 0.0, %v1203
        %1205 = vmatmul.f32.gmra.mxu0 %v986
        %v1206 = vpop.f32.mrf.mxu0
        %v1207 = vadd.f32 0.0, %v1206
        %1208 = vmatmul.f32.gmra.mxu0 %v989
        %v1209 = vpop.f32.mrf.mxu0
        %v1210 = vadd.f32 0.0, %v1209
        %1211 = vmatmul.f32.gmra.mxu0 %v992
        %v1212 = vpop.f32.mrf.mxu0
        %v1213 = vadd.f32 0.0, %v1212
        %1214 = vmatmul.f32.gmra.mxu0 %v995
        %v1215 = vpop.f32.mrf.mxu0
        %v1216 = vadd.f32 0.0, %v1215
        %1217 = vmatmul.f32.gmra.mxu0 %v998
        %v1218 = vpop.f32.mrf.mxu0
        %v1219 = vadd.f32 0.0, %v1218
        %1220 = vmatmul.f32.gmra.mxu0 %v1001
        %v1221 = vpop.f32.mrf.mxu0
        %v1222 = vadd.f32 0.0, %v1221
        %1223 = vmatmul.f32.gmra.mxu0 %v1004
        %v1224 = vpop.f32.mrf.mxu0
        %v1225 = vadd.f32 0.0, %v1224
        %1226 = vmatmul.f32.gmra.mxu0 %v1007
        %v1227 = vpop.f32.mrf.mxu0
        %v1228 = vadd.f32 0.0, %v1227
        %1229 = vmatmul.f32.gmra.mxu0 %v1010
        %v1230 = vpop.f32.mrf.mxu0
        %v1231 = vadd.f32 0.0, %v1230
        %1232 = vmatmul.f32.gmra.mxu0 %v1013
        %v1233 = vpop.f32.mrf.mxu0
        %v1234 = vadd.f32 0.0, %v1233
        %1235 = vmatmul.f32.gmra.mxu0 %v1016
        %v1236 = vpop.f32.mrf.mxu0
        %v1237 = vadd.f32 0.0, %v1236
        %1238 = vmatmul.f32.gmra.mxu0 %v1019
        %v1239 = vpop.f32.mrf.mxu0
        %v1240 = vadd.f32 0.0, %v1239
        %1241 = vmatmul.f32.gmra.mxu0 %v1022
        %v1242 = vpop.f32.mrf.mxu0
        %v1243 = vadd.f32 0.0, %v1242
        %1244 = vmatmul.f32.gmra.mxu0 %v1025
        %v1245 = vpop.f32.mrf.mxu0
        %v1246 = vadd.f32 0.0, %v1245
        %1247 = vmatmul.f32.gmra.mxu0 %v1028
        %v1248 = vpop.f32.mrf.mxu0
        %v1249 = vadd.f32 0.0, %v1248
        %1250 = vmatmul.f32.gmra.mxu0 %v1031
        %v1251 = vpop.f32.mrf.mxu0
        %v1252 = vadd.f32 0.0, %v1251
        %1253 = vmatmul.f32.gmra.mxu0 %v1034
        %v1254 = vpop.f32.mrf.mxu0
        %v1255 = vadd.f32 0.0, %v1254
        %1256 = vmatmul.f32.gmra.mxu0 %v1037
        %v1257 = vpop.f32.mrf.mxu0
        %v1258 = vadd.f32 0.0, %v1257
        %1259 = vmatmul.f32.gmra.mxu0 %v1040
        %v1260 = vpop.f32.mrf.mxu0
        %v1261 = vadd.f32 0.0, %v1260
        %1262 = vmatmul.f32.gmra.mxu0 %v1043
        %v1263 = vpop.f32.mrf.mxu0
        %v1264 = vadd.f32 0.0, %v1263
        %1265 = vmatmul.f32.gmra.mxu0 %v1046
        %v1266 = vpop.f32.mrf.mxu0
        %v1267 = vadd.f32 0.0, %v1266
        %1268 = vmatmul.f32.gmra.mxu0 %v1049
        %v1269 = vpop.f32.mrf.mxu0
        %v1270 = vadd.f32 0.0, %v1269
        %1271 = vmatmul.f32.gmra.mxu0 %v1052
        %v1272 = vpop.f32.mrf.mxu0
        %v1273 = vadd.f32 0.0, %v1272
        %1274 = vmatmul.f32.gmra.mxu0 %v1055
        %v1275 = vpop.f32.mrf.mxu0
        %v1276 = vadd.f32 0.0, %v1275
        %1277 = vmatmul.f32.gmra.mxu0 %v1058
        %v1278 = vpop.f32.mrf.mxu0
        %v1279 = vadd.f32 0.0, %v1278
        %1280 = vmatmul.f32.gmra.mxu0 %v1061
        %v1281 = vpop.f32.mrf.mxu0
        %v1282 = vadd.f32 0.0, %v1281
        %1283 = vmatmul.f32.gmra.mxu0 %v1064
        %v1284 = vpop.f32.mrf.mxu0
        %v1285 = vadd.f32 0.0, %v1284
        %1286 = vmatmul.f32.gmra.mxu0 %v1067
        %v1287 = vpop.f32.mrf.mxu0
        %v1288 = vadd.f32 0.0, %v1287
        %1289 = vmatmul.f32.gmra.mxu0 %v1070
        %v1290 = vpop.f32.mrf.mxu0
        %v1291 = vadd.f32 0.0, %v1290
        %1292 = vmatmul.f32.gmra.mxu0 %v1073
        %v1293 = vpop.f32.mrf.mxu0
        %v1294 = vadd.f32 0.0, %v1293
        %1295 = vmatmul.f32.gmra.mxu0 %v1076
        %v1296 = vpop.f32.mrf.mxu0
        %v1297 = vadd.f32 0.0, %v1296
        %1298 = vmatmul.f32.gmra.mxu0 %v1079
        %v1299 = vpop.f32.mrf.mxu0
        %v1300 = vadd.f32 0.0, %v1299
        %1301 = vmatmul.f32.gmra.mxu0 %v1082
        %v1302 = vpop.f32.mrf.mxu0
        %v1303 = vadd.f32 0.0, %v1302
        %1304 = vmatmul.f32.gmra.mxu0 %v1085
        %v1305 = vpop.f32.mrf.mxu0
        %v1306 = vadd.f32 0.0, %v1305
        %1307 = vmatmul.f32.gmra.mxu0 %v1088
        %v1308 = vpop.f32.mrf.mxu0
        %v1309 = vadd.f32 0.0, %v1308
        %1310 = vmatmul.f32.gmra.mxu0 %v1091
        %v1311 = vpop.f32.mrf.mxu0
        %v1312 = vadd.f32 0.0, %v1311
        %1313 = vmatmul.f32.gmra.mxu0 %v1094
        %v1314 = vpop.f32.mrf.mxu0
        %v1315 = vadd.f32 0.0, %v1314
        %1316 = vmatmul.f32.gmra.mxu0 %v1097
        %v1317 = vpop.f32.mrf.mxu0
        %v1318 = vadd.f32 0.0, %v1317
        %1319 = vmatmul.f32.gmra.mxu0 %v1100
        %v1320 = vpop.f32.mrf.mxu0
        %v1321 = vadd.f32 0.0, %v1320
        %1322 = vmatmul.f32.gmra.mxu0 %v1103
        %v1323 = vpop.f32.mrf.mxu0
        %v1324 = vadd.f32 0.0, %v1323
        %1325 = vmatmul.f32.gmra.mxu0 %v1106
        %v1326 = vpop.f32.mrf.mxu0
        %v1327 = vadd.f32 0.0, %v1326
        %1328 = vmatmul.f32.gmra.mxu0 %v1109
        %v1329 = vpop.f32.mrf.mxu0
        %v1330 = vadd.f32 0.0, %v1329
        %1331 = vmatmul.f32.gmra.mxu0 %v1112
        %v1332 = vpop.f32.mrf.mxu0
        %v1333 = vadd.f32 0.0, %v1332
        %1334 = vmatmul.f32.gmra.mxu0 %v1115
        %v1335 = vpop.f32.mrf.mxu0
        %v1336 = vadd.f32 0.0, %v1335
        %1337 = vmatmul.f32.gmra.mxu0 %v1118
        %v1338 = vpop.f32.mrf.mxu0
        %v1339 = vadd.f32 0.0, %v1338
        %1340 = vmatmul.f32.gmra.mxu0 %v1121
        %v1341 = vpop.f32.mrf.mxu0
        %v1342 = vadd.f32 0.0, %v1341
        %1343 = vmatmul.f32.gmra.mxu0 %v1124
        %v1344 = vpop.f32.mrf.mxu0
        %v1345 = vadd.f32 0.0, %v1344
        %1346 = vmatmul.f32.gmra.mxu0 %v1127
        %v1347 = vpop.f32.mrf.mxu0
        %v1348 = vadd.f32 0.0, %v1347
        %1349 = vmatmul.f32.gmra.mxu0 %v1130
        %v1350 = vpop.f32.mrf.mxu0
        %v1351 = vadd.f32 0.0, %v1350
        %1352 = vmatmul.f32.gmra.mxu0 %v1133
        %v1353 = vpop.f32.mrf.mxu0
        %v1354 = vadd.f32 0.0, %v1353
        %1355 = vmatmul.f32.gmra.mxu0 %v1136
        %v1356 = vpop.f32.mrf.mxu0
        %v1357 = vadd.f32 0.0, %v1356
        %1358 = vmatmul.f32.gmra.mxu0 %v1139
        %v1359 = vpop.f32.mrf.mxu0
        %v1360 = vadd.f32 0.0, %v1359
        %1361 = vmatmul.f32.gmra.mxu0 %v1142
        %v1362 = vpop.f32.mrf.mxu0
        %v1363 = vadd.f32 0.0, %v1362
        %1364 = vmatmul.f32.gmra.mxu0 %v1145
        %v1365 = vpop.f32.mrf.mxu0
        %v1366 = vadd.f32 0.0, %v1365
        %1367 = vmatmul.f32.gmra.mxu0 %v1148
        %v1368 = vpop.f32.mrf.mxu0
        %v1369 = vadd.f32 0.0, %v1368
        %1370 = vdwg.mxu0
        %1371 = vrot.lane.b32.xlu0 %v822, 96
        %v1372 = vpop.permute.xlu0 %1371
        %1373 = vrot.lane.b32.xlu0 %v823, 96
        %v1374 = vpop.permute.xlu0 %1373
        %1375 = vrot.lane.b32.xlu0 %v824, 96
        %v1376 = vpop.permute.xlu0 %1375
        %1377 = vrot.lane.b32.xlu0 %v825, 96
        %v1378 = vpop.permute.xlu0 %1377
        %1379 = vrot.lane.b32.xlu0 %v826, 96
        %v1380 = vpop.permute.xlu0 %1379
        %1381 = vrot.lane.b32.xlu0 %v827, 96
        %v1382 = vpop.permute.xlu0 %1381
        %1383 = vrot.lane.b32.xlu0 %v828, 96
        %v1384 = vpop.permute.xlu0 %1383
        %1385 = vrot.lane.b32.xlu0 %v829, 96
        %v1386 = vpop.permute.xlu0 %1385
        %v1395 = vadd.f32 %v1180, %v1372
        %v1396 = vadd.f32 %v1183, %v1372
        %v1397 = vadd.f32 %v1186, %v1372
        %v1398 = vadd.f32 %v1189, %v1372
        %v1399 = vadd.f32 %v1192, %v1372
        %v1400 = vadd.f32 %v1195, %v1372
        %v1401 = vadd.f32 %v1198, %v1372
        %v1402 = vadd.f32 %v1201, %v1372
        %v1403 = vadd.f32 %v1204, %v1374
        %v1404 = vadd.f32 %v1207, %v1374
        %v1405 = vadd.f32 %v1210, %v1374
        %v1406 = vadd.f32 %v1213, %v1374
        %v1407 = vadd.f32 %v1216, %v1374
        %v1408 = vadd.f32 %v1219, %v1374
        %v1409 = vadd.f32 %v1222, %v1374
        %v1410 = vadd.f32 %v1225, %v1374
        %v1411 = vadd.f32 %v1228, %v1376
        %v1412 = vadd.f32 %v1231, %v1376
        %v1413 = vadd.f32 %v1234, %v1376
        %v1414 = vadd.f32 %v1237, %v1376
        %v1415 = vadd.f32 %v1240, %v1376
        %v1416 = vadd.f32 %v1243, %v1376
        %v1417 = vadd.f32 %v1246, %v1376
        %v1418 = vadd.f32 %v1249, %v1376
        %v1419 = vadd.f32 %v1252, %v1378
        %v1420 = vadd.f32 %v1255, %v1378
        %v1421 = vadd.f32 %v1258, %v1378
        %v1422 = vadd.f32 %v1261, %v1378
        %v1423 = vadd.f32 %v1264, %v1378
        %v1424 = vadd.f32 %v1267, %v1378
        %v1425 = vadd.f32 %v1270, %v1378
        %v1426 = vadd.f32 %v1273, %v1378
        %v1427 = vadd.f32 %v1276, %v1380
        %v1428 = vadd.f32 %v1279, %v1380
        %v1429 = vadd.f32 %v1282, %v1380
        %v1430 = vadd.f32 %v1285, %v1380
        %v1431 = vadd.f32 %v1288, %v1380
        %v1432 = vadd.f32 %v1291, %v1380
        %v1433 = vadd.f32 %v1294, %v1380
        %v1434 = vadd.f32 %v1297, %v1380
        %v1435 = vadd.f32 %v1300, %v1382
        %v1436 = vadd.f32 %v1303, %v1382
        %v1437 = vadd.f32 %v1306, %v1382
        %v1438 = vadd.f32 %v1309, %v1382
        %v1439 = vadd.f32 %v1312, %v1382
        %v1440 = vadd.f32 %v1315, %v1382
        %v1441 = vadd.f32 %v1318, %v1382
        %v1442 = vadd.f32 %v1321, %v1382
        %v1443 = vadd.f32 %v1324, %v1384
        %v1444 = vadd.f32 %v1327, %v1384
        %v1445 = vadd.f32 %v1330, %v1384
        %v1446 = vadd.f32 %v1333, %v1384
        %v1447 = vadd.f32 %v1336, %v1384
        %v1448 = vadd.f32 %v1339, %v1384
        %v1449 = vadd.f32 %v1342, %v1384
        %v1450 = vadd.f32 %v1345, %v1384
        %v1451 = vadd.f32 %v1348, %v1386
        %v1452 = vadd.f32 %v1351, %v1386
        %v1453 = vadd.f32 %v1354, %v1386
        %v1454 = vadd.f32 %v1357, %v1386
        %v1455 = vadd.f32 %v1360, %v1386
        %v1456 = vadd.f32 %v1363, %v1386
        %v1457 = vadd.f32 %v1366, %v1386
        %v1458 = vadd.f32 %v1369, %v1386
        %v1459 = vtanh.pop %v1395
        %v1460 = vtanh.pop %v1396
        %v1461 = vtanh.pop %v1397
        %v1462 = vtanh.pop %v1398
        %v1463 = vtanh.pop %v1399
        %v1464 = vtanh.pop %v1400
        %v1465 = vtanh.pop %v1401
        %v1466 = vtanh.pop %v1402
        %v1467 = vtanh.pop %v1403
        %v1468 = vtanh.pop %v1404
        %v1469 = vtanh.pop %v1405
        %v1470 = vtanh.pop %v1406
        %v1471 = vtanh.pop %v1407
        %v1472 = vtanh.pop %v1408
        %v1473 = vtanh.pop %v1409
        %v1474 = vtanh.pop %v1410
        %v1475 = vtanh.pop %v1411
        %v1476 = vtanh.pop %v1412
        %v1477 = vtanh.pop %v1413
        %v1478 = vtanh.pop %v1414
        %v1479 = vtanh.pop %v1415
        %v1480 = vtanh.pop %v1416
        %v1481 = vtanh.pop %v1417
        %v1482 = vtanh.pop %v1418
        %v1483 = vtanh.pop %v1419
        %v1484 = vtanh.pop %v1420
        %v1485 = vtanh.pop %v1421
        %v1486 = vtanh.pop %v1422
        %v1487 = vtanh.pop %v1423
        %v1488 = vtanh.pop %v1424
        %v1489 = vtanh.pop %v1425
        %v1490 = vtanh.pop %v1426
        %v1491 = vtanh.pop %v1427
        %v1492 = vtanh.pop %v1428
        %v1493 = vtanh.pop %v1429
        %v1494 = vtanh.pop %v1430
        %v1495 = vtanh.pop %v1431
        %v1496 = vtanh.pop %v1432
        %v1497 = vtanh.pop %v1433
        %v1498 = vtanh.pop %v1434
        %v1499 = vtanh.pop %v1435
        %v1500 = vtanh.pop %v1436
        %v1501 = vtanh.pop %v1437
        %v1502 = vtanh.pop %v1438
        %v1503 = vtanh.pop %v1439
        %v1504 = vtanh.pop %v1440
        %v1505 = vtanh.pop %v1441
        %v1506 = vtanh.pop %v1442
        %v1507 = vtanh.pop %v1443
        %v1508 = vtanh.pop %v1444
        %v1509 = vtanh.pop %v1445
        %v1510 = vtanh.pop %v1446
        %v1511 = vtanh.pop %v1447
        %v1512 = vtanh.pop %v1448
        %v1513 = vtanh.pop %v1449
        %v1514 = vtanh.pop %v1450
        %v1515 = vtanh.pop %v1451
        %v1516 = vtanh.pop %v1452
        %v1517 = vtanh.pop %v1453
        %v1518 = vtanh.pop %v1454
        %v1519 = vtanh.pop %v1455
        %v1520 = vtanh.pop %v1456
        %v1521 = vtanh.pop %v1457
        %v1522 = vtanh.pop %v1458
        %v1524 = vperm.slane %v893, 0
        %v1526 = vmul.f32 %v1459, %v1524
        %v1527 = vmul.f32 %v1460, %v1524
        %v1528 = vmul.f32 %v1461, %v1524
        %v1529 = vmul.f32 %v1462, %v1524
        %v1530 = vmul.f32 %v1463, %v1524
        %v1531 = vmul.f32 %v1464, %v1524
        %v1532 = vmul.f32 %v1465, %v1524
        %v1533 = vmul.f32 %v1466, %v1524
        %v1534 = vmul.f32 %v1467, %v1524
        %v1535 = vmul.f32 %v1468, %v1524
        %v1536 = vmul.f32 %v1469, %v1524
        %v1537 = vmul.f32 %v1470, %v1524
        %v1538 = vmul.f32 %v1471, %v1524
        %v1539 = vmul.f32 %v1472, %v1524
        %v1540 = vmul.f32 %v1473, %v1524
        %v1541 = vmul.f32 %v1474, %v1524
        %v1542 = vmul.f32 %v1475, %v1524
        %v1543 = vmul.f32 %v1476, %v1524
        %v1544 = vmul.f32 %v1477, %v1524
        %v1545 = vmul.f32 %v1478, %v1524
        %v1546 = vmul.f32 %v1479, %v1524
        %v1547 = vmul.f32 %v1480, %v1524
        %v1548 = vmul.f32 %v1481, %v1524
        %v1549 = vmul.f32 %v1482, %v1524
        %v1550 = vmul.f32 %v1483, %v1524
        %v1551 = vmul.f32 %v1484, %v1524
        %v1552 = vmul.f32 %v1485, %v1524
        %v1553 = vmul.f32 %v1486, %v1524
        %v1554 = vmul.f32 %v1487, %v1524
        %v1555 = vmul.f32 %v1488, %v1524
        %v1556 = vmul.f32 %v1489, %v1524
        %v1557 = vmul.f32 %v1490, %v1524
        %v1558 = vmul.f32 %v1491, %v1524
        %v1559 = vmul.f32 %v1492, %v1524
        %v1560 = vmul.f32 %v1493, %v1524
        %v1561 = vmul.f32 %v1494, %v1524
        %v1562 = vmul.f32 %v1495, %v1524
        %v1563 = vmul.f32 %v1496, %v1524
        %v1564 = vmul.f32 %v1497, %v1524
        %v1565 = vmul.f32 %v1498, %v1524
        %v1566 = vmul.f32 %v1499, %v1524
        %v1567 = vmul.f32 %v1500, %v1524
        %v1568 = vmul.f32 %v1501, %v1524
        %v1569 = vmul.f32 %v1502, %v1524
        %v1570 = vmul.f32 %v1503, %v1524
        %v1571 = vmul.f32 %v1504, %v1524
        %v1572 = vmul.f32 %v1505, %v1524
        %v1573 = vmul.f32 %v1506, %v1524
        %v1574 = vmul.f32 %v1507, %v1524
        %v1575 = vmul.f32 %v1508, %v1524
        %v1576 = vmul.f32 %v1509, %v1524
        %v1577 = vmul.f32 %v1510, %v1524
        %v1578 = vmul.f32 %v1511, %v1524
        %v1579 = vmul.f32 %v1512, %v1524
        %v1580 = vmul.f32 %v1513, %v1524
        %v1581 = vmul.f32 %v1514, %v1524
        %v1582 = vmul.f32 %v1515, %v1524
        %v1583 = vmul.f32 %v1516, %v1524
        %v1584 = vmul.f32 %v1517, %v1524
        %v1585 = vmul.f32 %v1518, %v1524
        %v1586 = vmul.f32 %v1519, %v1524
        %v1587 = vmul.f32 %v1520, %v1524
        %v1588 = vmul.f32 %v1521, %v1524
        %v1589 = vmul.f32 %v1522, %v1524
        %v1590 = vsel %vm664, %v1526, 0.0
        %1591 = vadd.xlane.f32.xlu0 %v1590
        %v1592 = vpop.xlane.xlu0 %1591
        %v1593 = vsel %vm664, %v1527, 0.0
        %1594 = vadd.xlane.f32.xlu0 %v1593
        %v1595 = vpop.xlane.xlu0 %1594
        %v1596 = vsel %vm664, %v1528, 0.0
        %1597 = vadd.xlane.f32.xlu0 %v1596
        %v1598 = vpop.xlane.xlu0 %1597
        %v1599 = vsel %vm664, %v1529, 0.0
        %1600 = vadd.xlane.f32.xlu0 %v1599
        %v1601 = vpop.xlane.xlu0 %1600
        %v1602 = vsel %vm664, %v1530, 0.0
        %1603 = vadd.xlane.f32.xlu0 %v1602
        %v1604 = vpop.xlane.xlu0 %1603
        %v1605 = vsel %vm664, %v1531, 0.0
        %1606 = vadd.xlane.f32.xlu0 %v1605
        %v1607 = vpop.xlane.xlu0 %1606
        %v1608 = vsel %vm664, %v1532, 0.0
        %1609 = vadd.xlane.f32.xlu0 %v1608
        %v1610 = vpop.xlane.xlu0 %1609
        %v1611 = vsel %vm664, %v1533, 0.0
        %1612 = vadd.xlane.f32.xlu0 %v1611
        %v1613 = vpop.xlane.xlu0 %1612
        %v1614 = vsel %vm664, %v1534, 0.0
        %1615 = vadd.xlane.f32.xlu0 %v1614
        %v1616 = vpop.xlane.xlu0 %1615
        %v1617 = vsel %vm664, %v1535, 0.0
        %1618 = vadd.xlane.f32.xlu0 %v1617
        %v1619 = vpop.xlane.xlu0 %1618
        %v1620 = vsel %vm664, %v1536, 0.0
        %1621 = vadd.xlane.f32.xlu0 %v1620
        %v1622 = vpop.xlane.xlu0 %1621
        %v1623 = vsel %vm664, %v1537, 0.0
        %1624 = vadd.xlane.f32.xlu0 %v1623
        %v1625 = vpop.xlane.xlu0 %1624
        %v1626 = vsel %vm664, %v1538, 0.0
        %1627 = vadd.xlane.f32.xlu0 %v1626
        %v1628 = vpop.xlane.xlu0 %1627
        %v1629 = vsel %vm664, %v1539, 0.0
        %1630 = vadd.xlane.f32.xlu0 %v1629
        %v1631 = vpop.xlane.xlu0 %1630
        %v1632 = vsel %vm664, %v1540, 0.0
        %1633 = vadd.xlane.f32.xlu0 %v1632
        %v1634 = vpop.xlane.xlu0 %1633
        %v1635 = vsel %vm664, %v1541, 0.0
        %1636 = vadd.xlane.f32.xlu0 %v1635
        %v1637 = vpop.xlane.xlu0 %1636
        %v1638 = vsel %vm664, %v1542, 0.0
        %1639 = vadd.xlane.f32.xlu0 %v1638
        %v1640 = vpop.xlane.xlu0 %1639
        %v1641 = vsel %vm664, %v1543, 0.0
        %1642 = vadd.xlane.f32.xlu0 %v1641
        %v1643 = vpop.xlane.xlu0 %1642
        %v1644 = vsel %vm664, %v1544, 0.0
        %1645 = vadd.xlane.f32.xlu0 %v1644
        %v1646 = vpop.xlane.xlu0 %1645
        %v1647 = vsel %vm664, %v1545, 0.0
        %1648 = vadd.xlane.f32.xlu0 %v1647
        %v1649 = vpop.xlane.xlu0 %1648
        %v1650 = vsel %vm664, %v1546, 0.0
        %1651 = vadd.xlane.f32.xlu0 %v1650
        %v1652 = vpop.xlane.xlu0 %1651
        %v1653 = vsel %vm664, %v1547, 0.0
        %1654 = vadd.xlane.f32.xlu0 %v1653
        %v1655 = vpop.xlane.xlu0 %1654
        %v1656 = vsel %vm664, %v1548, 0.0
        %1657 = vadd.xlane.f32.xlu0 %v1656
        %v1658 = vpop.xlane.xlu0 %1657
        %v1659 = vsel %vm664, %v1549, 0.0
        %1660 = vadd.xlane.f32.xlu0 %v1659
        %v1661 = vpop.xlane.xlu0 %1660
        %v1662 = vsel %vm664, %v1550, 0.0
        %1663 = vadd.xlane.f32.xlu0 %v1662
        %v1664 = vpop.xlane.xlu0 %1663
        %v1665 = vsel %vm664, %v1551, 0.0
        %1666 = vadd.xlane.f32.xlu0 %v1665
        %v1667 = vpop.xlane.xlu0 %1666
        %v1668 = vsel %vm664, %v1552, 0.0
        %1669 = vadd.xlane.f32.xlu0 %v1668
        %v1670 = vpop.xlane.xlu0 %1669
        %v1671 = vsel %vm664, %v1553, 0.0
        %1672 = vadd.xlane.f32.xlu0 %v1671
        %v1673 = vpop.xlane.xlu0 %1672
        %v1674 = vsel %vm664, %v1554, 0.0
        %1675 = vadd.xlane.f32.xlu0 %v1674
        %v1676 = vpop.xlane.xlu0 %1675
        %v1677 = vsel %vm664, %v1555, 0.0
        %1678 = vadd.xlane.f32.xlu0 %v1677
        %v1679 = vpop.xlane.xlu0 %1678
        %v1680 = vsel %vm664, %v1556, 0.0
        %1681 = vadd.xlane.f32.xlu0 %v1680
        %v1682 = vpop.xlane.xlu0 %1681
        %v1683 = vsel %vm664, %v1557, 0.0
        %1684 = vadd.xlane.f32.xlu0 %v1683
        %v1685 = vpop.xlane.xlu0 %1684
        %v1686 = vsel %vm664, %v1558, 0.0
        %1687 = vadd.xlane.f32.xlu0 %v1686
        %v1688 = vpop.xlane.xlu0 %1687
        %v1689 = vsel %vm664, %v1559, 0.0
        %1690 = vadd.xlane.f32.xlu0 %v1689
        %v1691 = vpop.xlane.xlu0 %1690
        %v1692 = vsel %vm664, %v1560, 0.0
        %1693 = vadd.xlane.f32.xlu0 %v1692
        %v1694 = vpop.xlane.xlu0 %1693
        %v1695 = vsel %vm664, %v1561, 0.0
        %1696 = vadd.xlane.f32.xlu0 %v1695
        %v1697 = vpop.xlane.xlu0 %1696
        %v1698 = vsel %vm664, %v1562, 0.0
        %1699 = vadd.xlane.f32.xlu0 %v1698
        %v1700 = vpop.xlane.xlu0 %1699
        %v1701 = vsel %vm664, %v1563, 0.0
        %1702 = vadd.xlane.f32.xlu0 %v1701
        %v1703 = vpop.xlane.xlu0 %1702
        %v1704 = vsel %vm664, %v1564, 0.0
        %1705 = vadd.xlane.f32.xlu0 %v1704
        %v1706 = vpop.xlane.xlu0 %1705
        %v1707 = vsel %vm664, %v1565, 0.0
        %1708 = vadd.xlane.f32.xlu0 %v1707
        %v1709 = vpop.xlane.xlu0 %1708
        %v1710 = vsel %vm664, %v1566, 0.0
        %1711 = vadd.xlane.f32.xlu0 %v1710
        %v1712 = vpop.xlane.xlu0 %1711
        %v1713 = vsel %vm664, %v1567, 0.0
        %1714 = vadd.xlane.f32.xlu0 %v1713
        %v1715 = vpop.xlane.xlu0 %1714
        %v1716 = vsel %vm664, %v1568, 0.0
        %1717 = vadd.xlane.f32.xlu0 %v1716
        %v1718 = vpop.xlane.xlu0 %1717
        %v1719 = vsel %vm664, %v1569, 0.0
        %1720 = vadd.xlane.f32.xlu0 %v1719
        %v1721 = vpop.xlane.xlu0 %1720
        %v1722 = vsel %vm664, %v1570, 0.0
        %1723 = vadd.xlane.f32.xlu0 %v1722
        %v1724 = vpop.xlane.xlu0 %1723
        %v1725 = vsel %vm664, %v1571, 0.0
        %1726 = vadd.xlane.f32.xlu0 %v1725
        %v1727 = vpop.xlane.xlu0 %1726
        %v1728 = vsel %vm664, %v1572, 0.0
        %1729 = vadd.xlane.f32.xlu0 %v1728
        %v1730 = vpop.xlane.xlu0 %1729
        %v1731 = vsel %vm664, %v1573, 0.0
        %1732 = vadd.xlane.f32.xlu0 %v1731
        %v1733 = vpop.xlane.xlu0 %1732
        %v1734 = vsel %vm664, %v1574, 0.0
        %1735 = vadd.xlane.f32.xlu0 %v1734
        %v1736 = vpop.xlane.xlu0 %1735
        %v1737 = vsel %vm664, %v1575, 0.0
        %1738 = vadd.xlane.f32.xlu0 %v1737
        %v1739 = vpop.xlane.xlu0 %1738
        %v1740 = vsel %vm664, %v1576, 0.0
        %1741 = vadd.xlane.f32.xlu0 %v1740
        %v1742 = vpop.xlane.xlu0 %1741
        %v1743 = vsel %vm664, %v1577, 0.0
        %1744 = vadd.xlane.f32.xlu0 %v1743
        %v1745 = vpop.xlane.xlu0 %1744
        %v1746 = vsel %vm664, %v1578, 0.0
        %1747 = vadd.xlane.f32.xlu0 %v1746
        %v1748 = vpop.xlane.xlu0 %1747
        %v1749 = vsel %vm664, %v1579, 0.0
        %1750 = vadd.xlane.f32.xlu0 %v1749
        %v1751 = vpop.xlane.xlu0 %1750
        %v1752 = vsel %vm664, %v1580, 0.0
        %1753 = vadd.xlane.f32.xlu0 %v1752
        %v1754 = vpop.xlane.xlu0 %1753
        %v1755 = vsel %vm664, %v1581, 0.0
        %1756 = vadd.xlane.f32.xlu0 %v1755
        %v1757 = vpop.xlane.xlu0 %1756
        %v1758 = vsel %vm664, %v1582, 0.0
        %1759 = vadd.xlane.f32.xlu0 %v1758
        %v1760 = vpop.xlane.xlu0 %1759
        %v1761 = vsel %vm664, %v1583, 0.0
        %1762 = vadd.xlane.f32.xlu0 %v1761
        %v1763 = vpop.xlane.xlu0 %1762
        %v1764 = vsel %vm664, %v1584, 0.0
        %1765 = vadd.xlane.f32.xlu0 %v1764
        %v1766 = vpop.xlane.xlu0 %1765
        %v1767 = vsel %vm664, %v1585, 0.0
        %1768 = vadd.xlane.f32.xlu0 %v1767
        %v1769 = vpop.xlane.xlu0 %1768
        %v1770 = vsel %vm664, %v1586, 0.0
        %1771 = vadd.xlane.f32.xlu0 %v1770
        %v1772 = vpop.xlane.xlu0 %1771
        %v1773 = vsel %vm664, %v1587, 0.0
        %1774 = vadd.xlane.f32.xlu0 %v1773
        %v1775 = vpop.xlane.xlu0 %1774
        %v1776 = vsel %vm664, %v1588, 0.0
        %1777 = vadd.xlane.f32.xlu0 %v1776
        %v1778 = vpop.xlane.xlu0 %1777
        %v1779 = vsel %vm664, %v1589, 0.0
        %1780 = vadd.xlane.f32.xlu0 %v1779
        %v1781 = vpop.xlane.xlu0 %1780
        %v1782 = vld [vmem:[%s15] sm:$0xff]
        %v1783 = vld [vmem:[%s15 + $0x8] sm:$0xff]
        %v1784 = vld [vmem:[%s15 + $0x10] sm:$0xff]
        %v1785 = vld [vmem:[%s15 + $0x18] sm:$0xff]
        %v1786 = vld [vmem:[%s16] sm:$0x1]
        %v1787 = vld [vmem:[%s630] sm:$0xff]
        %v1788 = vld [vmem:[%s630 + $0x8] sm:$0xff]
        %v1789 = vld [vmem:[%s630 + $0x10] sm:$0xff]
        %v1790 = vld [vmem:[%s630 + $0x18] sm:$0xff]
        %v1791 = vld [vmem:[%s630 + $0x20] sm:$0xff]
        %v1792 = vld [vmem:[%s630 + $0x28] sm:$0xff]
        %v1793 = vld [vmem:[%s630 + $0x30] sm:$0xff]
        %v1794 = vld [vmem:[%s630 + $0x38] sm:$0xff]
        %v1796 = vsel %vm664, %v1787, 0
        %v1799 = vsel %vm664, %v1788, 0
        %v1802 = vsel %vm664, %v1789, 0
        %v1805 = vsel %vm664, %v1790, 0
        %v1808 = vsel %vm664, %v1791, 0
        %v1811 = vsel %vm664, %v1792, 0
        %v1814 = vsel %vm664, %v1793, 0
        %v1817 = vsel %vm664, %v1794, 0
        %v1820 = vsel %vm664, %v1782, 0
        %v1823 = vsel %vm664, %v1783, 0
        %v1826 = vsel %vm664, %v1784, 0
        %v1829 = vsel %vm664, %v1785, 0
        %1831 = vmatpush.xpose.msra.mxu0 0.0
        %1832 = vmatpush.xpose.msra.mxu0 0.0
        %1833 = vmatpush.xpose.msra.mxu0 0.0
        %1834 = vmatpush.xpose.msra.mxu0 0.0
        %1835 = vmatpush.xpose.msra.mxu0 0.0
        %1836 = vmatpush.xpose.msra.mxu0 0.0
        %1837 = vmatpush.xpose.msra.mxu0 0.0
        %1838 = vmatpush.xpose.msra.mxu0 0.0
        %1839 = vmatpush.xpose.msra.mxu0 0.0
        %1840 = vmatpush.xpose.msra.mxu0 0.0
        %1841 = vmatpush.xpose.msra.mxu0 0.0
        %1842 = vmatpush.xpose.msra.mxu0 0.0
        %1843 = vmatpush.xpose.msra.mxu0 %v1829
        %1844 = vmatpush.xpose.msra.mxu0 %v1826
        %1845 = vmatpush.xpose.msra.mxu0 %v1823
        %1846 = vmatpush.xpose.msra.mxu0 %v1820
        %1847 = vmatmul.f32.gmra.mxu0 %v1796
        %v1848 = vpop.f32.mrf.mxu0
        %v1849 = vadd.f32 0.0, %v1848
        %1850 = vmatmul.f32.gmra.mxu0 %v1799
        %v1851 = vpop.f32.mrf.mxu0
        %v1852 = vadd.f32 0.0, %v1851
        %1853 = vmatmul.f32.gmra.mxu0 %v1802
        %v1854 = vpop.f32.mrf.mxu0
        %v1855 = vadd.f32 0.0, %v1854
        %1856 = vmatmul.f32.gmra.mxu0 %v1805
        %v1857 = vpop.f32.mrf.mxu0
        %v1858 = vadd.f32 0.0, %v1857
        %1859 = vmatmul.f32.gmra.mxu0 %v1808
        %v1860 = vpop.f32.mrf.mxu0
        %v1861 = vadd.f32 0.0, %v1860
        %1862 = vmatmul.f32.gmra.mxu0 %v1811
        %v1863 = vpop.f32.mrf.mxu0
        %v1864 = vadd.f32 0.0, %v1863
        %1865 = vmatmul.f32.gmra.mxu0 %v1814
        %v1866 = vpop.f32.mrf.mxu0
        %v1867 = vadd.f32 0.0, %v1866
        %1868 = vmatmul.f32.gmra.mxu0 %v1817
        %v1869 = vpop.f32.mrf.mxu0
        %v1870 = vadd.f32 0.0, %v1869
        %1871 = vdwg.mxu0
        %1872 = vrot.lane.b32.xlu0 %v822, 64
        %v1873 = vpop.permute.xlu0 %1872
        %1874 = vrot.lane.b32.xlu0 %v823, 64
        %v1875 = vpop.permute.xlu0 %1874
        %1876 = vrot.lane.b32.xlu0 %v824, 64
        %v1877 = vpop.permute.xlu0 %1876
        %1878 = vrot.lane.b32.xlu0 %v825, 64
        %v1879 = vpop.permute.xlu0 %1878
        %1880 = vrot.lane.b32.xlu0 %v826, 64
        %v1881 = vpop.permute.xlu0 %1880
        %1882 = vrot.lane.b32.xlu0 %v827, 64
        %v1883 = vpop.permute.xlu0 %1882
        %1884 = vrot.lane.b32.xlu0 %v828, 64
        %v1885 = vpop.permute.xlu0 %1884
        %1886 = vrot.lane.b32.xlu0 %v829, 64
        %v1887 = vpop.permute.xlu0 %1886
        %v1896 = vadd.f32 %v1849, %v1873
        %v1897 = vadd.f32 %v1852, %v1875
        %v1898 = vadd.f32 %v1855, %v1877
        %v1899 = vadd.f32 %v1858, %v1879
        %v1900 = vadd.f32 %v1861, %v1881
        %v1901 = vadd.f32 %v1864, %v1883
        %v1902 = vadd.f32 %v1867, %v1885
        %v1903 = vadd.f32 %v1870, %v1887
        %v1904 = vtanh.pop %v1896
        %v1905 = vtanh.pop %v1897
        %v1906 = vtanh.pop %v1898
        %v1907 = vtanh.pop %v1899
        %v1908 = vtanh.pop %v1900
        %v1909 = vtanh.pop %v1901
        %v1910 = vtanh.pop %v1902
        %v1911 = vtanh.pop %v1903
        %v1913 = vperm.slane %v1786, 0
        %v1915 = vmul.f32 %v1904, %v1913
        %v1916 = vmul.f32 %v1905, %v1913
        %v1917 = vmul.f32 %v1906, %v1913
        %v1918 = vmul.f32 %v1907, %v1913
        %v1919 = vmul.f32 %v1908, %v1913
        %v1920 = vmul.f32 %v1909, %v1913
        %v1921 = vmul.f32 %v1910, %v1913
        %v1922 = vmul.f32 %v1911, %v1913
        %v1923 = vsel %vm664, %v1915, 0.0
        %1924 = vadd.xlane.f32.xlu0 %v1923
        %v1925 = vpop.xlane.xlu0 %1924
        %v1926 = vsel %vm664, %v1916, 0.0
        %1927 = vadd.xlane.f32.xlu0 %v1926
        %v1928 = vpop.xlane.xlu0 %1927
        %v1929 = vsel %vm664, %v1917, 0.0
        %1930 = vadd.xlane.f32.xlu0 %v1929
        %v1931 = vpop.xlane.xlu0 %1930
        %v1932 = vsel %vm664, %v1918, 0.0
        %1933 = vadd.xlane.f32.xlu0 %v1932
        %v1934 = vpop.xlane.xlu0 %1933
        %v1935 = vsel %vm664, %v1919, 0.0
        %1936 = vadd.xlane.f32.xlu0 %v1935
        %v1937 = vpop.xlane.xlu0 %1936
        %v1938 = vsel %vm664, %v1920, 0.0
        %1939 = vadd.xlane.f32.xlu0 %v1938
        %v1940 = vpop.xlane.xlu0 %1939
        %v1941 = vsel %vm664, %v1921, 0.0
        %1942 = vadd.xlane.f32.xlu0 %v1941
        %v1943 = vpop.xlane.xlu0 %1942
        %v1944 = vsel %vm664, %v1922, 0.0
        %1945 = vadd.xlane.f32.xlu0 %v1944
        %v1946 = vpop.xlane.xlu0 %1945
        %v1947 = vld [vmem:[%s8] sm:$0xff]
        %v1956 = vlaneseq
        %v1957 = vand.u32 %v1956, 127
        %v1958 = vperm.slane %v1925, %v1957
        %v1959 = vperm.slane %v1928, %v1957
        %v1960 = vperm.slane %v1931, %v1957
        %v1961 = vperm.slane %v1934, %v1957
        %v1962 = vperm.slane %v1937, %v1957
        %v1963 = vperm.slane %v1940, %v1957
        %v1964 = vperm.slane %v1943, %v1957
        %v1965 = vperm.slane %v1946, %v1957
        %vm1966 = vcmask 1041409
        %v1967 = vsel %vm1966, %v1959, %v1958
        %vm1968 = vcmask 1042434
        %v1969 = vsel %vm1968, %v1960, %v1967
        %vm1970 = vcmask 1043459
        %v1971 = vsel %vm1970, %v1961, %v1969
        %vm1972 = vcmask 1044484
        %v1973 = vsel %vm1972, %v1962, %v1971
        %vm1974 = vcmask 1045509
        %v1975 = vsel %vm1974, %v1963, %v1973
        %vm1976 = vcmask 1046534
        %v1977 = vsel %vm1976, %v1964, %v1975
        %vm1978 = vcmask 1047559
        %v1979 = vsel %vm1978, %v1965, %v1977
        %vm1980 = vcmask 64512
        %v1981 = vsel %vm1980, %v1979, 0
        %1983 = vmatpush.msra.mxu0 0.0
        %1984 = vmatpush.msra.mxu0 0.0
        %1985 = vmatpush.msra.mxu0 0.0
        %1986 = vmatpush.msra.mxu0 0.0
        %1987 = vmatpush.msra.mxu0 0.0
        %1988 = vmatpush.msra.mxu0 0.0
        %1989 = vmatpush.msra.mxu0 0.0
        %1990 = vmatpush.msra.mxu0 0.0
        %1991 = vmatpush.msra.mxu0 0.0
        %1992 = vmatpush.msra.mxu0 0.0
        %1993 = vmatpush.msra.mxu0 0.0
        %1994 = vmatpush.msra.mxu0 0.0
        %1995 = vmatpush.msra.mxu0 0.0
        %1996 = vmatpush.msra.mxu0 0.0
        %1997 = vmatpush.msra.mxu0 0.0
        %1998 = vmatpush.msra.mxu0 %v1947
        %1999 = vmatmul.f32.gmra.mxu0 %v1981
        %v2000 = vpop.f32.mrf.mxu0
        %v2001 = vadd.f32 0.0, %v2000
        %2002 = vdwg.mxu0
        %v2004 = vperm.slane %v2001, 0
        %v2005 = vlaneseq
        %v2006 = vshrl.u32 %v2005, 7
        %2008 = vset.pattern.permute.xlu0 %v2006
        %2009 = vperm.xlu0 %2008, %v2004
        %v2010 = vpop.permute.xlu0 %2009
        %v2011 = vlaneseq
        %v2012 = vshrl.u32 %v2011, 7
        %v2013 = vadd.s32 %v2012, 8
        %2014 = vset.pattern.permute.xlu0 %v2013
        %2015 = vperm.xlu0 %2014, %v2004
        %v2016 = vpop.permute.xlu0 %2015
        %v2017 = vlaneseq
        %v2018 = vshrl.u32 %v2017, 7
        %v2019 = vadd.s32 %v2018, 16
        %2020 = vset.pattern.permute.xlu0 %v2019
        %2021 = vperm.xlu0 %2020, %v2004
        %v2022 = vpop.permute.xlu0 %2021
        %v2023 = vlaneseq
        %v2024 = vshrl.u32 %v2023, 7
        %v2025 = vadd.s32 %v2024, 24
        %2026 = vset.pattern.permute.xlu0 %v2025
        %2027 = vperm.xlu0 %2026, %v2004
        %v2028 = vpop.permute.xlu0 %2027
        %v2029 = vlaneseq
        %v2030 = vshrl.u32 %v2029, 7
        %v2031 = vadd.s32 %v2030, 32
        %2032 = vset.pattern.permute.xlu0 %v2031
        %2033 = vperm.xlu0 %2032, %v2004
        %v2034 = vpop.permute.xlu0 %2033
        %v2035 = vlaneseq
        %v2036 = vshrl.u32 %v2035, 7
        %v2037 = vadd.s32 %v2036, 40
        %2038 = vset.pattern.permute.xlu0 %v2037
        %2039 = vperm.xlu0 %2038, %v2004
        %v2040 = vpop.permute.xlu0 %2039
        %v2041 = vlaneseq
        %v2042 = vshrl.u32 %v2041, 7
        %v2043 = vadd.s32 %v2042, 48
        %2044 = vset.pattern.permute.xlu0 %v2043
        %2045 = vperm.xlu0 %2044, %v2004
        %v2046 = vpop.permute.xlu0 %2045
        %v2047 = vlaneseq
        %v2048 = vshrl.u32 %v2047, 7
        %v2049 = vadd.s32 %v2048, 56
        %2050 = vset.pattern.permute.xlu0 %v2049
        %2051 = vperm.xlu0 %2050, %v2004
        %v2052 = vpop.permute.xlu0 %2051
        %v2053 = vperm.slane %v2001, 1
        %v2054 = vlaneseq
        %v2055 = vshrl.u32 %v2054, 7
        %2057 = vset.pattern.permute.xlu0 %v2055
        %2058 = vperm.xlu0 %2057, %v2053
        %v2059 = vpop.permute.xlu0 %2058
        %v2060 = vlaneseq
        %v2061 = vshrl.u32 %v2060, 7
        %v2062 = vadd.s32 %v2061, 8
        %2063 = vset.pattern.permute.xlu0 %v2062
        %2064 = vperm.xlu0 %2063, %v2053
        %v2065 = vpop.permute.xlu0 %2064
        %v2066 = vlaneseq
        %v2067 = vshrl.u32 %v2066, 7
        %v2068 = vadd.s32 %v2067, 16
        %2069 = vset.pattern.permute.xlu0 %v2068
        %2070 = vperm.xlu0 %2069, %v2053
        %v2071 = vpop.permute.xlu0 %2070
        %v2072 = vlaneseq
        %v2073 = vshrl.u32 %v2072, 7
        %v2074 = vadd.s32 %v2073, 24
        %2075 = vset.pattern.permute.xlu0 %v2074
        %2076 = vperm.xlu0 %2075, %v2053
        %v2077 = vpop.permute.xlu0 %2076
        %v2078 = vlaneseq
        %v2079 = vshrl.u32 %v2078, 7
        %v2080 = vadd.s32 %v2079, 32
        %2081 = vset.pattern.permute.xlu0 %v2080
        %2082 = vperm.xlu0 %2081, %v2053
        %v2083 = vpop.permute.xlu0 %2082
        %v2084 = vlaneseq
        %v2085 = vshrl.u32 %v2084, 7
        %v2086 = vadd.s32 %v2085, 40
        %2087 = vset.pattern.permute.xlu0 %v2086
        %2088 = vperm.xlu0 %2087, %v2053
        %v2089 = vpop.permute.xlu0 %2088
        %v2090 = vlaneseq
        %v2091 = vshrl.u32 %v2090, 7
        %v2092 = vadd.s32 %v2091, 48
        %2093 = vset.pattern.permute.xlu0 %v2092
        %2094 = vperm.xlu0 %2093, %v2053
        %v2095 = vpop.permute.xlu0 %2094
        %v2096 = vlaneseq
        %v2097 = vshrl.u32 %v2096, 7
        %v2098 = vadd.s32 %v2097, 56
        %2099 = vset.pattern.permute.xlu0 %v2098
        %2100 = vperm.xlu0 %2099, %v2053
        %v2101 = vpop.permute.xlu0 %2100
        %v2102 = vperm.slane %v2001, 2
        %v2103 = vlaneseq
        %v2104 = vshrl.u32 %v2103, 7
        %2106 = vset.pattern.permute.xlu0 %v2104
        %2107 = vperm.xlu0 %2106, %v2102
        %v2108 = vpop.permute.xlu0 %2107
        %v2109 = vlaneseq
        %v2110 = vshrl.u32 %v2109, 7
        %v2111 = vadd.s32 %v2110, 8
        %2112 = vset.pattern.permute.xlu0 %v2111
        %2113 = vperm.xlu0 %2112, %v2102
        %v2114 = vpop.permute.xlu0 %2113
        %v2115 = vlaneseq
        %v2116 = vshrl.u32 %v2115, 7
        %v2117 = vadd.s32 %v2116, 16
        %2118 = vset.pattern.permute.xlu0 %v2117
        %2119 = vperm.xlu0 %2118, %v2102
        %v2120 = vpop.permute.xlu0 %2119
        %v2121 = vlaneseq
        %v2122 = vshrl.u32 %v2121, 7
        %v2123 = vadd.s32 %v2122, 24
        %2124 = vset.pattern.permute.xlu0 %v2123
        %2125 = vperm.xlu0 %2124, %v2102
        %v2126 = vpop.permute.xlu0 %2125
        %v2127 = vlaneseq
        %v2128 = vshrl.u32 %v2127, 7
        %v2129 = vadd.s32 %v2128, 32
        %2130 = vset.pattern.permute.xlu0 %v2129
        %2131 = vperm.xlu0 %2130, %v2102
        %v2132 = vpop.permute.xlu0 %2131
        %v2133 = vlaneseq
        %v2134 = vshrl.u32 %v2133, 7
        %v2135 = vadd.s32 %v2134, 40
        %2136 = vset.pattern.permute.xlu0 %v2135
        %2137 = vperm.xlu0 %2136, %v2102
        %v2138 = vpop.permute.xlu0 %2137
        %v2139 = vlaneseq
        %v2140 = vshrl.u32 %v2139, 7
        %v2141 = vadd.s32 %v2140, 48
        %2142 = vset.pattern.permute.xlu0 %v2141
        %2143 = vperm.xlu0 %2142, %v2102
        %v2144 = vpop.permute.xlu0 %2143
        %v2145 = vlaneseq
        %v2146 = vshrl.u32 %v2145, 7
        %v2147 = vadd.s32 %v2146, 56
        %2148 = vset.pattern.permute.xlu0 %v2147
        %2149 = vperm.xlu0 %2148, %v2102
        %v2150 = vpop.permute.xlu0 %2149
        %v2151 = vperm.slane %v2001, 3
        %v2152 = vlaneseq
        %v2153 = vshrl.u32 %v2152, 7
        %2155 = vset.pattern.permute.xlu0 %v2153
        %2156 = vperm.xlu0 %2155, %v2151
        %v2157 = vpop.permute.xlu0 %2156
        %v2158 = vlaneseq
        %v2159 = vshrl.u32 %v2158, 7
        %v2160 = vadd.s32 %v2159, 8
        %2161 = vset.pattern.permute.xlu0 %v2160
        %2162 = vperm.xlu0 %2161, %v2151
        %v2163 = vpop.permute.xlu0 %2162
        %v2164 = vlaneseq
        %v2165 = vshrl.u32 %v2164, 7
        %v2166 = vadd.s32 %v2165, 16
        %2167 = vset.pattern.permute.xlu0 %v2166
        %2168 = vperm.xlu0 %2167, %v2151
        %v2169 = vpop.permute.xlu0 %2168
        %v2170 = vlaneseq
        %v2171 = vshrl.u32 %v2170, 7
        %v2172 = vadd.s32 %v2171, 24
        %2173 = vset.pattern.permute.xlu0 %v2172
        %2174 = vperm.xlu0 %2173, %v2151
        %v2175 = vpop.permute.xlu0 %2174
        %v2176 = vlaneseq
        %v2177 = vshrl.u32 %v2176, 7
        %v2178 = vadd.s32 %v2177, 32
        %2179 = vset.pattern.permute.xlu0 %v2178
        %2180 = vperm.xlu0 %2179, %v2151
        %v2181 = vpop.permute.xlu0 %2180
        %v2182 = vlaneseq
        %v2183 = vshrl.u32 %v2182, 7
        %v2184 = vadd.s32 %v2183, 40
        %2185 = vset.pattern.permute.xlu0 %v2184
        %2186 = vperm.xlu0 %2185, %v2151
        %v2187 = vpop.permute.xlu0 %2186
        %v2188 = vlaneseq
        %v2189 = vshrl.u32 %v2188, 7
        %v2190 = vadd.s32 %v2189, 48
        %2191 = vset.pattern.permute.xlu0 %v2190
        %2192 = vperm.xlu0 %2191, %v2151
        %v2193 = vpop.permute.xlu0 %2192
        %v2194 = vlaneseq
        %v2195 = vshrl.u32 %v2194, 7
        %v2196 = vadd.s32 %v2195, 56
        %2197 = vset.pattern.permute.xlu0 %v2196
        %2198 = vperm.xlu0 %2197, %v2151
        %v2199 = vpop.permute.xlu0 %2198
        %v2200 = vperm.slane %v2001, 4
        %v2201 = vlaneseq
        %v2202 = vshrl.u32 %v2201, 7
        %2204 = vset.pattern.permute.xlu0 %v2202
        %2205 = vperm.xlu0 %2204, %v2200
        %v2206 = vpop.permute.xlu0 %2205
        %v2207 = vlaneseq
        %v2208 = vshrl.u32 %v2207, 7
        %v2209 = vadd.s32 %v2208, 8
        %2210 = vset.pattern.permute.xlu0 %v2209
        %2211 = vperm.xlu0 %2210, %v2200
        %v2212 = vpop.permute.xlu0 %2211
        %v2213 = vlaneseq
        %v2214 = vshrl.u32 %v2213, 7
        %v2215 = vadd.s32 %v2214, 16
        %2216 = vset.pattern.permute.xlu0 %v2215
        %2217 = vperm.xlu0 %2216, %v2200
        %v2218 = vpop.permute.xlu0 %2217
        %v2219 = vlaneseq
        %v2220 = vshrl.u32 %v2219, 7
        %v2221 = vadd.s32 %v2220, 24
        %2222 = vset.pattern.permute.xlu0 %v2221
        %2223 = vperm.xlu0 %2222, %v2200
        %v2224 = vpop.permute.xlu0 %2223
        %v2225 = vlaneseq
        %v2226 = vshrl.u32 %v2225, 7
        %v2227 = vadd.s32 %v2226, 32
        %2228 = vset.pattern.permute.xlu0 %v2227
        %2229 = vperm.xlu0 %2228, %v2200
        %v2230 = vpop.permute.xlu0 %2229
        %v2231 = vlaneseq
        %v2232 = vshrl.u32 %v2231, 7
        %v2233 = vadd.s32 %v2232, 40
        %2234 = vset.pattern.permute.xlu0 %v2233
        %2235 = vperm.xlu0 %2234, %v2200
        %v2236 = vpop.permute.xlu0 %2235
        %v2237 = vlaneseq
        %v2238 = vshrl.u32 %v2237, 7
        %v2239 = vadd.s32 %v2238, 48
        %2240 = vset.pattern.permute.xlu0 %v2239
        %2241 = vperm.xlu0 %2240, %v2200
        %v2242 = vpop.permute.xlu0 %2241
        %v2243 = vlaneseq
        %v2244 = vshrl.u32 %v2243, 7
        %v2245 = vadd.s32 %v2244, 56
        %2246 = vset.pattern.permute.xlu0 %v2245
        %2247 = vperm.xlu0 %2246, %v2200
        %v2248 = vpop.permute.xlu0 %2247
        %v2249 = vperm.slane %v2001, 5
        %v2250 = vlaneseq
        %v2251 = vshrl.u32 %v2250, 7
        %2253 = vset.pattern.permute.xlu0 %v2251
        %2254 = vperm.xlu0 %2253, %v2249
        %v2255 = vpop.permute.xlu0 %2254
        %v2256 = vlaneseq
        %v2257 = vshrl.u32 %v2256, 7
        %v2258 = vadd.s32 %v2257, 8
        %2259 = vset.pattern.permute.xlu0 %v2258
        %2260 = vperm.xlu0 %2259, %v2249
        %v2261 = vpop.permute.xlu0 %2260
        %v2262 = vlaneseq
        %v2263 = vshrl.u32 %v2262, 7
        %v2264 = vadd.s32 %v2263, 16
        %2265 = vset.pattern.permute.xlu0 %v2264
        %2266 = vperm.xlu0 %2265, %v2249
        %v2267 = vpop.permute.xlu0 %2266
        %v2268 = vlaneseq
        %v2269 = vshrl.u32 %v2268, 7
        %v2270 = vadd.s32 %v2269, 24
        %2271 = vset.pattern.permute.xlu0 %v2270
        %2272 = vperm.xlu0 %2271, %v2249
        %v2273 = vpop.permute.xlu0 %2272
        %v2274 = vlaneseq
        %v2275 = vshrl.u32 %v2274, 7
        %v2276 = vadd.s32 %v2275, 32
        %2277 = vset.pattern.permute.xlu0 %v2276
        %2278 = vperm.xlu0 %2277, %v2249
        %v2279 = vpop.permute.xlu0 %2278
        %v2280 = vlaneseq
        %v2281 = vshrl.u32 %v2280, 7
        %v2282 = vadd.s32 %v2281, 40
        %2283 = vset.pattern.permute.xlu0 %v2282
        %2284 = vperm.xlu0 %2283, %v2249
        %v2285 = vpop.permute.xlu0 %2284
        %v2286 = vlaneseq
        %v2287 = vshrl.u32 %v2286, 7
        %v2288 = vadd.s32 %v2287, 48
        %2289 = vset.pattern.permute.xlu0 %v2288
        %2290 = vperm.xlu0 %2289, %v2249
        %v2291 = vpop.permute.xlu0 %2290
        %v2292 = vlaneseq
        %v2293 = vshrl.u32 %v2292, 7
        %v2294 = vadd.s32 %v2293, 56
        %2295 = vset.pattern.permute.xlu0 %v2294
        %2296 = vperm.xlu0 %2295, %v2249
        %v2297 = vpop.permute.xlu0 %2296
        %v2298 = vperm.slane %v2001, 6
        %v2299 = vlaneseq
        %v2300 = vshrl.u32 %v2299, 7
        %2302 = vset.pattern.permute.xlu0 %v2300
        %2303 = vperm.xlu0 %2302, %v2298
        %v2304 = vpop.permute.xlu0 %2303
        %v2305 = vlaneseq
        %v2306 = vshrl.u32 %v2305, 7
        %v2307 = vadd.s32 %v2306, 8
        %2308 = vset.pattern.permute.xlu0 %v2307
        %2309 = vperm.xlu0 %2308, %v2298
        %v2310 = vpop.permute.xlu0 %2309
        %v2311 = vlaneseq
        %v2312 = vshrl.u32 %v2311, 7
        %v2313 = vadd.s32 %v2312, 16
        %2314 = vset.pattern.permute.xlu0 %v2313
        %2315 = vperm.xlu0 %2314, %v2298
        %v2316 = vpop.permute.xlu0 %2315
        %v2317 = vlaneseq
        %v2318 = vshrl.u32 %v2317, 7
        %v2319 = vadd.s32 %v2318, 24
        %2320 = vset.pattern.permute.xlu0 %v2319
        %2321 = vperm.xlu0 %2320, %v2298
        %v2322 = vpop.permute.xlu0 %2321
        %v2323 = vlaneseq
        %v2324 = vshrl.u32 %v2323, 7
        %v2325 = vadd.s32 %v2324, 32
        %2326 = vset.pattern.permute.xlu0 %v2325
        %2327 = vperm.xlu0 %2326, %v2298
        %v2328 = vpop.permute.xlu0 %2327
        %v2329 = vlaneseq
        %v2330 = vshrl.u32 %v2329, 7
        %v2331 = vadd.s32 %v2330, 40
        %2332 = vset.pattern.permute.xlu0 %v2331
        %2333 = vperm.xlu0 %2332, %v2298
        %v2334 = vpop.permute.xlu0 %2333
        %v2335 = vlaneseq
        %v2336 = vshrl.u32 %v2335, 7
        %v2337 = vadd.s32 %v2336, 48
        %2338 = vset.pattern.permute.xlu0 %v2337
        %2339 = vperm.xlu0 %2338, %v2298
        %v2340 = vpop.permute.xlu0 %2339
        %v2341 = vlaneseq
        %v2342 = vshrl.u32 %v2341, 7
        %v2343 = vadd.s32 %v2342, 56
        %2344 = vset.pattern.permute.xlu0 %v2343
        %2345 = vperm.xlu0 %2344, %v2298
        %v2346 = vpop.permute.xlu0 %2345
        %v2347 = vperm.slane %v2001, 7
        %v2348 = vlaneseq
        %v2349 = vshrl.u32 %v2348, 7
        %2351 = vset.pattern.permute.xlu0 %v2349
        %2352 = vperm.xlu0 %2351, %v2347
        %v2353 = vpop.permute.xlu0 %2352
        %v2354 = vlaneseq
        %v2355 = vshrl.u32 %v2354, 7
        %v2356 = vadd.s32 %v2355, 8
        %2357 = vset.pattern.permute.xlu0 %v2356
        %2358 = vperm.xlu0 %2357, %v2347
        %v2359 = vpop.permute.xlu0 %2358
        %v2360 = vlaneseq
        %v2361 = vshrl.u32 %v2360, 7
        %v2362 = vadd.s32 %v2361, 16
        %2363 = vset.pattern.permute.xlu0 %v2362
        %2364 = vperm.xlu0 %2363, %v2347
        %v2365 = vpop.permute.xlu0 %2364
        %v2366 = vlaneseq
        %v2367 = vshrl.u32 %v2366, 7
        %v2368 = vadd.s32 %v2367, 24
        %2369 = vset.pattern.permute.xlu0 %v2368
        %2370 = vperm.xlu0 %2369, %v2347
        %v2371 = vpop.permute.xlu0 %2370
        %v2372 = vlaneseq
        %v2373 = vshrl.u32 %v2372, 7
        %v2374 = vadd.s32 %v2373, 32
        %2375 = vset.pattern.permute.xlu0 %v2374
        %2376 = vperm.xlu0 %2375, %v2347
        %v2377 = vpop.permute.xlu0 %2376
        %v2378 = vlaneseq
        %v2379 = vshrl.u32 %v2378, 7
        %v2380 = vadd.s32 %v2379, 40
        %2381 = vset.pattern.permute.xlu0 %v2380
        %2382 = vperm.xlu0 %2381, %v2347
        %v2383 = vpop.permute.xlu0 %2382
        %v2384 = vlaneseq
        %v2385 = vshrl.u32 %v2384, 7
        %v2386 = vadd.s32 %v2385, 48
        %2387 = vset.pattern.permute.xlu0 %v2386
        %2388 = vperm.xlu0 %2387, %v2347
        %v2389 = vpop.permute.xlu0 %2388
        %v2390 = vlaneseq
        %v2391 = vshrl.u32 %v2390, 7
        %v2392 = vadd.s32 %v2391, 56
        %2393 = vset.pattern.permute.xlu0 %v2392
        %2394 = vperm.xlu0 %2393, %v2347
        %v2395 = vpop.permute.xlu0 %2394
        %v2460 = vmul.f32 %v1592, %v2010
        %v2461 = vmul.f32 %v1595, %v2016
        %v2462 = vmul.f32 %v1598, %v2022
        %v2463 = vmul.f32 %v1601, %v2028
        %v2464 = vmul.f32 %v1604, %v2034
        %v2465 = vmul.f32 %v1607, %v2040
        %v2466 = vmul.f32 %v1610, %v2046
        %v2467 = vmul.f32 %v1613, %v2052
        %v2468 = vmul.f32 %v1616, %v2059
        %v2469 = vmul.f32 %v1619, %v2065
        %v2470 = vmul.f32 %v1622, %v2071
        %v2471 = vmul.f32 %v1625, %v2077
        %v2472 = vmul.f32 %v1628, %v2083
        %v2473 = vmul.f32 %v1631, %v2089
        %v2474 = vmul.f32 %v1634, %v2095
        %v2475 = vmul.f32 %v1637, %v2101
        %v2476 = vmul.f32 %v1640, %v2108
        %v2477 = vmul.f32 %v1643, %v2114
        %v2478 = vmul.f32 %v1646, %v2120
        %v2479 = vmul.f32 %v1649, %v2126
        %v2480 = vmul.f32 %v1652, %v2132
        %v2481 = vmul.f32 %v1655, %v2138
        %v2482 = vmul.f32 %v1658, %v2144
        %v2483 = vmul.f32 %v1661, %v2150
        %v2484 = vmul.f32 %v1664, %v2157
        %v2485 = vmul.f32 %v1667, %v2163
        %v2486 = vmul.f32 %v1670, %v2169
        %v2487 = vmul.f32 %v1673, %v2175
        %v2488 = vmul.f32 %v1676, %v2181
        %v2489 = vmul.f32 %v1679, %v2187
        %v2490 = vmul.f32 %v1682, %v2193
        %v2491 = vmul.f32 %v1685, %v2199
        %v2492 = vmul.f32 %v1688, %v2206
        %v2493 = vmul.f32 %v1691, %v2212
        %v2494 = vmul.f32 %v1694, %v2218
        %v2495 = vmul.f32 %v1697, %v2224
        %v2496 = vmul.f32 %v1700, %v2230
        %v2497 = vmul.f32 %v1703, %v2236
        %v2498 = vmul.f32 %v1706, %v2242
        %v2499 = vmul.f32 %v1709, %v2248
        %v2500 = vmul.f32 %v1712, %v2255
        %v2501 = vmul.f32 %v1715, %v2261
        %v2502 = vmul.f32 %v1718, %v2267
        %v2503 = vmul.f32 %v1721, %v2273
        %v2504 = vmul.f32 %v1724, %v2279
        %v2505 = vmul.f32 %v1727, %v2285
        %v2506 = vmul.f32 %v1730, %v2291
        %v2507 = vmul.f32 %v1733, %v2297
        %v2508 = vmul.f32 %v1736, %v2304
        %v2509 = vmul.f32 %v1739, %v2310
        %v2510 = vmul.f32 %v1742, %v2316
        %v2511 = vmul.f32 %v1745, %v2322
        %v2512 = vmul.f32 %v1748, %v2328
        %v2513 = vmul.f32 %v1751, %v2334
        %v2514 = vmul.f32 %v1754, %v2340
        %v2515 = vmul.f32 %v1757, %v2346
        %v2516 = vmul.f32 %v1760, %v2353
        %v2517 = vmul.f32 %v1763, %v2359
        %v2518 = vmul.f32 %v1766, %v2365
        %v2519 = vmul.f32 %v1769, %v2371
        %v2520 = vmul.f32 %v1772, %v2377
        %v2521 = vmul.f32 %v1775, %v2383
        %v2522 = vmul.f32 %v1778, %v2389
        %v2523 = vmul.f32 %v1781, %v2395
        %v2524 = vld [vmem:[%s6] sm:$0x1]
        %v2525 = vld [vmem:[%s642] sm:$0xff]
        %v2526 = vperm.slane %v2524, 0
        %2527 = vset.pattern.permute.xlu0 0
        %2528 = vperm.xlu0 %2527, %v2525
        %v2529 = vpop.permute.xlu0 %2528
        %vm2530 = vcmp.lt.s32.totalorder %v2526, %v2529
        %v2531 = vld [vmem:[%s7] sm:$0x1]
        %v2532 = vld [vmem:[%s646] sm:$0xff]
        %v2533 = vperm.slane %v2531, 0
        %vm2534 = vcmp.lt.s32.totalorder %v2533, %v2532
        %v2543 = vperm.slane %v867, %v1957
        %v2544 = vperm.slane %v870, %v1957
        %v2545 = vperm.slane %v873, %v1957
        %v2546 = vperm.slane %v876, %v1957
        %v2547 = vperm.slane %v879, %v1957
        %v2548 = vperm.slane %v882, %v1957
        %v2549 = vperm.slane %v885, %v1957
        %v2550 = vperm.slane %v888, %v1957
        %v2551 = vsel %vm1966, %v2544, %v2543
        %v2552 = vsel %vm1968, %v2545, %v2551
        %v2553 = vsel %vm1970, %v2546, %v2552
        %v2554 = vsel %vm1972, %v2547, %v2553
        %v2555 = vsel %vm1974, %v2548, %v2554
        %v2556 = vsel %vm1976, %v2549, %v2555
        %v2557 = vsel %vm1978, %v2550, %v2556
        %v2559 = vsel %vm2530, %v2557, -inf
        %2624 = vset.pattern.permute.xlu0 0
        %2625 = vperm.xlu0 %2624, %v2460
        %v2626 = vpop.permute.xlu0 %2625
        %2627 = vset.pattern.permute.xlu0 0
        %2628 = vperm.xlu0 %2627, %v2461
        %v2629 = vpop.permute.xlu0 %2628
        %2630 = vset.pattern.permute.xlu0 0
        %2631 = vperm.xlu0 %2630, %v2462
        %v2632 = vpop.permute.xlu0 %2631
        %2633 = vset.pattern.permute.xlu0 0
        %2634 = vperm.xlu0 %2633, %v2463
        %v2635 = vpop.permute.xlu0 %2634
        %2636 = vset.pattern.permute.xlu0 0
        %2637 = vperm.xlu0 %2636, %v2464
        %v2638 = vpop.permute.xlu0 %2637
        %2639 = vset.pattern.permute.xlu0 0
        %2640 = vperm.xlu0 %2639, %v2465
        %v2641 = vpop.permute.xlu0 %2640
        %2642 = vset.pattern.permute.xlu0 0
        %2643 = vperm.xlu0 %2642, %v2466
        %v2644 = vpop.permute.xlu0 %2643
        %2645 = vset.pattern.permute.xlu0 0
        %2646 = vperm.xlu0 %2645, %v2467
        %v2647 = vpop.permute.xlu0 %2646
        %2648 = vset.pattern.permute.xlu0 0
        %2649 = vperm.xlu0 %2648, %v2468
        %v2650 = vpop.permute.xlu0 %2649
        %2651 = vset.pattern.permute.xlu0 0
        %2652 = vperm.xlu0 %2651, %v2469
        %v2653 = vpop.permute.xlu0 %2652
        %2654 = vset.pattern.permute.xlu0 0
        %2655 = vperm.xlu0 %2654, %v2470
        %v2656 = vpop.permute.xlu0 %2655
        %2657 = vset.pattern.permute.xlu0 0
        %2658 = vperm.xlu0 %2657, %v2471
        %v2659 = vpop.permute.xlu0 %2658
        %2660 = vset.pattern.permute.xlu0 0
        %2661 = vperm.xlu0 %2660, %v2472
        %v2662 = vpop.permute.xlu0 %2661
        %2663 = vset.pattern.permute.xlu0 0
        %2664 = vperm.xlu0 %2663, %v2473
        %v2665 = vpop.permute.xlu0 %2664
        %2666 = vset.pattern.permute.xlu0 0
        %2667 = vperm.xlu0 %2666, %v2474
        %v2668 = vpop.permute.xlu0 %2667
        %2669 = vset.pattern.permute.xlu0 0
        %2670 = vperm.xlu0 %2669, %v2475
        %v2671 = vpop.permute.xlu0 %2670
        %2672 = vset.pattern.permute.xlu0 0
        %2673 = vperm.xlu0 %2672, %v2476
        %v2674 = vpop.permute.xlu0 %2673
        %2675 = vset.pattern.permute.xlu0 0
        %2676 = vperm.xlu0 %2675, %v2477
        %v2677 = vpop.permute.xlu0 %2676
        %2678 = vset.pattern.permute.xlu0 0
        %2679 = vperm.xlu0 %2678, %v2478
        %v2680 = vpop.permute.xlu0 %2679
        %2681 = vset.pattern.permute.xlu0 0
        %2682 = vperm.xlu0 %2681, %v2479
        %v2683 = vpop.permute.xlu0 %2682
        %2684 = vset.pattern.permute.xlu0 0
        %2685 = vperm.xlu0 %2684, %v2480
        %v2686 = vpop.permute.xlu0 %2685
        %2687 = vset.pattern.permute.xlu0 0
        %2688 = vperm.xlu0 %2687, %v2481
        %v2689 = vpop.permute.xlu0 %2688
        %2690 = vset.pattern.permute.xlu0 0
        %2691 = vperm.xlu0 %2690, %v2482
        %v2692 = vpop.permute.xlu0 %2691
        %2693 = vset.pattern.permute.xlu0 0
        %2694 = vperm.xlu0 %2693, %v2483
        %v2695 = vpop.permute.xlu0 %2694
        %2696 = vset.pattern.permute.xlu0 0
        %2697 = vperm.xlu0 %2696, %v2484
        %v2698 = vpop.permute.xlu0 %2697
        %2699 = vset.pattern.permute.xlu0 0
        %2700 = vperm.xlu0 %2699, %v2485
        %v2701 = vpop.permute.xlu0 %2700
        %2702 = vset.pattern.permute.xlu0 0
        %2703 = vperm.xlu0 %2702, %v2486
        %v2704 = vpop.permute.xlu0 %2703
        %2705 = vset.pattern.permute.xlu0 0
        %2706 = vperm.xlu0 %2705, %v2487
        %v2707 = vpop.permute.xlu0 %2706
        %2708 = vset.pattern.permute.xlu0 0
        %2709 = vperm.xlu0 %2708, %v2488
        %v2710 = vpop.permute.xlu0 %2709
        %2711 = vset.pattern.permute.xlu0 0
        %2712 = vperm.xlu0 %2711, %v2489
        %v2713 = vpop.permute.xlu0 %2712
        %2714 = vset.pattern.permute.xlu0 0
        %2715 = vperm.xlu0 %2714, %v2490
        %v2716 = vpop.permute.xlu0 %2715
        %2717 = vset.pattern.permute.xlu0 0
        %2718 = vperm.xlu0 %2717, %v2491
        %v2719 = vpop.permute.xlu0 %2718
        %2720 = vset.pattern.permute.xlu0 0
        %2721 = vperm.xlu0 %2720, %v2492
        %v2722 = vpop.permute.xlu0 %2721
        %2723 = vset.pattern.permute.xlu0 0
        %2724 = vperm.xlu0 %2723, %v2493
        %v2725 = vpop.permute.xlu0 %2724
        %2726 = vset.pattern.permute.xlu0 0
        %2727 = vperm.xlu0 %2726, %v2494
        %v2728 = vpop.permute.xlu0 %2727
        %2729 = vset.pattern.permute.xlu0 0
        %2730 = vperm.xlu0 %2729, %v2495
        %v2731 = vpop.permute.xlu0 %2730
        %2732 = vset.pattern.permute.xlu0 0
        %2733 = vperm.xlu0 %2732, %v2496
        %v2734 = vpop.permute.xlu0 %2733
        %2735 = vset.pattern.permute.xlu0 0
        %2736 = vperm.xlu0 %2735, %v2497
        %v2737 = vpop.permute.xlu0 %2736
        %2738 = vset.pattern.permute.xlu0 0
        %2739 = vperm.xlu0 %2738, %v2498
        %v2740 = vpop.permute.xlu0 %2739
        %2741 = vset.pattern.permute.xlu0 0
        %2742 = vperm.xlu0 %2741, %v2499
        %v2743 = vpop.permute.xlu0 %2742
        %2744 = vset.pattern.permute.xlu0 0
        %2745 = vperm.xlu0 %2744, %v2500
        %v2746 = vpop.permute.xlu0 %2745
        %2747 = vset.pattern.permute.xlu0 0
        %2748 = vperm.xlu0 %2747, %v2501
        %v2749 = vpop.permute.xlu0 %2748
        %2750 = vset.pattern.permute.xlu0 0
        %2751 = vperm.xlu0 %2750, %v2502
        %v2752 = vpop.permute.xlu0 %2751
        %2753 = vset.pattern.permute.xlu0 0
        %2754 = vperm.xlu0 %2753, %v2503
        %v2755 = vpop.permute.xlu0 %2754
        %2756 = vset.pattern.permute.xlu0 0
        %2757 = vperm.xlu0 %2756, %v2504
        %v2758 = vpop.permute.xlu0 %2757
        %2759 = vset.pattern.permute.xlu0 0
        %2760 = vperm.xlu0 %2759, %v2505
        %v2761 = vpop.permute.xlu0 %2760
        %2762 = vset.pattern.permute.xlu0 0
        %2763 = vperm.xlu0 %2762, %v2506
        %v2764 = vpop.permute.xlu0 %2763
        %2765 = vset.pattern.permute.xlu0 0
        %2766 = vperm.xlu0 %2765, %v2507
        %v2767 = vpop.permute.xlu0 %2766
        %2768 = vset.pattern.permute.xlu0 0
        %2769 = vperm.xlu0 %2768, %v2508
        %v2770 = vpop.permute.xlu0 %2769
        %2771 = vset.pattern.permute.xlu0 0
        %2772 = vperm.xlu0 %2771, %v2509
        %v2773 = vpop.permute.xlu0 %2772
        %2774 = vset.pattern.permute.xlu0 0
        %2775 = vperm.xlu0 %2774, %v2510
        %v2776 = vpop.permute.xlu0 %2775
        %2777 = vset.pattern.permute.xlu0 0
        %2778 = vperm.xlu0 %2777, %v2511
        %v2779 = vpop.permute.xlu0 %2778
        %2780 = vset.pattern.permute.xlu0 0
        %2781 = vperm.xlu0 %2780, %v2512
        %v2782 = vpop.permute.xlu0 %2781
        %2783 = vset.pattern.permute.xlu0 0
        %2784 = vperm.xlu0 %2783, %v2513
        %v2785 = vpop.permute.xlu0 %2784
        %2786 = vset.pattern.permute.xlu0 0
        %2787 = vperm.xlu0 %2786, %v2514
        %v2788 = vpop.permute.xlu0 %2787
        %2789 = vset.pattern.permute.xlu0 0
        %2790 = vperm.xlu0 %2789, %v2515
        %v2791 = vpop.permute.xlu0 %2790
        %2792 = vset.pattern.permute.xlu0 0
        %2793 = vperm.xlu0 %2792, %v2516
        %v2794 = vpop.permute.xlu0 %2793
        %2795 = vset.pattern.permute.xlu0 0
        %2796 = vperm.xlu0 %2795, %v2517
        %v2797 = vpop.permute.xlu0 %2796
        %2798 = vset.pattern.permute.xlu0 0
        %2799 = vperm.xlu0 %2798, %v2518
        %v2800 = vpop.permute.xlu0 %2799
        %2801 = vset.pattern.permute.xlu0 0
        %2802 = vperm.xlu0 %2801, %v2519
        %v2803 = vpop.permute.xlu0 %2802
        %2804 = vset.pattern.permute.xlu0 0
        %2805 = vperm.xlu0 %2804, %v2520
        %v2806 = vpop.permute.xlu0 %2805
        %2807 = vset.pattern.permute.xlu0 0
        %2808 = vperm.xlu0 %2807, %v2521
        %v2809 = vpop.permute.xlu0 %2808
        %2810 = vset.pattern.permute.xlu0 0
        %2811 = vperm.xlu0 %2810, %v2522
        %v2812 = vpop.permute.xlu0 %2811
        %2813 = vset.pattern.permute.xlu0 0
        %2814 = vperm.xlu0 %2813, %v2523
        %v2815 = vpop.permute.xlu0 %2814
        %v2816 = vperm.slane %v2626, %v1957
        %v2817 = vadd.s32 %v1957, 4294967288
        %v2818 = vperm.slane %v2629, %v2817
        %vm2819 = vcmask 130112
        %v2820 = vsel %vm2819, %v2818, %v2816
        %v2821 = vadd.s32 %v1957, 4294967280
        %v2822 = vperm.slane %v2632, %v2821
        %vm2823 = vcmask 195712
        %v2824 = vsel %vm2823, %v2822, %v2820
        %v2825 = vadd.s32 %v1957, 4294967272
        %v2826 = vperm.slane %v2635, %v2825
        %vm2827 = vcmask 261312
        %v2828 = vsel %vm2827, %v2826, %v2824
        %v2829 = vadd.s32 %v1957, 4294967264
        %v2830 = vperm.slane %v2638, %v2829
        %vm2831 = vcmask 326912
        %v2832 = vsel %vm2831, %v2830, %v2828
        %v2833 = vadd.s32 %v1957, 4294967256
        %v2834 = vperm.slane %v2641, %v2833
        %vm2835 = vcmask 392512
        %v2836 = vsel %vm2835, %v2834, %v2832
        %v2837 = vadd.s32 %v1957, 4294967248
        %v2838 = vperm.slane %v2644, %v2837
        %vm2839 = vcmask 458112
        %v2840 = vsel %vm2839, %v2838, %v2836
        %v2841 = vadd.s32 %v1957, 4294967240
        %v2842 = vperm.slane %v2647, %v2841
        %vm2843 = vcmask 523712
        %v2844 = vsel %vm2843, %v2842, %v2840
        %v2845 = vperm.slane %v2650, %v1957
        %v2846 = vperm.slane %v2653, %v2817
        %v2847 = vsel %vm2819, %v2846, %v2845
        %v2848 = vperm.slane %v2656, %v2821
        %v2849 = vsel %vm2823, %v2848, %v2847
        %v2850 = vperm.slane %v2659, %v2825
        %v2851 = vsel %vm2827, %v2850, %v2849
        %v2852 = vperm.slane %v2662, %v2829
        %v2853 = vsel %vm2831, %v2852, %v2851
        %v2854 = vperm.slane %v2665, %v2833
        %v2855 = vsel %vm2835, %v2854, %v2853
        %v2856 = vperm.slane %v2668, %v2837
        %v2857 = vsel %vm2839, %v2856, %v2855
        %v2858 = vperm.slane %v2671, %v2841
        %v2859 = vsel %vm2843, %v2858, %v2857
        %v2860 = vperm.slane %v2674, %v1957
        %v2861 = vperm.slane %v2677, %v2817
        %v2862 = vsel %vm2819, %v2861, %v2860
        %v2863 = vperm.slane %v2680, %v2821
        %v2864 = vsel %vm2823, %v2863, %v2862
        %v2865 = vperm.slane %v2683, %v2825
        %v2866 = vsel %vm2827, %v2865, %v2864
        %v2867 = vperm.slane %v2686, %v2829
        %v2868 = vsel %vm2831, %v2867, %v2866
        %v2869 = vperm.slane %v2689, %v2833
        %v2870 = vsel %vm2835, %v2869, %v2868
        %v2871 = vperm.slane %v2692, %v2837
        %v2872 = vsel %vm2839, %v2871, %v2870
        %v2873 = vperm.slane %v2695, %v2841
        %v2874 = vsel %vm2843, %v2873, %v2872
        %v2875 = vperm.slane %v2698, %v1957
        %v2876 = vperm.slane %v2701, %v2817
        %v2877 = vsel %vm2819, %v2876, %v2875
        %v2878 = vperm.slane %v2704, %v2821
        %v2879 = vsel %vm2823, %v2878, %v2877
        %v2880 = vperm.slane %v2707, %v2825
        %v2881 = vsel %vm2827, %v2880, %v2879
        %v2882 = vperm.slane %v2710, %v2829
        %v2883 = vsel %vm2831, %v2882, %v2881
        %v2884 = vperm.slane %v2713, %v2833
        %v2885 = vsel %vm2835, %v2884, %v2883
        %v2886 = vperm.slane %v2716, %v2837
        %v2887 = vsel %vm2839, %v2886, %v2885
        %v2888 = vperm.slane %v2719, %v2841
        %v2889 = vsel %vm2843, %v2888, %v2887
        %v2890 = vperm.slane %v2722, %v1957
        %v2891 = vperm.slane %v2725, %v2817
        %v2892 = vsel %vm2819, %v2891, %v2890
        %v2893 = vperm.slane %v2728, %v2821
        %v2894 = vsel %vm2823, %v2893, %v2892
        %v2895 = vperm.slane %v2731, %v2825
        %v2896 = vsel %vm2827, %v2895, %v2894
        %v2897 = vperm.slane %v2734, %v2829
        %v2898 = vsel %vm2831, %v2897, %v2896
        %v2899 = vperm.slane %v2737, %v2833
        %v2900 = vsel %vm2835, %v2899, %v2898
        %v2901 = vperm.slane %v2740, %v2837
        %v2902 = vsel %vm2839, %v2901, %v2900
        %v2903 = vperm.slane %v2743, %v2841
        %v2904 = vsel %vm2843, %v2903, %v2902
        %v2905 = vperm.slane %v2746, %v1957
        %v2906 = vperm.slane %v2749, %v2817
        %v2907 = vsel %vm2819, %v2906, %v2905
        %v2908 = vperm.slane %v2752, %v2821
        %v2909 = vsel %vm2823, %v2908, %v2907
        %v2910 = vperm.slane %v2755, %v2825
        %v2911 = vsel %vm2827, %v2910, %v2909
        %v2912 = vperm.slane %v2758, %v2829
        %v2913 = vsel %vm2831, %v2912, %v2911
        %v2914 = vperm.slane %v2761, %v2833
        %v2915 = vsel %vm2835, %v2914, %v2913
        %v2916 = vperm.slane %v2764, %v2837
        %v2917 = vsel %vm2839, %v2916, %v2915
        %v2918 = vperm.slane %v2767, %v2841
        %v2919 = vsel %vm2843, %v2918, %v2917
        %v2920 = vperm.slane %v2770, %v1957
        %v2921 = vperm.slane %v2773, %v2817
        %v2922 = vsel %vm2819, %v2921, %v2920
        %v2923 = vperm.slane %v2776, %v2821
        %v2924 = vsel %vm2823, %v2923, %v2922
        %v2925 = vperm.slane %v2779, %v2825
        %v2926 = vsel %vm2827, %v2925, %v2924
        %v2927 = vperm.slane %v2782, %v2829
        %v2928 = vsel %vm2831, %v2927, %v2926
        %v2929 = vperm.slane %v2785, %v2833
        %v2930 = vsel %vm2835, %v2929, %v2928
        %v2931 = vperm.slane %v2788, %v2837
        %v2932 = vsel %vm2839, %v2931, %v2930
        %v2933 = vperm.slane %v2791, %v2841
        %v2934 = vsel %vm2843, %v2933, %v2932
        %v2935 = vperm.slane %v2794, %v1957
        %v2936 = vperm.slane %v2797, %v2817
        %v2937 = vsel %vm2819, %v2936, %v2935
        %v2938 = vperm.slane %v2800, %v2821
        %v2939 = vsel %vm2823, %v2938, %v2937
        %v2940 = vperm.slane %v2803, %v2825
        %v2941 = vsel %vm2827, %v2940, %v2939
        %v2942 = vperm.slane %v2806, %v2829
        %v2943 = vsel %vm2831, %v2942, %v2941
        %v2944 = vperm.slane %v2809, %v2833
        %v2945 = vsel %vm2835, %v2944, %v2943
        %v2946 = vperm.slane %v2812, %v2837
        %v2947 = vsel %vm2839, %v2946, %v2945
        %v2948 = vperm.slane %v2815, %v2841
        %v2949 = vsel %vm2843, %v2948, %v2947
        %v2950 = vsel %vm1966, %v2859, %v2844
        %v2951 = vsel %vm1968, %v2874, %v2950
        %v2952 = vsel %vm1970, %v2889, %v2951
        %v2953 = vsel %vm1972, %v2904, %v2952
        %v2954 = vsel %vm1974, %v2919, %v2953
        %v2955 = vsel %vm1976, %v2934, %v2954
        %v2956 = vsel %vm1978, %v2949, %v2955
        %v2958 = vsel %vm2534, %v2956, -inf
        %v2959 = vsel %vm1980, %v2559, -inf
        %2960 = vmax.xlane.f32.xlu0 %v2959
        %v2961 = vpop.xlane.xlu0 %2960
        %vm2962 = vcmask 523264
        %v2963 = vsel %vm2962, %v2958, -inf
        %2964 = vmax.xlane.f32.xlu0 %v2963
        %v2965 = vpop.xlane.xlu0 %2964
        %v2966 = vsub.f32 %v2559, %v2961
        %v2967 = vmul.f32 %v2966, 1.442695
        %v2968 = vpow.pop %v2967
        %v2969 = vsub.f32 %v2958, %v2965
        %v2970 = vmul.f32 %v2969, 1.442695
        %v2971 = vpow.pop %v2970
        %v2972 = vsel %vm1980, %v2968, 0.0
        %2973 = vadd.xlane.f32.xlu0 %v2972
        %v2974 = vpop.xlane.xlu0 %2973
        %v2975 = vsel %vm2962, %v2971, 0.0
        %2976 = vadd.xlane.f32.xlu0 %v2975
        %v2977 = vpop.xlane.xlu0 %2976
        %v2978 = vrcp.pop %v2974
        %v2979 = vmul.f32 %v2974, %v2978
        %v2980 = vsub.f32 2.0, %v2979
        %v2981 = vmul.f32 %v2978, %v2980
        %v2982 = vmul.f32 %v2968, %v2981
        %v2983 = vrcp.pop %v2977
        %v2984 = vmul.f32 %v2977, %v2983
        %v2985 = vsub.f32 2.0, %v2984
        %v2986 = vmul.f32 %v2983, %v2985
        %v2987 = vmul.f32 %v2971, %v2986
        %v2988 = vmax.f32 %v2961, %v2965
        %v2989 = vsub.f32 %v2961, %v2988
        %v2990 = vmul.f32 %v2989, 1.442695
        %v2991 = vpow.pop %v2990
        %v2992 = vsub.f32 %v2965, %v2988
        %v2993 = vmul.f32 %v2992, 1.442695
        %v2994 = vpow.pop %v2993
        %v2995 = vmul.f32 %v2991, %v2974
        %v2996 = vmul.f32 %v2994, %v2977
        %v2997 = vadd.f32 %v2995, %v2996
        %v2998 = vrcp.pop %v2997
        %v2999 = vmul.f32 %v2997, %v2998
        %v3000 = vsub.f32 2.0, %v2999
        %v3001 = vmul.f32 %v2998, %v3000
        %v3002 = vmul.f32 %v2991, %v3001
        %v3003 = vmul.f32 %v2968, %v3002
        %v3004 = vmul.f32 %v2994, %v3001
        %v3005 = vmul.f32 %v2971, %v3004
        %v3006 = vperm.slane %v3003, 0
        %v3007 = vlaneseq
        %v3008 = vshrl.u32 %v3007, 7
        %3010 = vset.pattern.permute.xlu0 %v3008
        %3011 = vperm.xlu0 %3010, %v3006
        %v3012 = vpop.permute.xlu0 %3011
        %v3013 = vperm.slane %v3003, 1
        %v3014 = vlaneseq
        %v3015 = vshrl.u32 %v3014, 7
        %3017 = vset.pattern.permute.xlu0 %v3015
        %3018 = vperm.xlu0 %3017, %v3013
        %v3019 = vpop.permute.xlu0 %3018
        %v3020 = vperm.slane %v3003, 2
        %v3021 = vlaneseq
        %v3022 = vshrl.u32 %v3021, 7
        %3024 = vset.pattern.permute.xlu0 %v3022
        %3025 = vperm.xlu0 %3024, %v3020
        %v3026 = vpop.permute.xlu0 %3025
        %v3027 = vperm.slane %v3003, 3
        %v3028 = vlaneseq
        %v3029 = vshrl.u32 %v3028, 7
        %3031 = vset.pattern.permute.xlu0 %v3029
        %3032 = vperm.xlu0 %3031, %v3027
        %v3033 = vpop.permute.xlu0 %3032
        %v3034 = vperm.slane %v3003, 4
        %v3035 = vlaneseq
        %v3036 = vshrl.u32 %v3035, 7
        %3038 = vset.pattern.permute.xlu0 %v3036
        %3039 = vperm.xlu0 %3038, %v3034
        %v3040 = vpop.permute.xlu0 %3039
        %v3041 = vperm.slane %v3003, 5
        %v3042 = vlaneseq
        %v3043 = vshrl.u32 %v3042, 7
        %3045 = vset.pattern.permute.xlu0 %v3043
        %3046 = vperm.xlu0 %3045, %v3041
        %v3047 = vpop.permute.xlu0 %3046
        %v3048 = vperm.slane %v3003, 6
        %v3049 = vlaneseq
        %v3050 = vshrl.u32 %v3049, 7
        %3052 = vset.pattern.permute.xlu0 %v3050
        %3053 = vperm.xlu0 %3052, %v3048
        %v3054 = vpop.permute.xlu0 %3053
        %v3055 = vperm.slane %v3003, 7
        %v3056 = vlaneseq
        %v3057 = vshrl.u32 %v3056, 7
        %3059 = vset.pattern.permute.xlu0 %v3057
        %3060 = vperm.xlu0 %3059, %v3055
        %v3061 = vpop.permute.xlu0 %3060
        %v3062 = vmul.f32 %v3012, %v729
        %v3063 = vmul.f32 %v3019, %v730
        %v3064 = vmul.f32 %v3026, %v731
        %v3065 = vmul.f32 %v3033, %v732
        %v3066 = vmul.f32 %v3040, %v733
        %v3067 = vmul.f32 %v3047, %v734
        %v3068 = vmul.f32 %v3054, %v735
        %v3069 = vmul.f32 %v3061, %v736
        %v3070 = vsel %vm664, %v3062, 0.0
        %v3071 = vrot.slane %v3070, 4
        %v3072 = vadd.f32 %v3070, %v3071
        %v3073 = vrot.slane %v3072, 2
        %v3074 = vadd.f32 %v3072, %v3073
        %v3075 = vrot.slane %v3074, 1
        %v3076 = vadd.f32 %v3074, %v3075
        %v3077 = vsel %vm664, %v3063, 0.0
        %v3078 = vrot.slane %v3077, 4
        %v3079 = vadd.f32 %v3077, %v3078
        %v3080 = vrot.slane %v3079, 2
        %v3081 = vadd.f32 %v3079, %v3080
        %v3082 = vrot.slane %v3081, 1
        %v3083 = vadd.f32 %v3081, %v3082
        %v3084 = vsel %vm664, %v3064, 0.0
        %v3085 = vrot.slane %v3084, 4
        %v3086 = vadd.f32 %v3084, %v3085
        %v3087 = vrot.slane %v3086, 2
        %v3088 = vadd.f32 %v3086, %v3087
        %v3089 = vrot.slane %v3088, 1
        %v3090 = vadd.f32 %v3088, %v3089
        %v3091 = vsel %vm664, %v3065, 0.0
        %v3092 = vrot.slane %v3091, 4
        %v3093 = vadd.f32 %v3091, %v3092
        %v3094 = vrot.slane %v3093, 2
        %v3095 = vadd.f32 %v3093, %v3094
        %v3096 = vrot.slane %v3095, 1
        %v3097 = vadd.f32 %v3095, %v3096
        %v3098 = vsel %vm664, %v3066, 0.0
        %v3099 = vrot.slane %v3098, 4
        %v3100 = vadd.f32 %v3098, %v3099
        %v3101 = vrot.slane %v3100, 2
        %v3102 = vadd.f32 %v3100, %v3101
        %v3103 = vrot.slane %v3102, 1
        %v3104 = vadd.f32 %v3102, %v3103
        %v3105 = vsel %vm664, %v3067, 0.0
        %v3106 = vrot.slane %v3105, 4
        %v3107 = vadd.f32 %v3105, %v3106
        %v3108 = vrot.slane %v3107, 2
        %v3109 = vadd.f32 %v3107, %v3108
        %v3110 = vrot.slane %v3109, 1
        %v3111 = vadd.f32 %v3109, %v3110
        %v3112 = vsel %vm664, %v3068, 0.0
        %v3113 = vrot.slane %v3112, 4
        %v3114 = vadd.f32 %v3112, %v3113
        %v3115 = vrot.slane %v3114, 2
        %v3116 = vadd.f32 %v3114, %v3115
        %v3117 = vrot.slane %v3116, 1
        %v3118 = vadd.f32 %v3116, %v3117
        %v3119 = vsel %vm664, %v3069, 0.0
        %v3120 = vrot.slane %v3119, 4
        %v3121 = vadd.f32 %v3119, %v3120
        %v3122 = vrot.slane %v3121, 2
        %v3123 = vadd.f32 %v3121, %v3122
        %v3124 = vrot.slane %v3123, 1
        %v3125 = vadd.f32 %v3123, %v3124
        %v3126 = vperm.slane %v3005, 0
        %v3127 = vlaneseq
        %v3128 = vshrl.u32 %v3127, 7
        %3130 = vset.pattern.permute.xlu0 %v3128
        %3131 = vperm.xlu0 %3130, %v3126
        %v3132 = vpop.permute.xlu0 %3131
        %v3133 = vlaneseq
        %v3134 = vshrl.u32 %v3133, 7
        %v3135 = vadd.s32 %v3134, 8
        %3136 = vset.pattern.permute.xlu0 %v3135
        %3137 = vperm.xlu0 %3136, %v3126
        %v3138 = vpop.permute.xlu0 %3137
        %v3139 = vlaneseq
        %v3140 = vshrl.u32 %v3139, 7
        %v3141 = vadd.s32 %v3140, 16
        %3142 = vset.pattern.permute.xlu0 %v3141
        %3143 = vperm.xlu0 %3142, %v3126
        %v3144 = vpop.permute.xlu0 %3143
        %v3145 = vlaneseq
        %v3146 = vshrl.u32 %v3145, 7
        %v3147 = vadd.s32 %v3146, 24
        %3148 = vset.pattern.permute.xlu0 %v3147
        %3149 = vperm.xlu0 %3148, %v3126
        %v3150 = vpop.permute.xlu0 %3149
        %v3151 = vlaneseq
        %v3152 = vshrl.u32 %v3151, 7
        %v3153 = vadd.s32 %v3152, 32
        %3154 = vset.pattern.permute.xlu0 %v3153
        %3155 = vperm.xlu0 %3154, %v3126
        %v3156 = vpop.permute.xlu0 %3155
        %v3157 = vlaneseq
        %v3158 = vshrl.u32 %v3157, 7
        %v3159 = vadd.s32 %v3158, 40
        %3160 = vset.pattern.permute.xlu0 %v3159
        %3161 = vperm.xlu0 %3160, %v3126
        %v3162 = vpop.permute.xlu0 %3161
        %v3163 = vlaneseq
        %v3164 = vshrl.u32 %v3163, 7
        %v3165 = vadd.s32 %v3164, 48
        %3166 = vset.pattern.permute.xlu0 %v3165
        %3167 = vperm.xlu0 %3166, %v3126
        %v3168 = vpop.permute.xlu0 %3167
        %v3169 = vlaneseq
        %v3170 = vshrl.u32 %v3169, 7
        %v3171 = vadd.s32 %v3170, 56
        %3172 = vset.pattern.permute.xlu0 %v3171
        %3173 = vperm.xlu0 %3172, %v3126
        %v3174 = vpop.permute.xlu0 %3173
        %v3175 = vperm.slane %v3005, 1
        %v3176 = vlaneseq
        %v3177 = vshrl.u32 %v3176, 7
        %3179 = vset.pattern.permute.xlu0 %v3177
        %3180 = vperm.xlu0 %3179, %v3175
        %v3181 = vpop.permute.xlu0 %3180
        %v3182 = vlaneseq
        %v3183 = vshrl.u32 %v3182, 7
        %v3184 = vadd.s32 %v3183, 8
        %3185 = vset.pattern.permute.xlu0 %v3184
        %3186 = vperm.xlu0 %3185, %v3175
        %v3187 = vpop.permute.xlu0 %3186
        %v3188 = vlaneseq
        %v3189 = vshrl.u32 %v3188, 7
        %v3190 = vadd.s32 %v3189, 16
        %3191 = vset.pattern.permute.xlu0 %v3190
        %3192 = vperm.xlu0 %3191, %v3175
        %v3193 = vpop.permute.xlu0 %3192
        %v3194 = vlaneseq
        %v3195 = vshrl.u32 %v3194, 7
        %v3196 = vadd.s32 %v3195, 24
        %3197 = vset.pattern.permute.xlu0 %v3196
        %3198 = vperm.xlu0 %3197, %v3175
        %v3199 = vpop.permute.xlu0 %3198
        %v3200 = vlaneseq
        %v3201 = vshrl.u32 %v3200, 7
        %v3202 = vadd.s32 %v3201, 32
        %3203 = vset.pattern.permute.xlu0 %v3202
        %3204 = vperm.xlu0 %3203, %v3175
        %v3205 = vpop.permute.xlu0 %3204
        %v3206 = vlaneseq
        %v3207 = vshrl.u32 %v3206, 7
        %v3208 = vadd.s32 %v3207, 40
        %3209 = vset.pattern.permute.xlu0 %v3208
        %3210 = vperm.xlu0 %3209, %v3175
        %v3211 = vpop.permute.xlu0 %3210
        %v3212 = vlaneseq
        %v3213 = vshrl.u32 %v3212, 7
        %v3214 = vadd.s32 %v3213, 48
        %3215 = vset.pattern.permute.xlu0 %v3214
        %3216 = vperm.xlu0 %3215, %v3175
        %v3217 = vpop.permute.xlu0 %3216
        %v3218 = vlaneseq
        %v3219 = vshrl.u32 %v3218, 7
        %v3220 = vadd.s32 %v3219, 56
        %3221 = vset.pattern.permute.xlu0 %v3220
        %3222 = vperm.xlu0 %3221, %v3175
        %v3223 = vpop.permute.xlu0 %3222
        %v3224 = vperm.slane %v3005, 2
        %v3225 = vlaneseq
        %v3226 = vshrl.u32 %v3225, 7
        %3228 = vset.pattern.permute.xlu0 %v3226
        %3229 = vperm.xlu0 %3228, %v3224
        %v3230 = vpop.permute.xlu0 %3229
        %v3231 = vlaneseq
        %v3232 = vshrl.u32 %v3231, 7
        %v3233 = vadd.s32 %v3232, 8
        %3234 = vset.pattern.permute.xlu0 %v3233
        %3235 = vperm.xlu0 %3234, %v3224
        %v3236 = vpop.permute.xlu0 %3235
        %v3237 = vlaneseq
        %v3238 = vshrl.u32 %v3237, 7
        %v3239 = vadd.s32 %v3238, 16
        %3240 = vset.pattern.permute.xlu0 %v3239
        %3241 = vperm.xlu0 %3240, %v3224
        %v3242 = vpop.permute.xlu0 %3241
        %v3243 = vlaneseq
        %v3244 = vshrl.u32 %v3243, 7
        %v3245 = vadd.s32 %v3244, 24
        %3246 = vset.pattern.permute.xlu0 %v3245
        %3247 = vperm.xlu0 %3246, %v3224
        %v3248 = vpop.permute.xlu0 %3247
        %v3249 = vlaneseq
        %v3250 = vshrl.u32 %v3249, 7
        %v3251 = vadd.s32 %v3250, 32
        %3252 = vset.pattern.permute.xlu0 %v3251
        %3253 = vperm.xlu0 %3252, %v3224
        %v3254 = vpop.permute.xlu0 %3253
        %v3255 = vlaneseq
        %v3256 = vshrl.u32 %v3255, 7
        %v3257 = vadd.s32 %v3256, 40
        %3258 = vset.pattern.permute.xlu0 %v3257
        %3259 = vperm.xlu0 %3258, %v3224
        %v3260 = vpop.permute.xlu0 %3259
        %v3261 = vlaneseq
        %v3262 = vshrl.u32 %v3261, 7
        %v3263 = vadd.s32 %v3262, 48
        %3264 = vset.pattern.permute.xlu0 %v3263
        %3265 = vperm.xlu0 %3264, %v3224
        %v3266 = vpop.permute.xlu0 %3265
        %v3267 = vlaneseq
        %v3268 = vshrl.u32 %v3267, 7
        %v3269 = vadd.s32 %v3268, 56
        %3270 = vset.pattern.permute.xlu0 %v3269
        %3271 = vperm.xlu0 %3270, %v3224
        %v3272 = vpop.permute.xlu0 %3271
        %v3273 = vperm.slane %v3005, 3
        %v3274 = vlaneseq
        %v3275 = vshrl.u32 %v3274, 7
        %3277 = vset.pattern.permute.xlu0 %v3275
        %3278 = vperm.xlu0 %3277, %v3273
        %v3279 = vpop.permute.xlu0 %3278
        %v3280 = vlaneseq
        %v3281 = vshrl.u32 %v3280, 7
        %v3282 = vadd.s32 %v3281, 8
        %3283 = vset.pattern.permute.xlu0 %v3282
        %3284 = vperm.xlu0 %3283, %v3273
        %v3285 = vpop.permute.xlu0 %3284
        %v3286 = vlaneseq
        %v3287 = vshrl.u32 %v3286, 7
        %v3288 = vadd.s32 %v3287, 16
        %3289 = vset.pattern.permute.xlu0 %v3288
        %3290 = vperm.xlu0 %3289, %v3273
        %v3291 = vpop.permute.xlu0 %3290
        %v3292 = vlaneseq
        %v3293 = vshrl.u32 %v3292, 7
        %v3294 = vadd.s32 %v3293, 24
        %3295 = vset.pattern.permute.xlu0 %v3294
        %3296 = vperm.xlu0 %3295, %v3273
        %v3297 = vpop.permute.xlu0 %3296
        %v3298 = vlaneseq
        %v3299 = vshrl.u32 %v3298, 7
        %v3300 = vadd.s32 %v3299, 32
        %3301 = vset.pattern.permute.xlu0 %v3300
        %3302 = vperm.xlu0 %3301, %v3273
        %v3303 = vpop.permute.xlu0 %3302
        %v3304 = vlaneseq
        %v3305 = vshrl.u32 %v3304, 7
        %v3306 = vadd.s32 %v3305, 40
        %3307 = vset.pattern.permute.xlu0 %v3306
        %3308 = vperm.xlu0 %3307, %v3273
        %v3309 = vpop.permute.xlu0 %3308
        %v3310 = vlaneseq
        %v3311 = vshrl.u32 %v3310, 7
        %v3312 = vadd.s32 %v3311, 48
        %3313 = vset.pattern.permute.xlu0 %v3312
        %3314 = vperm.xlu0 %3313, %v3273
        %v3315 = vpop.permute.xlu0 %3314
        %v3316 = vlaneseq
        %v3317 = vshrl.u32 %v3316, 7
        %v3318 = vadd.s32 %v3317, 56
        %3319 = vset.pattern.permute.xlu0 %v3318
        %3320 = vperm.xlu0 %3319, %v3273
        %v3321 = vpop.permute.xlu0 %3320
        %v3322 = vperm.slane %v3005, 4
        %v3323 = vlaneseq
        %v3324 = vshrl.u32 %v3323, 7
        %3326 = vset.pattern.permute.xlu0 %v3324
        %3327 = vperm.xlu0 %3326, %v3322
        %v3328 = vpop.permute.xlu0 %3327
        %v3329 = vlaneseq
        %v3330 = vshrl.u32 %v3329, 7
        %v3331 = vadd.s32 %v3330, 8
        %3332 = vset.pattern.permute.xlu0 %v3331
        %3333 = vperm.xlu0 %3332, %v3322
        %v3334 = vpop.permute.xlu0 %3333
        %v3335 = vlaneseq
        %v3336 = vshrl.u32 %v3335, 7
        %v3337 = vadd.s32 %v3336, 16
        %3338 = vset.pattern.permute.xlu0 %v3337
        %3339 = vperm.xlu0 %3338, %v3322
        %v3340 = vpop.permute.xlu0 %3339
        %v3341 = vlaneseq
        %v3342 = vshrl.u32 %v3341, 7
        %v3343 = vadd.s32 %v3342, 24
        %3344 = vset.pattern.permute.xlu0 %v3343
        %3345 = vperm.xlu0 %3344, %v3322
        %v3346 = vpop.permute.xlu0 %3345
        %v3347 = vlaneseq
        %v3348 = vshrl.u32 %v3347, 7
        %v3349 = vadd.s32 %v3348, 32
        %3350 = vset.pattern.permute.xlu0 %v3349
        %3351 = vperm.xlu0 %3350, %v3322
        %v3352 = vpop.permute.xlu0 %3351
        %v3353 = vlaneseq
        %v3354 = vshrl.u32 %v3353, 7
        %v3355 = vadd.s32 %v3354, 40
        %3356 = vset.pattern.permute.xlu0 %v3355
        %3357 = vperm.xlu0 %3356, %v3322
        %v3358 = vpop.permute.xlu0 %3357
        %v3359 = vlaneseq
        %v3360 = vshrl.u32 %v3359, 7
        %v3361 = vadd.s32 %v3360, 48
        %3362 = vset.pattern.permute.xlu0 %v3361
        %3363 = vperm.xlu0 %3362, %v3322
        %v3364 = vpop.permute.xlu0 %3363
        %v3365 = vlaneseq
        %v3366 = vshrl.u32 %v3365, 7
        %v3367 = vadd.s32 %v3366, 56
        %3368 = vset.pattern.permute.xlu0 %v3367
        %3369 = vperm.xlu0 %3368, %v3322
        %v3370 = vpop.permute.xlu0 %3369
        %v3371 = vperm.slane %v3005, 5
        %v3372 = vlaneseq
        %v3373 = vshrl.u32 %v3372, 7
        %3375 = vset.pattern.permute.xlu0 %v3373
        %3376 = vperm.xlu0 %3375, %v3371
        %v3377 = vpop.permute.xlu0 %3376
        %v3378 = vlaneseq
        %v3379 = vshrl.u32 %v3378, 7
        %v3380 = vadd.s32 %v3379, 8
        %3381 = vset.pattern.permute.xlu0 %v3380
        %3382 = vperm.xlu0 %3381, %v3371
        %v3383 = vpop.permute.xlu0 %3382
        %v3384 = vlaneseq
        %v3385 = vshrl.u32 %v3384, 7
        %v3386 = vadd.s32 %v3385, 16
        %3387 = vset.pattern.permute.xlu0 %v3386
        %3388 = vperm.xlu0 %3387, %v3371
        %v3389 = vpop.permute.xlu0 %3388
        %v3390 = vlaneseq
        %v3391 = vshrl.u32 %v3390, 7
        %v3392 = vadd.s32 %v3391, 24
        %3393 = vset.pattern.permute.xlu0 %v3392
        %3394 = vperm.xlu0 %3393, %v3371
        %v3395 = vpop.permute.xlu0 %3394
        %v3396 = vlaneseq
        %v3397 = vshrl.u32 %v3396, 7
        %v3398 = vadd.s32 %v3397, 32
        %3399 = vset.pattern.permute.xlu0 %v3398
        %3400 = vperm.xlu0 %3399, %v3371
        %v3401 = vpop.permute.xlu0 %3400
        %v3402 = vlaneseq
        %v3403 = vshrl.u32 %v3402, 7
        %v3404 = vadd.s32 %v3403, 40
        %3405 = vset.pattern.permute.xlu0 %v3404
        %3406 = vperm.xlu0 %3405, %v3371
        %v3407 = vpop.permute.xlu0 %3406
        %v3408 = vlaneseq
        %v3409 = vshrl.u32 %v3408, 7
        %v3410 = vadd.s32 %v3409, 48
        %3411 = vset.pattern.permute.xlu0 %v3410
        %3412 = vperm.xlu0 %3411, %v3371
        %v3413 = vpop.permute.xlu0 %3412
        %v3414 = vlaneseq
        %v3415 = vshrl.u32 %v3414, 7
        %v3416 = vadd.s32 %v3415, 56
        %3417 = vset.pattern.permute.xlu0 %v3416
        %3418 = vperm.xlu0 %3417, %v3371
        %v3419 = vpop.permute.xlu0 %3418
        %v3420 = vperm.slane %v3005, 6
        %v3421 = vlaneseq
        %v3422 = vshrl.u32 %v3421, 7
        %3424 = vset.pattern.permute.xlu0 %v3422
        %3425 = vperm.xlu0 %3424, %v3420
        %v3426 = vpop.permute.xlu0 %3425
        %v3427 = vlaneseq
        %v3428 = vshrl.u32 %v3427, 7
        %v3429 = vadd.s32 %v3428, 8
        %3430 = vset.pattern.permute.xlu0 %v3429
        %3431 = vperm.xlu0 %3430, %v3420
        %v3432 = vpop.permute.xlu0 %3431
        %v3433 = vlaneseq
        %v3434 = vshrl.u32 %v3433, 7
        %v3435 = vadd.s32 %v3434, 16
        %3436 = vset.pattern.permute.xlu0 %v3435
        %3437 = vperm.xlu0 %3436, %v3420
        %v3438 = vpop.permute.xlu0 %3437
        %v3439 = vlaneseq
        %v3440 = vshrl.u32 %v3439, 7
        %v3441 = vadd.s32 %v3440, 24
        %3442 = vset.pattern.permute.xlu0 %v3441
        %3443 = vperm.xlu0 %3442, %v3420
        %v3444 = vpop.permute.xlu0 %3443
        %v3445 = vlaneseq
        %v3446 = vshrl.u32 %v3445, 7
        %v3447 = vadd.s32 %v3446, 32
        %3448 = vset.pattern.permute.xlu0 %v3447
        %3449 = vperm.xlu0 %3448, %v3420
        %v3450 = vpop.permute.xlu0 %3449
        %v3451 = vlaneseq
        %v3452 = vshrl.u32 %v3451, 7
        %v3453 = vadd.s32 %v3452, 40
        %3454 = vset.pattern.permute.xlu0 %v3453
        %3455 = vperm.xlu0 %3454, %v3420
        %v3456 = vpop.permute.xlu0 %3455
        %v3457 = vlaneseq
        %v3458 = vshrl.u32 %v3457, 7
        %v3459 = vadd.s32 %v3458, 48
        %3460 = vset.pattern.permute.xlu0 %v3459
        %3461 = vperm.xlu0 %3460, %v3420
        %v3462 = vpop.permute.xlu0 %3461
        %v3463 = vlaneseq
        %v3464 = vshrl.u32 %v3463, 7
        %v3465 = vadd.s32 %v3464, 56
        %3466 = vset.pattern.permute.xlu0 %v3465
        %3467 = vperm.xlu0 %3466, %v3420
        %v3468 = vpop.permute.xlu0 %3467
        %v3469 = vperm.slane %v3005, 7
        %v3470 = vlaneseq
        %v3471 = vshrl.u32 %v3470, 7
        %3473 = vset.pattern.permute.xlu0 %v3471
        %3474 = vperm.xlu0 %3473, %v3469
        %v3475 = vpop.permute.xlu0 %3474
        %v3476 = vlaneseq
        %v3477 = vshrl.u32 %v3476, 7
        %v3478 = vadd.s32 %v3477, 8
        %3479 = vset.pattern.permute.xlu0 %v3478
        %3480 = vperm.xlu0 %3479, %v3469
        %v3481 = vpop.permute.xlu0 %3480
        %v3482 = vlaneseq
        %v3483 = vshrl.u32 %v3482, 7
        %v3484 = vadd.s32 %v3483, 16
        %3485 = vset.pattern.permute.xlu0 %v3484
        %3486 = vperm.xlu0 %3485, %v3469
        %v3487 = vpop.permute.xlu0 %3486
        %v3488 = vlaneseq
        %v3489 = vshrl.u32 %v3488, 7
        %v3490 = vadd.s32 %v3489, 24
        %3491 = vset.pattern.permute.xlu0 %v3490
        %3492 = vperm.xlu0 %3491, %v3469
        %v3493 = vpop.permute.xlu0 %3492
        %v3494 = vlaneseq
        %v3495 = vshrl.u32 %v3494, 7
        %v3496 = vadd.s32 %v3495, 32
        %3497 = vset.pattern.permute.xlu0 %v3496
        %3498 = vperm.xlu0 %3497, %v3469
        %v3499 = vpop.permute.xlu0 %3498
        %v3500 = vlaneseq
        %v3501 = vshrl.u32 %v3500, 7
        %v3502 = vadd.s32 %v3501, 40
        %3503 = vset.pattern.permute.xlu0 %v3502
        %3504 = vperm.xlu0 %3503, %v3469
        %v3505 = vpop.permute.xlu0 %3504
        %v3506 = vlaneseq
        %v3507 = vshrl.u32 %v3506, 7
        %v3508 = vadd.s32 %v3507, 48
        %3509 = vset.pattern.permute.xlu0 %v3508
        %3510 = vperm.xlu0 %3509, %v3469
        %v3511 = vpop.permute.xlu0 %3510
        %v3512 = vlaneseq
        %v3513 = vshrl.u32 %v3512, 7
        %v3514 = vadd.s32 %v3513, 56
        %3515 = vset.pattern.permute.xlu0 %v3514
        %3516 = vperm.xlu0 %3515, %v3469
        %v3517 = vpop.permute.xlu0 %3516
        %v3518 = vmul.f32 %v3132, %v894
        %v3519 = vmul.f32 %v3138, %v895
        %v3520 = vmul.f32 %v3144, %v896
        %v3521 = vmul.f32 %v3150, %v897
        %v3522 = vmul.f32 %v3156, %v898
        %v3523 = vmul.f32 %v3162, %v899
        %v3524 = vmul.f32 %v3168, %v900
        %v3525 = vmul.f32 %v3174, %v901
        %v3526 = vmul.f32 %v3181, %v902
        %v3527 = vmul.f32 %v3187, %v903
        %v3528 = vmul.f32 %v3193, %v904
        %v3529 = vmul.f32 %v3199, %v905
        %v3530 = vmul.f32 %v3205, %v906
        %v3531 = vmul.f32 %v3211, %v907
        %v3532 = vmul.f32 %v3217, %v908
        %v3533 = vmul.f32 %v3223, %v909
        %v3534 = vmul.f32 %v3230, %v910
        %v3535 = vmul.f32 %v3236, %v911
        %v3536 = vmul.f32 %v3242, %v912
        %v3537 = vmul.f32 %v3248, %v913
        %v3538 = vmul.f32 %v3254, %v914
        %v3539 = vmul.f32 %v3260, %v915
        %v3540 = vmul.f32 %v3266, %v916
        %v3541 = vmul.f32 %v3272, %v917
        %v3542 = vmul.f32 %v3279, %v918
        %v3543 = vmul.f32 %v3285, %v919
        %v3544 = vmul.f32 %v3291, %v920
        %v3545 = vmul.f32 %v3297, %v921
        %v3546 = vmul.f32 %v3303, %v922
        %v3547 = vmul.f32 %v3309, %v923
        %v3548 = vmul.f32 %v3315, %v924
        %v3549 = vmul.f32 %v3321, %v925
        %v3550 = vmul.f32 %v3328, %v926
        %v3551 = vmul.f32 %v3334, %v927
        %v3552 = vmul.f32 %v3340, %v928
        %v3553 = vmul.f32 %v3346, %v929
        %v3554 = vmul.f32 %v3352, %v930
        %v3555 = vmul.f32 %v3358, %v931
        %v3556 = vmul.f32 %v3364, %v932
        %v3557 = vmul.f32 %v3370, %v933
        %v3558 = vmul.f32 %v3377, %v934
        %v3559 = vmul.f32 %v3383, %v935
        %v3560 = vmul.f32 %v3389, %v936
        %v3561 = vmul.f32 %v3395, %v937
        %v3562 = vmul.f32 %v3401, %v938
        %v3563 = vmul.f32 %v3407, %v939
        %v3564 = vmul.f32 %v3413, %v940
        %v3565 = vmul.f32 %v3419, %v941
        %v3566 = vmul.f32 %v3426, %v942
        %v3567 = vmul.f32 %v3432, %v943
        %v3568 = vmul.f32 %v3438, %v944
        %v3569 = vmul.f32 %v3444, %v945
        %v3570 = vmul.f32 %v3450, %v946
        %v3571 = vmul.f32 %v3456, %v947
        %v3572 = vmul.f32 %v3462, %v948
        %v3573 = vmul.f32 %v3468, %v949
        %v3574 = vmul.f32 %v3475, %v950
        %v3575 = vmul.f32 %v3481, %v951
        %v3576 = vmul.f32 %v3487, %v952
        %v3577 = vmul.f32 %v3493, %v953
        %v3578 = vmul.f32 %v3499, %v954
        %v3579 = vmul.f32 %v3505, %v955
        %v3580 = vmul.f32 %v3511, %v956
        %v3581 = vmul.f32 %v3517, %v957
        %v3582 = vsel %vm664, %v3518, 0.0
        %v3583 = vsel %vm664, %v3519, 0.0
        %v3584 = vadd.f32 %v3582, %v3583
        %v3585 = vsel %vm664, %v3520, 0.0
        %v3586 = vadd.f32 %v3584, %v3585
        %v3587 = vsel %vm664, %v3521, 0.0
        %v3588 = vadd.f32 %v3586, %v3587
        %v3589 = vsel %vm664, %v3522, 0.0
        %v3590 = vadd.f32 %v3588, %v3589
        %v3591 = vsel %vm664, %v3523, 0.0
        %v3592 = vadd.f32 %v3590, %v3591
        %v3593 = vsel %vm664, %v3524, 0.0
        %v3594 = vadd.f32 %v3592, %v3593
        %v3595 = vsel %vm664, %v3525, 0.0
        %v3596 = vadd.f32 %v3594, %v3595
        %v3597 = vrot.slane %v3596, 4
        %v3598 = vadd.f32 %v3596, %v3597
        %v3599 = vrot.slane %v3598, 2
        %v3600 = vadd.f32 %v3598, %v3599
        %v3601 = vrot.slane %v3600, 1
        %v3602 = vadd.f32 %v3600, %v3601
        %v3603 = vsel %vm664, %v3526, 0.0
        %v3604 = vsel %vm664, %v3527, 0.0
        %v3605 = vadd.f32 %v3603, %v3604
        %v3606 = vsel %vm664, %v3528, 0.0
        %v3607 = vadd.f32 %v3605, %v3606
        %v3608 = vsel %vm664, %v3529, 0.0
        %v3609 = vadd.f32 %v3607, %v3608
        %v3610 = vsel %vm664, %v3530, 0.0
        %v3611 = vadd.f32 %v3609, %v3610
        %v3612 = vsel %vm664, %v3531, 0.0
        %v3613 = vadd.f32 %v3611, %v3612
        %v3614 = vsel %vm664, %v3532, 0.0
        %v3615 = vadd.f32 %v3613, %v3614
        %v3616 = vsel %vm664, %v3533, 0.0
        %v3617 = vadd.f32 %v3615, %v3616
        %v3618 = vrot.slane %v3617, 4
        %v3619 = vadd.f32 %v3617, %v3618
        %v3620 = vrot.slane %v3619, 2
        %v3621 = vadd.f32 %v3619, %v3620
        %v3622 = vrot.slane %v3621, 1
        %v3623 = vadd.f32 %v3621, %v3622
        %v3624 = vsel %vm664, %v3534, 0.0
        %v3625 = vsel %vm664, %v3535, 0.0
        %v3626 = vadd.f32 %v3624, %v3625
        %v3627 = vsel %vm664, %v3536, 0.0
        %v3628 = vadd.f32 %v3626, %v3627
        %v3629 = vsel %vm664, %v3537, 0.0
        %v3630 = vadd.f32 %v3628, %v3629
        %v3631 = vsel %vm664, %v3538, 0.0
        %v3632 = vadd.f32 %v3630, %v3631
        %v3633 = vsel %vm664, %v3539, 0.0
        %v3634 = vadd.f32 %v3632, %v3633
        %v3635 = vsel %vm664, %v3540, 0.0
        %v3636 = vadd.f32 %v3634, %v3635
        %v3637 = vsel %vm664, %v3541, 0.0
        %v3638 = vadd.f32 %v3636, %v3637
        %v3639 = vrot.slane %v3638, 4
        %v3640 = vadd.f32 %v3638, %v3639
        %v3641 = vrot.slane %v3640, 2
        %v3642 = vadd.f32 %v3640, %v3641
        %v3643 = vrot.slane %v3642, 1
        %v3644 = vadd.f32 %v3642, %v3643
        %v3645 = vsel %vm664, %v3542, 0.0
        %v3646 = vsel %vm664, %v3543, 0.0
        %v3647 = vadd.f32 %v3645, %v3646
        %v3648 = vsel %vm664, %v3544, 0.0
        %v3649 = vadd.f32 %v3647, %v3648
        %v3650 = vsel %vm664, %v3545, 0.0
        %v3651 = vadd.f32 %v3649, %v3650
        %v3652 = vsel %vm664, %v3546, 0.0
        %v3653 = vadd.f32 %v3651, %v3652
        %v3654 = vsel %vm664, %v3547, 0.0
        %v3655 = vadd.f32 %v3653, %v3654
        %v3656 = vsel %vm664, %v3548, 0.0
        %v3657 = vadd.f32 %v3655, %v3656
        %v3658 = vsel %vm664, %v3549, 0.0
        %v3659 = vadd.f32 %v3657, %v3658
        %v3660 = vrot.slane %v3659, 4
        %v3661 = vadd.f32 %v3659, %v3660
        %v3662 = vrot.slane %v3661, 2
        %v3663 = vadd.f32 %v3661, %v3662
        %v3664 = vrot.slane %v3663, 1
        %v3665 = vadd.f32 %v3663, %v3664
        %v3666 = vsel %vm664, %v3550, 0.0
        %v3667 = vsel %vm664, %v3551, 0.0
        %v3668 = vadd.f32 %v3666, %v3667
        %v3669 = vsel %vm664, %v3552, 0.0
        %v3670 = vadd.f32 %v3668, %v3669
        %v3671 = vsel %vm664, %v3553, 0.0
        %v3672 = vadd.f32 %v3670, %v3671
        %v3673 = vsel %vm664, %v3554, 0.0
        %v3674 = vadd.f32 %v3672, %v3673
        %v3675 = vsel %vm664, %v3555, 0.0
        %v3676 = vadd.f32 %v3674, %v3675
        %v3677 = vsel %vm664, %v3556, 0.0
        %v3678 = vadd.f32 %v3676, %v3677
        %v3679 = vsel %vm664, %v3557, 0.0
        %v3680 = vadd.f32 %v3678, %v3679
        %v3681 = vrot.slane %v3680, 4
        %v3682 = vadd.f32 %v3680, %v3681
        %v3683 = vrot.slane %v3682, 2
        %v3684 = vadd.f32 %v3682, %v3683
        %v3685 = vrot.slane %v3684, 1
        %v3686 = vadd.f32 %v3684, %v3685
        %v3687 = vsel %vm664, %v3558, 0.0
        %v3688 = vsel %vm664, %v3559, 0.0
        %v3689 = vadd.f32 %v3687, %v3688
        %v3690 = vsel %vm664, %v3560, 0.0
        %v3691 = vadd.f32 %v3689, %v3690
        %v3692 = vsel %vm664, %v3561, 0.0
        %v3693 = vadd.f32 %v3691, %v3692
        %v3694 = vsel %vm664, %v3562, 0.0
        %v3695 = vadd.f32 %v3693, %v3694
        %v3696 = vsel %vm664, %v3563, 0.0
        %v3697 = vadd.f32 %v3695, %v3696
        %v3698 = vsel %vm664, %v3564, 0.0
        %v3699 = vadd.f32 %v3697, %v3698
        %v3700 = vsel %vm664, %v3565, 0.0
        %v3701 = vadd.f32 %v3699, %v3700
        %v3702 = vrot.slane %v3701, 4
        %v3703 = vadd.f32 %v3701, %v3702
        %v3704 = vrot.slane %v3703, 2
        %v3705 = vadd.f32 %v3703, %v3704
        %v3706 = vrot.slane %v3705, 1
        %v3707 = vadd.f32 %v3705, %v3706
        %v3708 = vsel %vm664, %v3566, 0.0
        %v3709 = vsel %vm664, %v3567, 0.0
        %v3710 = vadd.f32 %v3708, %v3709
        %v3711 = vsel %vm664, %v3568, 0.0
        %v3712 = vadd.f32 %v3710, %v3711
        %v3713 = vsel %vm664, %v3569, 0.0
        %v3714 = vadd.f32 %v3712, %v3713
        %v3715 = vsel %vm664, %v3570, 0.0
        %v3716 = vadd.f32 %v3714, %v3715
        %v3717 = vsel %vm664, %v3571, 0.0
        %v3718 = vadd.f32 %v3716, %v3717
        %v3719 = vsel %vm664, %v3572, 0.0
        %v3720 = vadd.f32 %v3718, %v3719
        %v3721 = vsel %vm664, %v3573, 0.0
        %v3722 = vadd.f32 %v3720, %v3721
        %v3723 = vrot.slane %v3722, 4
        %v3724 = vadd.f32 %v3722, %v3723
        %v3725 = vrot.slane %v3724, 2
        %v3726 = vadd.f32 %v3724, %v3725
        %v3727 = vrot.slane %v3726, 1
        %v3728 = vadd.f32 %v3726, %v3727
        %v3729 = vsel %vm664, %v3574, 0.0
        %v3730 = vsel %vm664, %v3575, 0.0
        %v3731 = vadd.f32 %v3729, %v3730
        %v3732 = vsel %vm664, %v3576, 0.0
        %v3733 = vadd.f32 %v3731, %v3732
        %v3734 = vsel %vm664, %v3577, 0.0
        %v3735 = vadd.f32 %v3733, %v3734
        %v3736 = vsel %vm664, %v3578, 0.0
        %v3737 = vadd.f32 %v3735, %v3736
        %v3738 = vsel %vm664, %v3579, 0.0
        %v3739 = vadd.f32 %v3737, %v3738
        %v3740 = vsel %vm664, %v3580, 0.0
        %v3741 = vadd.f32 %v3739, %v3740
        %v3742 = vsel %vm664, %v3581, 0.0
        %v3743 = vadd.f32 %v3741, %v3742
        %v3744 = vrot.slane %v3743, 4
        %v3745 = vadd.f32 %v3743, %v3744
        %v3746 = vrot.slane %v3745, 2
        %v3747 = vadd.f32 %v3745, %v3746
        %v3748 = vrot.slane %v3747, 1
        %v3749 = vadd.f32 %v3747, %v3748
        %v3750 = vadd.f32 %v3076, %v3602
        %v3751 = vadd.f32 %v3083, %v3623
        %v3752 = vadd.f32 %v3090, %v3644
        %v3753 = vadd.f32 %v3097, %v3665
        %v3754 = vadd.f32 %v3104, %v3686
        %v3755 = vadd.f32 %v3111, %v3707
        %v3756 = vadd.f32 %v3118, %v3728
        %v3757 = vadd.f32 %v3125, %v3749
        %v3766 = vsel %vm1966, %v3751, %v3750
        %v3767 = vsel %vm1968, %v3752, %v3766
        %v3768 = vsel %vm1970, %v3753, %v3767
        %v3769 = vsel %vm1972, %v3754, %v3768
        %v3770 = vsel %vm1974, %v3755, %v3769
        %v3771 = vsel %vm1976, %v3756, %v3770
        %v3772 = vsel %vm1978, %v3757, %v3771
        %3775 = vrot.lane.b32.xlu0 %v3003, 32
        %v3776 = vpop.permute.xlu0 %3775
        %3779 = vrot.lane.b32.xlu0 %v3005, 40
        %v3780 = vpop.permute.xlu0 %3779
        %3783 = vrot.lane.b32.xlu0 %v2982, 104
        %v3784 = vpop.permute.xlu0 %3783
        %3787 = vrot.lane.b32.xlu0 %v2987, 112
        %v3788 = vpop.permute.xlu0 %3787
        %v3790 = vsel %vm664, %v3772, %v3776
        %vm3791 = vcmask 326656
        %v3792 = vsel %vm3791, %v3790, %v3780
        %vm3793 = vcmask 850944
        %v3794 = vsel %vm3793, %v3792, %v3784
        %vm3795 = vcmask 916480
        %v3796 = vsel %vm3795, %v3794, %v3788
        %vm3797 = vcmask 392192
        %v3798 = vsel %vm3797, %v3788, 0.0
        %3799 = vst [vmem:[%s615] sm:$0xff] %v3796
        %3800 = vst [vmem:[%s615 + $0x8] sm:$0xff] %v3798
        %s3801 = sand.u32 %s426, 1
        %s3802 = scalar_lea.sflag [#allocation3], %s3801
        %s3803 = sand.u32 %s426, 1
        %s3804 = smul.addr %s3803, 16
        %s3805 = scalar_lea.vmem [#allocation2], %s3804
        // Predicated region
        $region89: #{tpu_custom_call.1} parent=87 // pred_check
          %p3806 = pneg %p436
        $region90: #{tpu_custom_call.1} parent=87 // pred_check_branch
          %3808 = sbr.rel (%p3806) target = $region92
        $region91: #{tpu_custom_call.1} parent=87 // pred_region
          %3810 = vsyncadd %s3802, 0
          %s3811 = smul.addr %s31, 2
          %s3812 = smul.addr %s3811, 8
          %s3813 = scalar_lea.hbm %s17, %s3812
          %s3815 = sshll.u32 %s3805, 4
          %s3816 = int_to_ptr.vmem [resolvable:$true] %s3815
          %s3817 = sshll.u32 %s3813, 4
          %s3818 = int_to_ptr.hbm [resolvable:$true] %s3817
          %3820 = dma.vmem_to_hbm [thread:$0]  %s3816, 256, %s3818, %s3802
        $region92: #{tpu_custom_call.1} parent=87 // pred_fallthru
          _
      $region88: #{tpu_custom_call.1} parent=5 // pred_fallthru
        _
      %p3821 = scmp.le.s32.totalorder 2, %s26
      // Predicated region
      $region93: #{tpu_custom_call.1} parent=5 // pred_check
        %p3822 = pneg %p3821
      $region94: #{tpu_custom_call.1} parent=5 // pred_check_branch
        %3824 = sbr.rel (%p3822) target = $region96
      $region95: #{tpu_custom_call.1} parent=5 // pred_region
        %s3825 = ssub.s32 %s26, 2
        // Predicated region
        $region97: #{tpu_custom_call.1} parent=95 // pred_check
          %p3826 = pneg %p442
        $region98: #{tpu_custom_call.1} parent=95 // pred_check_branch
          %3828 = sbr.rel (%p3826) target = $region100
        $region99: #{tpu_custom_call.1} parent=95 // pred_region
          %s3829 = sand.u32 %s427, 1
          %s3830 = scalar_lea.sflag [#allocation3], %s3829
          %s3831 = sand.u32 %s427, 1
          %s3832 = smul.addr %s3831, 16
          %s3833 = scalar_lea.vmem [#allocation2], %s3832
          %3835 = dma.done %s3830, 256
        $region100: #{tpu_custom_call.1} parent=95 // pred_fallthru
          _
      $region96: #{tpu_custom_call.1} parent=5 // pred_fallthru
        _
    $region6: #{tpu_custom_call.1} parent=1 // loop_footer
      %s30 = sadd.s32 1, %s26
    $region7: #{tpu_custom_call.1} parent=1 // loop_footer_branch
      %25 = sbr.rel target = $region3
    $region8: #{tpu_custom_call.1} parent=1 // loop_exit
      _
    %3836 = vsyncpa [#allocation3], 1
    %s3837 = scalar_lea.sflag [#allocation3], 1
    %3838 = vsyncpa %s3837, 1

</llo_original>
